<compile_context>
chip_gen: v7x
topology: tpu7x:2x2x1
jax: 0.10.0
libtpu: 0.0.40
codegen_flags: <defaults>
</compile_context>

<pallas_src>
import jax
import jax.numpy as jnp
from jax.experimental import pallas as pl
from jax.experimental.pallas import tpu as pltpu


# ---------------------------------------------------------------------------
# tile-size helpers
# ---------------------------------------------------------------------------
def _pick_tile_h(H, W, target_rows=1024):
    """Largest divisor of H whose matmul row tile (tile_h * W) <= target_rows."""
    best = 1
    for d in range(1, H + 1):
        if H % d == 0 and d * W <= target_rows:
            best = d
    return best


def _pick_tile_c(C, target=256):
    """Largest multiple-of-128 divisor of C that is <= target (else C itself)."""
    if C <= target:
        return C
    best = C
    for t in range(128, target + 1, 128):
        if C % t == 0:
            best = t
    return best


# ---------------------------------------------------------------------------
# Kernel 1: 3x3 conv as 9 shifted-window matmuls + fused BN partial statistics.
# ---------------------------------------------------------------------------
def _conv_stats_kernel(x_ref, w_ref, y_ref, sum_ref, ssq_ref):
    # x_ref:   (1, H+2, W+2, Cin)  bf16   whole padded image (fetched once per n)
    # w_ref:   (3, 3, Cin, tc)     bf16   conv weights (channel tile)
    # y_ref:   (1, tile_h, W, tc)  f32    conv output tile
    # sum_ref: (1, 1, 8, tc)       f32    per-tile partial sum (row 0 is valid)
    # ssq_ref: (1, 1, 8, tc)       f32    per-tile partial sum of squares
    _, tile_h, W, tc = y_ref.shape
    cin = x_ref.shape[-1]
    j = pl.program_id(1)
    row0 = j * tile_h

    acc = jnp.zeros((tile_h * W, tc), jnp.float32)
    for kh in range(3):
        rows = x_ref[0, pl.ds(row0 + kh, tile_h), :, :]        # (tile_h, W+2, Cin)
        for kw in range(3):
            win = rows[:, kw:kw + W, :].reshape(tile_h * W, cin)
            acc = acc + jnp.dot(win, w_ref[kh, kw, :, :],
                                preferred_element_type=jnp.float32)

    y_ref[...] = acc.reshape(1, tile_h, W, tc)
    sum_ref[...] = jnp.broadcast_to(jnp.sum(acc, axis=0), (1, 1, 8, tc))
    ssq_ref[...] = jnp.broadcast_to(jnp.sum(acc * acc, axis=0), (1, 1, 8, tc))


def _conv_bn_stats(x_pad, w_mat, *, H, W, tile_h, tile_c):
    N, Hp, Wp, Cin = x_pad.shape
    Cout = w_mat.shape[-1]
    n_ht = H // tile_h
    n_ct = Cout // tile_c
    return pl.pallas_call(
        _conv_stats_kernel,
        out_shape=(
            jax.ShapeDtypeStruct((N, H, W, Cout), jnp.float32),
            jax.ShapeDtypeStruct((N, n_ht, 8, Cout), jnp.float32),
            jax.ShapeDtypeStruct((N, n_ht, 8, Cout), jnp.float32),
        ),
        grid=(N, n_ht, n_ct),
        in_specs=[
            pl.BlockSpec((1, Hp, Wp, Cin), lambda n, j, c: (n, 0, 0, 0)),
            pl.BlockSpec((3, 3, Cin, tile_c), lambda n, j, c: (0, 0, 0, c)),
        ],
        out_specs=(
            pl.BlockSpec((1, tile_h, W, tile_c), lambda n, j, c: (n, j, 0, c)),
            pl.BlockSpec((1, 1, 8, tile_c), lambda n, j, c: (n, j, 0, c)),
            pl.BlockSpec((1, 1, 8, tile_c), lambda n, j, c: (n, j, 0, c)),
        ),
        compiler_params=pltpu.CompilerParams(
            dimension_semantics=("parallel", "parallel", "parallel"),
            vmem_limit_bytes=32 * 1024 * 1024,
        ),
    )(x_pad, w_mat)


# ---------------------------------------------------------------------------
# Kernel 2: depthwise 3x3 conv + bias (BN scale already folded into weights).
# Lane-dense layout: the lane dim carries W*C.
# ---------------------------------------------------------------------------
def _dw_kernel(x_ref, w_ref, b_ref, o_ref):
    # x_ref: (1, H+2, (W+2)*C)  f32   mean-centered, zero-padded conv output
    # w_ref: (3, 3, W*C)        f32   BN-scale-folded depthwise weights, tiled over W
    # b_ref: (1, W*C)           f32   bias, tiled over W
    # o_ref: (1, H, W*C)        f32
    _, H, WC = o_ref.shape
    C = (x_ref.shape[2] - WC) // 2
    w = w_ref[...]                                    # hoisted: single weight load
    acc = jnp.broadcast_to(b_ref[0, :], (H, WC))      # bias broadcast hoisted
    for kh in range(3):
        rows = x_ref[0, kh:kh + H, :]                 # (H, (W+2)*C)
        for kw in range(3):
            acc = acc + rows[:, kw * C:kw * C + WC] * w[kh, kw, :]
    o_ref[0] = acc


def _dw_conv(y2_pad, w_taps, b_lane):
    N, Hp2, WpC = y2_pad.shape
    WC = w_taps.shape[-1]
    H = Hp2 - 2
    return pl.pallas_call(
        _dw_kernel,
        out_shape=jax.ShapeDtypeStruct((N, H, WC), jnp.float32),
        grid=(N,),
        in_specs=[
            pl.BlockSpec((1, Hp2, WpC), lambda n: (n, 0, 0)),
            pl.BlockSpec((3, 3, WC), lambda n: (0, 0, 0)),
            pl.BlockSpec((1, WC), lambda n: (0, 0)),
        ],
        out_specs=pl.BlockSpec((1, H, WC), lambda n: (n, 0, 0)),
        compiler_params=pltpu.CompilerParams(
            dimension_semantics=("parallel",),
            vmem_limit_bytes=32 * 1024 * 1024,
        ),
    )(y2_pad, w_taps, b_lane)


# ---------------------------------------------------------------------------
# Full ConvEnBn2d forward.
# x_nchw: (N, Cin, H, W); w_conv: (Cout, Cin, 3, 3); w_dw: (Cout, 1, 3, 3);
# b_dw: (Cout,).  kernel_size=3, padding=1, stride=1 (module defaults).
# ---------------------------------------------------------------------------
def conv_en_bn_2d(x_nchw, w_conv, w_dw, b_dw, eps=1e-5):
    N, Cin, H, W = x_nchw.shape
    Cout = w_conv.shape[0]

    # glue: NHWC + zero pad; bf16 inputs for the MXU (accumulation stays f32)
    x_nhwc = jnp.transpose(x_nchw, (0, 2, 3, 1))
    x_pad = jnp.pad(x_nhwc, ((0, 0), (1, 1), (1, 1), (0, 0))).astype(jnp.bfloat16)
    w_mat = jnp.transpose(w_conv, (2, 3, 1, 0)).astype(jnp.bfloat16)  # (3,3,Cin,Cout)

    tile_h = _pick_tile_h(H, W)
    tile_c = _pick_tile_c(Cout)

    # Pallas: conv (shifted-window matmuls) + fused BN partial statistics
    y, psum, pssq = _conv_bn_stats(x_pad, w_mat, H=H, W=W,
                                   tile_h=tile_h, tile_c=tile_c)

    # finalize BN statistics (tiny per-channel vectors)
    cnt = float(N * H * W)
    s = jnp.sum(psum[:, :, 0, :], axis=(0, 1))
    sq = jnp.sum(pssq[:, :, 0, :], axis=(0, 1))
    mean = s / cnt
    var = jnp.maximum(sq / cnt - mean * mean, 0.0)     # biased var, as PyTorch BN
    scale = jax.lax.rsqrt(var + eps)

    # fold BN into the depthwise conv: scale -> weights; mean is subtracted
    # while XLA builds the (already required) zero-padded depthwise input, so
    # the zero padding still corresponds to a zero *normalized* activation.
    w_fold = w_dw[:, 0, :, :].astype(jnp.float32) * scale[:, None, None]  # (Cout,3,3)
    w_taps = jnp.tile(jnp.transpose(w_fold, (1, 2, 0)), (1, 1, W))        # (3,3,W*Cout)
    b_lane = jnp.tile(b_dw.astype(jnp.float32), W).reshape(1, W * Cout)

    y_c = y - mean.reshape(1, 1, 1, Cout)
    y_pad = jnp.pad(y_c, ((0, 0), (1, 1), (1, 1), (0, 0)))
    y2 = y_pad.reshape(N, H + 2, (W + 2) * Cout)       # lane-dense: W*C in lanes

    # Pallas: depthwise 3x3 conv + bias (normalization folded in)
    out2 = _dw_conv(y2, w_taps, b_lane)                # (N, H, W*Cout)
    out_nhwc = out2.reshape(N, H, W, Cout)
    return jnp.transpose(out_nhwc, (0, 3, 1, 2))       # NCHW at the module boundary


# ---------------------------------------------------------------------------
# Pure-JAX reference (same math as the PyTorch module). The first-conv inputs
# are rounded to bf16 to match the kernel's MXU precision choice; everything
# else (including accumulation) is f32.
# ---------------------------------------------------------------------------
def _reference(x, w_conv, w_dw, b_dw, eps=1e-5):
    hi = jax.lax.Precision.HIGHEST
    xb = x.astype(jnp.bfloat16).astype(jnp.float32)
    wb = w_conv.astype(jnp.bfloat16).astype(jnp.float32)
    y = jax.lax.conv_general_dilated(
        xb, wb, (1, 1), "SAME",
        dimension_numbers=("NCHW", "OIHW", "NCHW"), precision=hi)
    mean = jnp.mean(y, axis=(0, 2, 3), keepdims=True)
    var = jnp.mean((y - mean) ** 2, axis=(0, 2, 3), keepdims=True)
    y = (y - mean) / jnp.sqrt(var + eps)
    y = jax.lax.conv_general_dilated(
        y, w_dw, (1, 1), "SAME",
        dimension_numbers=("NCHW", "OIHW", "NCHW"),
        feature_group_count=y.shape[1], precision=hi)
    return y + b_dw.reshape(1, -1, 1, 1)


if __name__ == "__main__":
    N, Cin, Cout, H, W = 2, 4, 8, 16, 16

    key = jax.random.PRNGKey(0)
    k_x, k_w, k_dw, k_b = jax.random.split(key, 4)
    x = jax.random.normal(k_x, (N, Cin, H, W), jnp.float32)
    w_conv = 0.1 * jax.random.normal(k_w, (Cout, Cin, 3, 3), jnp.float32)  # conv, bias=False
    w_dw = 0.1 * jax.random.normal(k_dw, (Cout, 1, 3, 3), jnp.float32)     # depthwise conv
    b_dw = 0.1 * jax.random.normal(k_b, (Cout,), jnp.float32)              # depthwise bias

    out = jax.jit(conv_en_bn_2d)(x, w_conv, w_dw, b_dw)
    out = jax.block_until_ready(out)

    ref = _reference(x, w_conv, w_dw, b_dw)
    assert out.shape == (N, Cout, H, W)
    err = float(jnp.max(jnp.abs(out - ref)))
    assert err < 2e-3, f"mismatch vs reference: max abs err = {err}"

    print("KERNEL_OK")
</pallas_src>

<mosaic_0001>
module attributes {stable_mosaic.version = 11 : i64} {
  func.func @_conv_stats_kernel(%arg0: i32, %arg1: i32, %arg2: i32, %arg3: memref<1x18x18x4xbf16, #tpu.memory_space<vmem>>, %arg4: memref<3x3x4x8xbf16, #tpu.memory_space<vmem>>, %arg5: memref<1x16x16x8xf32, #tpu.memory_space<vmem>>, %arg6: memref<1x1x8x8xf32, #tpu.memory_space<vmem>>, %arg7: memref<1x1x8x8xf32, #tpu.memory_space<vmem>>) attributes {dimension_semantics = [#tpu.dimension_semantics<parallel>, #tpu.dimension_semantics<parallel>, #tpu.dimension_semantics<parallel>], iteration_bounds = array<i64: 2, 1, 1>, scalar_prefetch = 0 : i64, scratch_operands = 0 : i64, tpu.core_type = #tpu.core_type<tc>, window_params = [{transform_indices = @transform_0, window_bounds = array<i64: 1, 18, 18, 4>}, {transform_indices = @transform_1, window_bounds = array<i64: 3, 3, 4, 8>}, {transform_indices = @transform_2, window_bounds = array<i64: 1, 16, 16, 8>}, {transform_indices = @transform_3, window_bounds = array<i64: 1, 1, 8, 8>}, {transform_indices = @transform_4, window_bounds = array<i64: 1, 1, 8, 8>}]} {
    %c16_i32 = arith.constant 16 : i32
    %0 = arith.muli %arg1, %c16_i32 : i32
    %cst = arith.constant 0.000000e+00 : f32
    %1 = vector.broadcast %cst : f32 to vector<256x8xf32>
    %c0_i32 = arith.constant 0 : i32
    %2 = arith.addi %0, %c0_i32 : i32
    %c0 = arith.constant 0 : index
    %3 = arith.index_cast %2 : i32 to index
    %c0_0 = arith.constant 0 : index
    %c0_1 = arith.constant 0 : index
    %4 = vector.load %arg3[%c0, %3, %c0_0, %c0_1] : memref<1x18x18x4xbf16, #tpu.memory_space<vmem>>, vector<1x16x18x4xbf16>
    %5 = vector.shape_cast %4 : vector<1x16x18x4xbf16> to vector<16x18x4xbf16>
    %6 = vector.extract_strided_slice %5 {offsets = [0, 0, 0], sizes = [16, 16, 4], strides = [1, 1, 1]} : vector<16x18x4xbf16> to vector<16x16x4xbf16>
    %7 = vector.shape_cast %6 : vector<16x16x4xbf16> to vector<256x4xbf16>
    %c0_2 = arith.constant 0 : index
    %c0_3 = arith.constant 0 : index
    %c0_4 = arith.constant 0 : index
    %c0_5 = arith.constant 0 : index
    %8 = vector.load %arg4[%c0_2, %c0_3, %c0_4, %c0_5] : memref<3x3x4x8xbf16, #tpu.memory_space<vmem>>, vector<1x1x4x8xbf16>
    %9 = vector.shape_cast %8 : vector<1x1x4x8xbf16> to vector<4x8xbf16>
    %cst_6 = arith.constant dense<0.000000e+00> : vector<256x8xf32>
    %10 = tpu.matmul %7, %9, %cst_6 {dimension_numbers = #tpu.dot_dimension_numbers<[1], [0], [0], [1], [0, 0, 1, 1], [], []>} : vector<256x4xbf16>, vector<4x8xbf16>, vector<256x8xf32> -> vector<256x8xf32>
    %11 = arith.addf %1, %10 : vector<256x8xf32>
    %12 = vector.extract_strided_slice %5 {offsets = [0, 1, 0], sizes = [16, 16, 4], strides = [1, 1, 1]} : vector<16x18x4xbf16> to vector<16x16x4xbf16>
    %13 = vector.shape_cast %12 : vector<16x16x4xbf16> to vector<256x4xbf16>
    %c0_7 = arith.constant 0 : index
    %c1 = arith.constant 1 : index
    %c0_8 = arith.constant 0 : index
    %c0_9 = arith.constant 0 : index
    %14 = vector.load %arg4[%c0_7, %c1, %c0_8, %c0_9] : memref<3x3x4x8xbf16, #tpu.memory_space<vmem>>, vector<1x1x4x8xbf16>
    %15 = vector.shape_cast %14 : vector<1x1x4x8xbf16> to vector<4x8xbf16>
    %cst_10 = arith.constant dense<0.000000e+00> : vector<256x8xf32>
    %16 = tpu.matmul %13, %15, %cst_10 {dimension_numbers = #tpu.dot_dimension_numbers<[1], [0], [0], [1], [0, 0, 1, 1], [], []>} : vector<256x4xbf16>, vector<4x8xbf16>, vector<256x8xf32> -> vector<256x8xf32>
    %17 = arith.addf %11, %16 : vector<256x8xf32>
    %18 = vector.extract_strided_slice %5 {offsets = [0, 2, 0], sizes = [16, 16, 4], strides = [1, 1, 1]} : vector<16x18x4xbf16> to vector<16x16x4xbf16>
    %19 = vector.shape_cast %18 : vector<16x16x4xbf16> to vector<256x4xbf16>
    %c0_11 = arith.constant 0 : index
    %c2 = arith.constant 2 : index
    %c0_12 = arith.constant 0 : index
    %c0_13 = arith.constant 0 : index
    %20 = vector.load %arg4[%c0_11, %c2, %c0_12, %c0_13] : memref<3x3x4x8xbf16, #tpu.memory_space<vmem>>, vector<1x1x4x8xbf16>
    %21 = vector.shape_cast %20 : vector<1x1x4x8xbf16> to vector<4x8xbf16>
    %cst_14 = arith.constant dense<0.000000e+00> : vector<256x8xf32>
    %22 = tpu.matmul %19, %21, %cst_14 {dimension_numbers = #tpu.dot_dimension_numbers<[1], [0], [0], [1], [0, 0, 1, 1], [], []>} : vector<256x4xbf16>, vector<4x8xbf16>, vector<256x8xf32> -> vector<256x8xf32>
    %23 = arith.addf %17, %22 : vector<256x8xf32>
    %c1_i32 = arith.constant 1 : i32
    %24 = arith.addi %0, %c1_i32 : i32
    %c0_15 = arith.constant 0 : index
    %25 = arith.index_cast %24 : i32 to index
    %c0_16 = arith.constant 0 : index
    %c0_17 = arith.constant 0 : index
    %26 = vector.load %arg3[%c0_15, %25, %c0_16, %c0_17] : memref<1x18x18x4xbf16, #tpu.memory_space<vmem>>, vector<1x16x18x4xbf16>
    %27 = vector.shape_cast %26 : vector<1x16x18x4xbf16> to vector<16x18x4xbf16>
    %28 = vector.extract_strided_slice %27 {offsets = [0, 0, 0], sizes = [16, 16, 4], strides = [1, 1, 1]} : vector<16x18x4xbf16> to vector<16x16x4xbf16>
    %29 = vector.shape_cast %28 : vector<16x16x4xbf16> to vector<256x4xbf16>
    %c1_18 = arith.constant 1 : index
    %c0_19 = arith.constant 0 : index
    %c0_20 = arith.constant 0 : index
    %c0_21 = arith.constant 0 : index
    %30 = vector.load %arg4[%c1_18, %c0_19, %c0_20, %c0_21] : memref<3x3x4x8xbf16, #tpu.memory_space<vmem>>, vector<1x1x4x8xbf16>
    %31 = vector.shape_cast %30 : vector<1x1x4x8xbf16> to vector<4x8xbf16>
    %cst_22 = arith.constant dense<0.000000e+00> : vector<256x8xf32>
    %32 = tpu.matmul %29, %31, %cst_22 {dimension_numbers = #tpu.dot_dimension_numbers<[1], [0], [0], [1], [0, 0, 1, 1], [], []>} : vector<256x4xbf16>, vector<4x8xbf16>, vector<256x8xf32> -> vector<256x8xf32>
    %33 = arith.addf %23, %32 : vector<256x8xf32>
    %34 = vector.extract_strided_slice %27 {offsets = [0, 1, 0], sizes = [16, 16, 4], strides = [1, 1, 1]} : vector<16x18x4xbf16> to vector<16x16x4xbf16>
    %35 = vector.shape_cast %34 : vector<16x16x4xbf16> to vector<256x4xbf16>
    %c1_23 = arith.constant 1 : index
    %c1_24 = arith.constant 1 : index
    %c0_25 = arith.constant 0 : index
    %c0_26 = arith.constant 0 : index
    %36 = vector.load %arg4[%c1_23, %c1_24, %c0_25, %c0_26] : memref<3x3x4x8xbf16, #tpu.memory_space<vmem>>, vector<1x1x4x8xbf16>
    %37 = vector.shape_cast %36 : vector<1x1x4x8xbf16> to vector<4x8xbf16>
    %cst_27 = arith.constant dense<0.000000e+00> : vector<256x8xf32>
    %38 = tpu.matmul %35, %37, %cst_27 {dimension_numbers = #tpu.dot_dimension_numbers<[1], [0], [0], [1], [0, 0, 1, 1], [], []>} : vector<256x4xbf16>, vector<4x8xbf16>, vector<256x8xf32> -> vector<256x8xf32>
    %39 = arith.addf %33, %38 : vector<256x8xf32>
    %40 = vector.extract_strided_slice %27 {offsets = [0, 2, 0], sizes = [16, 16, 4], strides = [1, 1, 1]} : vector<16x18x4xbf16> to vector<16x16x4xbf16>
    %41 = vector.shape_cast %40 : vector<16x16x4xbf16> to vector<256x4xbf16>
    %c1_28 = arith.constant 1 : index
    %c2_29 = arith.constant 2 : index
    %c0_30 = arith.constant 0 : index
    %c0_31 = arith.constant 0 : index
    %42 = vector.load %arg4[%c1_28, %c2_29, %c0_30, %c0_31] : memref<3x3x4x8xbf16, #tpu.memory_space<vmem>>, vector<1x1x4x8xbf16>
    %43 = vector.shape_cast %42 : vector<1x1x4x8xbf16> to vector<4x8xbf16>
    %cst_32 = arith.constant dense<0.000000e+00> : vector<256x8xf32>
    %44 = tpu.matmul %41, %43, %cst_32 {dimension_numbers = #tpu.dot_dimension_numbers<[1], [0], [0], [1], [0, 0, 1, 1], [], []>} : vector<256x4xbf16>, vector<4x8xbf16>, vector<256x8xf32> -> vector<256x8xf32>
    %45 = arith.addf %39, %44 : vector<256x8xf32>
    %c2_i32 = arith.constant 2 : i32
    %46 = arith.addi %0, %c2_i32 : i32
    %c0_33 = arith.constant 0 : index
    %47 = arith.index_cast %46 : i32 to index
    %c0_34 = arith.constant 0 : index
    %c0_35 = arith.constant 0 : index
    %48 = vector.load %arg3[%c0_33, %47, %c0_34, %c0_35] : memref<1x18x18x4xbf16, #tpu.memory_space<vmem>>, vector<1x16x18x4xbf16>
    %49 = vector.shape_cast %48 : vector<1x16x18x4xbf16> to vector<16x18x4xbf16>
    %50 = vector.extract_strided_slice %49 {offsets = [0, 0, 0], sizes = [16, 16, 4], strides = [1, 1, 1]} : vector<16x18x4xbf16> to vector<16x16x4xbf16>
    %51 = vector.shape_cast %50 : vector<16x16x4xbf16> to vector<256x4xbf16>
    %c2_36 = arith.constant 2 : index
    %c0_37 = arith.constant 0 : index
    %c0_38 = arith.constant 0 : index
    %c0_39 = arith.constant 0 : index
    %52 = vector.load %arg4[%c2_36, %c0_37, %c0_38, %c0_39] : memref<3x3x4x8xbf16, #tpu.memory_space<vmem>>, vector<1x1x4x8xbf16>
    %53 = vector.shape_cast %52 : vector<1x1x4x8xbf16> to vector<4x8xbf16>
    %cst_40 = arith.constant dense<0.000000e+00> : vector<256x8xf32>
    %54 = tpu.matmul %51, %53, %cst_40 {dimension_numbers = #tpu.dot_dimension_numbers<[1], [0], [0], [1], [0, 0, 1, 1], [], []>} : vector<256x4xbf16>, vector<4x8xbf16>, vector<256x8xf32> -> vector<256x8xf32>
    %55 = arith.addf %45, %54 : vector<256x8xf32>
    %56 = vector.extract_strided_slice %49 {offsets = [0, 1, 0], sizes = [16, 16, 4], strides = [1, 1, 1]} : vector<16x18x4xbf16> to vector<16x16x4xbf16>
    %57 = vector.shape_cast %56 : vector<16x16x4xbf16> to vector<256x4xbf16>
    %c2_41 = arith.constant 2 : index
    %c1_42 = arith.constant 1 : index
    %c0_43 = arith.constant 0 : index
    %c0_44 = arith.constant 0 : index
    %58 = vector.load %arg4[%c2_41, %c1_42, %c0_43, %c0_44] : memref<3x3x4x8xbf16, #tpu.memory_space<vmem>>, vector<1x1x4x8xbf16>
    %59 = vector.shape_cast %58 : vector<1x1x4x8xbf16> to vector<4x8xbf16>
    %cst_45 = arith.constant dense<0.000000e+00> : vector<256x8xf32>
    %60 = tpu.matmul %57, %59, %cst_45 {dimension_numbers = #tpu.dot_dimension_numbers<[1], [0], [0], [1], [0, 0, 1, 1], [], []>} : vector<256x4xbf16>, vector<4x8xbf16>, vector<256x8xf32> -> vector<256x8xf32>
    %61 = arith.addf %55, %60 : vector<256x8xf32>
    %62 = vector.extract_strided_slice %49 {offsets = [0, 2, 0], sizes = [16, 16, 4], strides = [1, 1, 1]} : vector<16x18x4xbf16> to vector<16x16x4xbf16>
    %63 = vector.shape_cast %62 : vector<16x16x4xbf16> to vector<256x4xbf16>
    %c2_46 = arith.constant 2 : index
    %c2_47 = arith.constant 2 : index
    %c0_48 = arith.constant 0 : index
    %c0_49 = arith.constant 0 : index
    %64 = vector.load %arg4[%c2_46, %c2_47, %c0_48, %c0_49] : memref<3x3x4x8xbf16, #tpu.memory_space<vmem>>, vector<1x1x4x8xbf16>
    %65 = vector.shape_cast %64 : vector<1x1x4x8xbf16> to vector<4x8xbf16>
    %cst_50 = arith.constant dense<0.000000e+00> : vector<256x8xf32>
    %66 = tpu.matmul %63, %65, %cst_50 {dimension_numbers = #tpu.dot_dimension_numbers<[1], [0], [0], [1], [0, 0, 1, 1], [], []>} : vector<256x4xbf16>, vector<4x8xbf16>, vector<256x8xf32> -> vector<256x8xf32>
    %67 = arith.addf %61, %66 : vector<256x8xf32>
    %68 = vector.shape_cast %67 : vector<256x8xf32> to vector<1x16x16x8xf32>
    %c0_51 = arith.constant 0 : index
    %c0_52 = arith.constant 0 : index
    %c0_53 = arith.constant 0 : index
    %c0_54 = arith.constant 0 : index
    %69 = vector.load %arg5[%c0_51, %c0_52, %c0_53, %c0_54] : memref<1x16x16x8xf32, #tpu.memory_space<vmem>>, vector<1x16x16x8xf32>
    tpu.vector_store %arg5[%c0_51, %c0_52, %c0_53, %c0_54], %68 {strides = array<i32>} : memref<1x16x16x8xf32, #tpu.memory_space<vmem>>, vector<1x16x16x8xf32>,
    %cst_55 = arith.constant dense<0.000000e+00> : vector<8xf32>
    %70 = vector.multi_reduction <add>, %67, %cst_55 [0] : vector<256x8xf32> to vector<8xf32>
    %71 = vector.shape_cast %70 : vector<8xf32> to vector<1x1x1x8xf32>
    %72 = vector.broadcast %71 : vector<1x1x1x8xf32> to vector<1x1x8x8xf32>
    %c0_56 = arith.constant 0 : index
    %c0_57 = arith.constant 0 : index
    %c0_58 = arith.constant 0 : index
    %c0_59 = arith.constant 0 : index
    %73 = vector.load %arg6[%c0_56, %c0_57, %c0_58, %c0_59] : memref<1x1x8x8xf32, #tpu.memory_space<vmem>>, vector<1x1x8x8xf32>
    tpu.vector_store %arg6[%c0_56, %c0_57, %c0_58, %c0_59], %72 {strides = array<i32>} : memref<1x1x8x8xf32, #tpu.memory_space<vmem>>, vector<1x1x8x8xf32>,
    %74 = arith.mulf %67, %67 : vector<256x8xf32>
    %cst_60 = arith.constant dense<0.000000e+00> : vector<8xf32>
    %75 = vector.multi_reduction <add>, %74, %cst_60 [0] : vector<256x8xf32> to vector<8xf32>
    %76 = vector.shape_cast %75 : vector<8xf32> to vector<1x1x1x8xf32>
    %77 = vector.broadcast %76 : vector<1x1x1x8xf32> to vector<1x1x8x8xf32>
    %c0_61 = arith.constant 0 : index
    %c0_62 = arith.constant 0 : index
    %c0_63 = arith.constant 0 : index
    %c0_64 = arith.constant 0 : index
    %78 = vector.load %arg7[%c0_61, %c0_62, %c0_63, %c0_64] : memref<1x1x8x8xf32, #tpu.memory_space<vmem>>, vector<1x1x8x8xf32>
    tpu.vector_store %arg7[%c0_61, %c0_62, %c0_63, %c0_64], %77 {strides = array<i32>} : memref<1x1x8x8xf32, #tpu.memory_space<vmem>>, vector<1x1x8x8xf32>,
    return
  }
  func.func @transform_0(%arg0: i32, %arg1: i32, %arg2: i32) -> (i32, i32, i32, i32) {
    %c0_i32 = arith.constant 0 : i32
    %c0_i32_0 = arith.constant 0 : i32
    %c0_i32_1 = arith.constant 0 : i32
    %c0_i32_2 = arith.constant 0 : i32
    return %arg0, %c0_i32, %c0_i32_0, %c0_i32_1 : i32, i32, i32, i32
  }
  func.func @transform_1(%arg0: i32, %arg1: i32, %arg2: i32) -> (i32, i32, i32, i32) {
    %c0_i32 = arith.constant 0 : i32
    %c0_i32_0 = arith.constant 0 : i32
    %c0_i32_1 = arith.constant 0 : i32
    %c0_i32_2 = arith.constant 0 : i32
    return %c0_i32, %c0_i32_0, %c0_i32_1, %arg2 : i32, i32, i32, i32
  }
  func.func @transform_2(%arg0: i32, %arg1: i32, %arg2: i32) -> (i32, i32, i32, i32) {
    %c0_i32 = arith.constant 0 : i32
    %c0_i32_0 = arith.constant 0 : i32
    return %arg0, %arg1, %c0_i32, %arg2 : i32, i32, i32, i32
  }
  func.func @transform_3(%arg0: i32, %arg1: i32, %arg2: i32) -> (i32, i32, i32, i32) {
    %c0_i32 = arith.constant 0 : i32
    %c0_i32_0 = arith.constant 0 : i32
    return %arg0, %arg1, %c0_i32, %arg2 : i32, i32, i32, i32
  }
  func.func @transform_4(%arg0: i32, %arg1: i32, %arg2: i32) -> (i32, i32, i32, i32) {
    %c0_i32 = arith.constant 0 : i32
    %c0_i32_0 = arith.constant 0 : i32
    return %arg0, %arg1, %c0_i32, %arg2 : i32, i32, i32, i32
  }
}

module attributes {stable_mosaic.version = 11 : i64} {
  func.func @_dw_kernel(%arg0: i32, %arg1: memref<1x18x144xf32, #tpu.memory_space<vmem>>, %arg2: memref<3x3x128xf32, #tpu.memory_space<vmem>>, %arg3: memref<1x128xf32, #tpu.memory_space<vmem>>, %arg4: memref<1x16x128xf32, #tpu.memory_space<vmem>>) attributes {dimension_semantics = [#tpu.dimension_semantics<parallel>], iteration_bounds = array<i64: 2>, scalar_prefetch = 0 : i64, scratch_operands = 0 : i64, tpu.core_type = #tpu.core_type<tc>, window_params = [{transform_indices = @transform_0, window_bounds = array<i64: 1, 18, 144>}, {pipeline_mode = #tpu.pipeline_mode<synchronous>, transform_indices = @transform_1, window_bounds = array<i64: 3, 3, 128>}, {pipeline_mode = #tpu.pipeline_mode<synchronous>, transform_indices = @transform_2, window_bounds = array<i64: 1, 128>}, {transform_indices = @transform_3, window_bounds = array<i64: 1, 16, 128>}]} {
    %c0 = arith.constant 0 : index
    %c0_0 = arith.constant 0 : index
    %c0_1 = arith.constant 0 : index
    %0 = vector.load %arg2[%c0, %c0_0, %c0_1] : memref<3x3x128xf32, #tpu.memory_space<vmem>>, vector<3x3x128xf32>
    %c0_2 = arith.constant 0 : index
    %c0_3 = arith.constant 0 : index
    %1 = vector.load %arg3[%c0_2, %c0_3] : memref<1x128xf32, #tpu.memory_space<vmem>>, vector<1x128xf32>
    %2 = vector.shape_cast %1 : vector<1x128xf32> to vector<128xf32>
    %3 = vector.shape_cast %2 : vector<128xf32> to vector<1x128xf32>
    %4 = vector.broadcast %3 : vector<1x128xf32> to vector<16x128xf32>
    %c0_4 = arith.constant 0 : index
    %c0_5 = arith.constant 0 : index
    %c0_6 = arith.constant 0 : index
    %5 = vector.load %arg1[%c0_4, %c0_5, %c0_6] : memref<1x18x144xf32, #tpu.memory_space<vmem>>, vector<1x16x144xf32>
    %6 = vector.shape_cast %5 : vector<1x16x144xf32> to vector<16x144xf32>
    %7 = vector.extract_strided_slice %6 {offsets = [0, 0], sizes = [16, 128], strides = [1, 1]} : vector<16x144xf32> to vector<16x128xf32>
    %8 = vector.extract_strided_slice %0 {offsets = [0, 0, 0], sizes = [1, 1, 128], strides = [1, 1, 1]} : vector<3x3x128xf32> to vector<1x1x128xf32>
    %9 = vector.shape_cast %8 : vector<1x1x128xf32> to vector<128xf32>
    %10 = vector.shape_cast %9 : vector<128xf32> to vector<1x128xf32>
    %11 = vector.broadcast %10 : vector<1x128xf32> to vector<16x128xf32>
    %12 = arith.mulf %7, %11 : vector<16x128xf32>
    %13 = arith.addf %4, %12 : vector<16x128xf32>
    %14 = vector.extract_strided_slice %6 {offsets = [0, 8], sizes = [16, 128], strides = [1, 1]} : vector<16x144xf32> to vector<16x128xf32>
    %15 = vector.extract_strided_slice %0 {offsets = [0, 1, 0], sizes = [1, 1, 128], strides = [1, 1, 1]} : vector<3x3x128xf32> to vector<1x1x128xf32>
    %16 = vector.shape_cast %15 : vector<1x1x128xf32> to vector<128xf32>
    %17 = vector.shape_cast %16 : vector<128xf32> to vector<1x128xf32>
    %18 = vector.broadcast %17 : vector<1x128xf32> to vector<16x128xf32>
    %19 = arith.mulf %14, %18 : vector<16x128xf32>
    %20 = arith.addf %13, %19 : vector<16x128xf32>
    %21 = vector.extract_strided_slice %6 {offsets = [0, 16], sizes = [16, 128], strides = [1, 1]} : vector<16x144xf32> to vector<16x128xf32>
    %22 = vector.extract_strided_slice %0 {offsets = [0, 2, 0], sizes = [1, 1, 128], strides = [1, 1, 1]} : vector<3x3x128xf32> to vector<1x1x128xf32>
    %23 = vector.shape_cast %22 : vector<1x1x128xf32> to vector<128xf32>
    %24 = vector.shape_cast %23 : vector<128xf32> to vector<1x128xf32>
    %25 = vector.broadcast %24 : vector<1x128xf32> to vector<16x128xf32>
    %26 = arith.mulf %21, %25 : vector<16x128xf32>
    %27 = arith.addf %20, %26 : vector<16x128xf32>
    %c0_7 = arith.constant 0 : index
    %c1 = arith.constant 1 : index
    %c0_8 = arith.constant 0 : index
    %28 = vector.load %arg1[%c0_7, %c1, %c0_8] : memref<1x18x144xf32, #tpu.memory_space<vmem>>, vector<1x16x144xf32>
    %29 = vector.shape_cast %28 : vector<1x16x144xf32> to vector<16x144xf32>
    %30 = vector.extract_strided_slice %29 {offsets = [0, 0], sizes = [16, 128], strides = [1, 1]} : vector<16x144xf32> to vector<16x128xf32>
    %31 = vector.extract_strided_slice %0 {offsets = [1, 0, 0], sizes = [1, 1, 128], strides = [1, 1, 1]} : vector<3x3x128xf32> to vector<1x1x128xf32>
    %32 = vector.shape_cast %31 : vector<1x1x128xf32> to vector<128xf32>
    %33 = vector.shape_cast %32 : vector<128xf32> to vector<1x128xf32>
    %34 = vector.broadcast %33 : vector<1x128xf32> to vector<16x128xf32>
    %35 = arith.mulf %30, %34 : vector<16x128xf32>
    %36 = arith.addf %27, %35 : vector<16x128xf32>
    %37 = vector.extract_strided_slice %29 {offsets = [0, 8], sizes = [16, 128], strides = [1, 1]} : vector<16x144xf32> to vector<16x128xf32>
    %38 = vector.extract_strided_slice %0 {offsets = [1, 1, 0], sizes = [1, 1, 128], strides = [1, 1, 1]} : vector<3x3x128xf32> to vector<1x1x128xf32>
    %39 = vector.shape_cast %38 : vector<1x1x128xf32> to vector<128xf32>
    %40 = vector.shape_cast %39 : vector<128xf32> to vector<1x128xf32>
    %41 = vector.broadcast %40 : vector<1x128xf32> to vector<16x128xf32>
    %42 = arith.mulf %37, %41 : vector<16x128xf32>
    %43 = arith.addf %36, %42 : vector<16x128xf32>
    %44 = vector.extract_strided_slice %29 {offsets = [0, 16], sizes = [16, 128], strides = [1, 1]} : vector<16x144xf32> to vector<16x128xf32>
    %45 = vector.extract_strided_slice %0 {offsets = [1, 2, 0], sizes = [1, 1, 128], strides = [1, 1, 1]} : vector<3x3x128xf32> to vector<1x1x128xf32>
    %46 = vector.shape_cast %45 : vector<1x1x128xf32> to vector<128xf32>
    %47 = vector.shape_cast %46 : vector<128xf32> to vector<1x128xf32>
    %48 = vector.broadcast %47 : vector<1x128xf32> to vector<16x128xf32>
    %49 = arith.mulf %44, %48 : vector<16x128xf32>
    %50 = arith.addf %43, %49 : vector<16x128xf32>
    %c0_9 = arith.constant 0 : index
    %c2 = arith.constant 2 : index
    %c0_10 = arith.constant 0 : index
    %51 = vector.load %arg1[%c0_9, %c2, %c0_10] : memref<1x18x144xf32, #tpu.memory_space<vmem>>, vector<1x16x144xf32>
    %52 = vector.shape_cast %51 : vector<1x16x144xf32> to vector<16x144xf32>
    %53 = vector.extract_strided_slice %52 {offsets = [0, 0], sizes = [16, 128], strides = [1, 1]} : vector<16x144xf32> to vector<16x128xf32>
    %54 = vector.extract_strided_slice %0 {offsets = [2, 0, 0], sizes = [1, 1, 128], strides = [1, 1, 1]} : vector<3x3x128xf32> to vector<1x1x128xf32>
    %55 = vector.shape_cast %54 : vector<1x1x128xf32> to vector<128xf32>
    %56 = vector.shape_cast %55 : vector<128xf32> to vector<1x128xf32>
    %57 = vector.broadcast %56 : vector<1x128xf32> to vector<16x128xf32>
    %58 = arith.mulf %53, %57 : vector<16x128xf32>
    %59 = arith.addf %50, %58 : vector<16x128xf32>
    %60 = vector.extract_strided_slice %52 {offsets = [0, 8], sizes = [16, 128], strides = [1, 1]} : vector<16x144xf32> to vector<16x128xf32>
    %61 = vector.extract_strided_slice %0 {offsets = [2, 1, 0], sizes = [1, 1, 128], strides = [1, 1, 1]} : vector<3x3x128xf32> to vector<1x1x128xf32>
    %62 = vector.shape_cast %61 : vector<1x1x128xf32> to vector<128xf32>
    %63 = vector.shape_cast %62 : vector<128xf32> to vector<1x128xf32>
    %64 = vector.broadcast %63 : vector<1x128xf32> to vector<16x128xf32>
    %65 = arith.mulf %60, %64 : vector<16x128xf32>
    %66 = arith.addf %59, %65 : vector<16x128xf32>
    %67 = vector.extract_strided_slice %52 {offsets = [0, 16], sizes = [16, 128], strides = [1, 1]} : vector<16x144xf32> to vector<16x128xf32>
    %68 = vector.extract_strided_slice %0 {offsets = [2, 2, 0], sizes = [1, 1, 128], strides = [1, 1, 1]} : vector<3x3x128xf32> to vector<1x1x128xf32>
    %69 = vector.shape_cast %68 : vector<1x1x128xf32> to vector<128xf32>
    %70 = vector.shape_cast %69 : vector<128xf32> to vector<1x128xf32>
    %71 = vector.broadcast %70 : vector<1x128xf32> to vector<16x128xf32>
    %72 = arith.mulf %67, %71 : vector<16x128xf32>
    %73 = arith.addf %66, %72 : vector<16x128xf32>
    %c0_11 = arith.constant 0 : index
    %c0_12 = arith.constant 0 : index
    %c0_13 = arith.constant 0 : index
    %74 = vector.load %arg4[%c0_11, %c0_12, %c0_13] : memref<1x16x128xf32, #tpu.memory_space<vmem>>, vector<1x16x128xf32>
    %75 = vector.shape_cast %74 : vector<1x16x128xf32> to vector<16x128xf32>
    %76 = vector.shape_cast %73 : vector<16x128xf32> to vector<1x16x128xf32>
    tpu.vector_store %arg4[%c0_11, %c0_12, %c0_13], %76 {strides = array<i32>} : memref<1x16x128xf32, #tpu.memory_space<vmem>>, vector<1x16x128xf32>,
    return
  }
  func.func @transform_0(%arg0: i32) -> (i32, i32, i32) {
    %c0_i32 = arith.constant 0 : i32
    %c0_i32_0 = arith.constant 0 : i32
    %c0_i32_1 = arith.constant 0 : i32
    return %arg0, %c0_i32, %c0_i32_0 : i32, i32, i32
  }
  func.func @transform_1(%arg0: i32) -> (i32, i32, i32) {
    %c0_i32 = arith.constant 0 : i32
    %c0_i32_0 = arith.constant 0 : i32
    %c0_i32_1 = arith.constant 0 : i32
    %c0_i32_2 = arith.constant 0 : i32
    return %c0_i32, %c0_i32_0, %c0_i32_1 : i32, i32, i32
  }
  func.func @transform_2(%arg0: i32) -> (i32, i32) {
    %c0_i32 = arith.constant 0 : i32
    %c0_i32_0 = arith.constant 0 : i32
    %c0_i32_1 = arith.constant 0 : i32
    return %c0_i32, %c0_i32_0 : i32, i32
  }
  func.func @transform_3(%arg0: i32) -> (i32, i32, i32) {
    %c0_i32 = arith.constant 0 : i32
    %c0_i32_0 = arith.constant 0 : i32
    %c0_i32_1 = arith.constant 0 : i32
    return %arg0, %c0_i32, %c0_i32_0 : i32, i32, i32
  }
}

</mosaic_0001>

<llo_original>
// kernel: tile.18
$region0: #{tile.18}
  #allocation0 [shape = 's32[1]{0}', space=sflag, size = 0x4, scoped, tag = 'scoped memory for tile.18']
  %s0 = inlined_call_operand.vmem [shape: f32[8], index: 0, kind: input, shape index: {}]
  %s1 = inlined_call_operand.vmem [shape: f32[16,8], index: 1, kind: output, shape index: {}]
  // Predicated region
  $region2: #{tile.18} parent=0 // pred_check
    _
  $region3: #{tile.18} parent=0 // pred_check_branch
    %3 = sbr.rel (0) target = $region5
  $region4: #{tile.18} parent=0 // pred_region
    _
  $region5: #{tile.18} parent=0 // pred_fallthru
    _
  %v4 = vld [vmem:[%s0] ss:$0 sm:$0xff]
  %5 = vst [vmem:[%s1] sm:$0xff] %v4
  %s6 = scalar_lea.vmem %s1, 8
  %7 = vst [vmem:[%s6] sm:$0xff] %v4

// kernel: tile.19
$region0: #{tile.19}
  %s0 = inlined_call_operand.vmem [shape: f32[16,8], index: 0, kind: input, shape index: {}]
  %s1 = inlined_call_operand.vmem [shape: f32[1,128], index: 1, kind: output, shape index: {}]
  $region1: #{tile.19} parent=0
    #allocation0 [shape = 'u8[4096]{0}', space=vmem, size = 0x1000, scoped, tag = 'scoped mem for output reshape']
    %v2 = vld [vmem:[%s0] sm:$0x1]
    %vm3 = vcmask 64512
    %4 = vst.msk [vmem:[#allocation0] sm:$0x1] %vm3, %v2
    %s5 = scalar_lea.vmem %s0, 15
    %v6 = vld [vmem:[%s5] sm:$0x1]
    %7 = vrot.lane.b32.xlu0 %v6, 120
    %v8 = vpop.permute.xlu0 %7
    %vm9 = vcmask 1048512
    %10 = vst.msk [vmem:[#allocation0] sm:$0x1] %vm9, %v8
    %s11 = scalar_lea.vmem %s0, 14
    %v12 = vld [vmem:[%s11] sm:$0x1]
    %13 = vrot.lane.b32.xlu0 %v12, 112
    %v14 = vpop.permute.xlu0 %13
    %vm15 = vcmask 982912
    %16 = vst.msk [vmem:[#allocation0] sm:$0x1] %vm15, %v14
    %s17 = scalar_lea.vmem %s0, 13
    %v18 = vld [vmem:[%s17] sm:$0x1]
    %19 = vrot.lane.b32.xlu0 %v18, 104
    %v20 = vpop.permute.xlu0 %19
    %vm21 = vcmask 917312
    %22 = vst.msk [vmem:[#allocation0] sm:$0x1] %vm21, %v20
    %s23 = scalar_lea.vmem %s0, 12
    %v24 = vld [vmem:[%s23] sm:$0x1]
    %25 = vrot.lane.b32.xlu0 %v24, 96
    %v26 = vpop.permute.xlu0 %25
    %vm27 = vcmask 851712
    %28 = vst.msk [vmem:[#allocation0] sm:$0x1] %vm27, %v26
    %s29 = scalar_lea.vmem %s0, 11
    %v30 = vld [vmem:[%s29] sm:$0x1]
    %31 = vrot.lane.b32.xlu0 %v30, 88
    %v32 = vpop.permute.xlu0 %31
    %vm33 = vcmask 786112
    %34 = vst.msk [vmem:[#allocation0] sm:$0x1] %vm33, %v32
    %s35 = scalar_lea.vmem %s0, 10
    %v36 = vld [vmem:[%s35] sm:$0x1]
    %37 = vrot.lane.b32.xlu0 %v36, 80
    %v38 = vpop.permute.xlu0 %37
    %vm39 = vcmask 720512
    %40 = vst.msk [vmem:[#allocation0] sm:$0x1] %vm39, %v38
    %s41 = scalar_lea.vmem %s0, 9
    %v42 = vld [vmem:[%s41] sm:$0x1]
    %43 = vrot.lane.b32.xlu0 %v42, 72
    %v44 = vpop.permute.xlu0 %43
    %vm45 = vcmask 654912
    %46 = vst.msk [vmem:[#allocation0] sm:$0x1] %vm45, %v44
    %s47 = scalar_lea.vmem %s0, 8
    %v48 = vld [vmem:[%s47] sm:$0x1]
    %49 = vrot.lane.b32.xlu0 %v48, 64
    %v50 = vpop.permute.xlu0 %49
    %vm51 = vcmask 589312
    %52 = vst.msk [vmem:[#allocation0] sm:$0x1] %vm51, %v50
    %s53 = scalar_lea.vmem %s0, 7
    %v54 = vld [vmem:[%s53] sm:$0x1]
    %55 = vrot.lane.b32.xlu0 %v54, 56
    %v56 = vpop.permute.xlu0 %55
    %vm57 = vcmask 523712
    %58 = vst.msk [vmem:[#allocation0] sm:$0x1] %vm57, %v56
    %s59 = scalar_lea.vmem %s0, 6
    %v60 = vld [vmem:[%s59] sm:$0x1]
    %61 = vrot.lane.b32.xlu0 %v60, 48
    %v62 = vpop.permute.xlu0 %61
    %vm63 = vcmask 458112
    %64 = vst.msk [vmem:[#allocation0] sm:$0x1] %vm63, %v62
    %s65 = scalar_lea.vmem %s0, 5
    %v66 = vld [vmem:[%s65] sm:$0x1]
    %67 = vrot.lane.b32.xlu0 %v66, 40
    %v68 = vpop.permute.xlu0 %67
    %vm69 = vcmask 392512
    %70 = vst.msk [vmem:[#allocation0] sm:$0x1] %vm69, %v68
    %s71 = scalar_lea.vmem %s0, 4
    %v72 = vld [vmem:[%s71] sm:$0x1]
    %73 = vrot.lane.b32.xlu0 %v72, 32
    %v74 = vpop.permute.xlu0 %73
    %vm75 = vcmask 326912
    %76 = vst.msk [vmem:[#allocation0] sm:$0x1] %vm75, %v74
    %s77 = scalar_lea.vmem %s0, 3
    %v78 = vld [vmem:[%s77] sm:$0x1]
    %79 = vrot.lane.b32.xlu0 %v78, 24
    %v80 = vpop.permute.xlu0 %79
    %vm81 = vcmask 261312
    %82 = vst.msk [vmem:[#allocation0] sm:$0x1] %vm81, %v80
    %s83 = scalar_lea.vmem %s0, 2
    %v84 = vld [vmem:[%s83] sm:$0x1]
    %85 = vrot.lane.b32.xlu0 %v84, 16
    %v86 = vpop.permute.xlu0 %85
    %vm87 = vcmask 195712
    %88 = vst.msk [vmem:[#allocation0] sm:$0x1] %vm87, %v86
    %s89 = scalar_lea.vmem %s0, 1
    %v90 = vld [vmem:[%s89] sm:$0x1]
    %91 = vrot.lane.b32.xlu0 %v90, 8
    %v92 = vpop.permute.xlu0 %91
    %vm93 = vcmask 130112
    %94 = vst.msk [vmem:[#allocation0] sm:$0x1] %vm93, %v92
    %s96 = sshllo.u32 0, 1
    %v98 = vld [vmem:[#allocation0] sm:%s96]
    %s99 = sshllo.u32 0, 1
    %100 = vst [vmem:[%s1] sm:%s99] %v98

// kernel: tile.14
$region0: #{tile.14}
  %s0 = inlined_call_operand.vmem [shape: f32[3,3,16,8], index: 0, kind: input, shape index: {}]
  %s1 = inlined_call_operand.vmem [shape: f32[3,3,128], index: 1, kind: output, shape index: {}]
  $region1: #{tile.14} parent=0
    #allocation0 [shape = 'u8[12288]{0}', space=vmem, size = 0x3000, scoped, tag = 'scoped mem for output reshape']
    %s2 = smov 3
    %v3 = vld [vmem:[%s0] ss:$16 sm:%s2]
    %s4 = smov 12
    %v5 = vld [vmem:[%s0] ss:$16 sm:%s4]
    %vm6 = vcmask 1043458
    %v7 = vsel %vm6, %v5, %v3
    %s8 = smov 48
    %v9 = vld [vmem:[%s0] ss:$16 sm:%s8]
    %vm10 = vcmask 1045508
    %v11 = vsel %vm10, %v9, %v7
    %s12 = smov 192
    %v13 = vld [vmem:[%s0] ss:$16 sm:%s12]
    %vm14 = vcmask 1047558
    %v15 = vsel %vm14, %v13, %v11
    %vm16 = vcmask 64512
    %17 = vst.msk [vmem:[#allocation0] sm:$0x7] %vm16, %v15
    %s18 = scalar_lea.vmem [#allocation0], 5
    %19 = vst.msk [vmem:[%s18] sm:$0x38] %vm16, %v15
    %s20 = scalar_lea.vmem [#allocation0], 10
    %21 = vst.msk [vmem:[%s20] sm:$0xc0] %vm16, %v15
    %s22 = scalar_lea.vmem %s0, 128
    %v23 = vld [vmem:[%s22] sm:$0x1]
    %vm24 = vcmask 64512
    %s25 = scalar_lea.vmem [#allocation0], 18
    %26 = vst.msk [vmem:[%s25] sm:$0x1] %vm24, %v23
    %s27 = scalar_lea.vmem %s0, 15
    %s28 = smov 3
    %v29 = vld [vmem:[%s27] ss:$16 sm:%s28]
    %s30 = scalar_lea.vmem %s0, 15
    %s31 = smov 12
    %v32 = vld [vmem:[%s30] ss:$16 sm:%s31]
    %vm33 = vcmask 1043458
    %v34 = vsel %vm33, %v32, %v29
    %s35 = scalar_lea.vmem %s0, 15
    %s36 = smov 48
    %v37 = vld [vmem:[%s35] ss:$16 sm:%s36]
    %vm38 = vcmask 1045508
    %v39 = vsel %vm38, %v37, %v34
    %s40 = scalar_lea.vmem %s0, 15
    %s41 = smov 192
    %v42 = vld [vmem:[%s40] ss:$16 sm:%s41]
    %vm43 = vcmask 1047558
    %v44 = vsel %vm43, %v42, %v39
    %45 = vrot.lane.b32.xlu0 %v44, 120
    %v46 = vpop.permute.xlu0 %45
    %vm47 = vcmask 1048512
    %48 = vst.msk [vmem:[#allocation0] sm:$0x7] %vm47, %v46
    %s49 = scalar_lea.vmem [#allocation0], 5
    %50 = vst.msk [vmem:[%s49] sm:$0x38] %vm47, %v46
    %s51 = scalar_lea.vmem [#allocation0], 10
    %52 = vst.msk [vmem:[%s51] sm:$0xc0] %vm47, %v46
    %s53 = scalar_lea.vmem %s0, 143
    %v54 = vld [vmem:[%s53] sm:$0x1]
    %55 = vrot.lane.b32.xlu0 %v54, 120
    %v56 = vpop.permute.xlu0 %55
    %vm57 = vcmask 1048512
    %s58 = scalar_lea.vmem [#allocation0], 18
    %59 = vst.msk [vmem:[%s58] sm:$0x1] %vm57, %v56
    %s60 = scalar_lea.vmem %s0, 14
    %s61 = smov 3
    %v62 = vld [vmem:[%s60] ss:$16 sm:%s61]
    %s63 = scalar_lea.vmem %s0, 14
    %s64 = smov 12
    %v65 = vld [vmem:[%s63] ss:$16 sm:%s64]
    %vm66 = vcmask 1043458
    %v67 = vsel %vm66, %v65, %v62
    %s68 = scalar_lea.vmem %s0, 14
    %s69 = smov 48
    %v70 = vld [vmem:[%s68] ss:$16 sm:%s69]
    %vm71 = vcmask 1045508
    %v72 = vsel %vm71, %v70, %v67
    %s73 = scalar_lea.vmem %s0, 14
    %s74 = smov 192
    %v75 = vld [vmem:[%s73] ss:$16 sm:%s74]
    %vm76 = vcmask 1047558
    %v77 = vsel %vm76, %v75, %v72
    %78 = vrot.lane.b32.xlu0 %v77, 112
    %v79 = vpop.permute.xlu0 %78
    %vm80 = vcmask 982912
    %81 = vst.msk [vmem:[#allocation0] sm:$0x7] %vm80, %v79
    %s82 = scalar_lea.vmem [#allocation0], 5
    %83 = vst.msk [vmem:[%s82] sm:$0x38] %vm80, %v79
    %s84 = scalar_lea.vmem [#allocation0], 10
    %85 = vst.msk [vmem:[%s84] sm:$0xc0] %vm80, %v79
    %s86 = scalar_lea.vmem %s0, 142
    %v87 = vld [vmem:[%s86] sm:$0x1]
    %88 = vrot.lane.b32.xlu0 %v87, 112
    %v89 = vpop.permute.xlu0 %88
    %vm90 = vcmask 982912
    %s91 = scalar_lea.vmem [#allocation0], 18
    %92 = vst.msk [vmem:[%s91] sm:$0x1] %vm90, %v89
    %s93 = scalar_lea.vmem %s0, 13
    %s94 = smov 3
    %v95 = vld [vmem:[%s93] ss:$16 sm:%s94]
    %s96 = scalar_lea.vmem %s0, 13
    %s97 = smov 12
    %v98 = vld [vmem:[%s96] ss:$16 sm:%s97]
    %vm99 = vcmask 1043458
    %v100 = vsel %vm99, %v98, %v95
    %s101 = scalar_lea.vmem %s0, 13
    %s102 = smov 48
    %v103 = vld [vmem:[%s101] ss:$16 sm:%s102]
    %vm104 = vcmask 1045508
    %v105 = vsel %vm104, %v103, %v100
    %s106 = scalar_lea.vmem %s0, 13
    %s107 = smov 192
    %v108 = vld [vmem:[%s106] ss:$16 sm:%s107]
    %vm109 = vcmask 1047558
    %v110 = vsel %vm109, %v108, %v105
    %111 = vrot.lane.b32.xlu0 %v110, 104
    %v112 = vpop.permute.xlu0 %111
    %vm113 = vcmask 917312
    %114 = vst.msk [vmem:[#allocation0] sm:$0x7] %vm113, %v112
    %s115 = scalar_lea.vmem [#allocation0], 5
    %116 = vst.msk [vmem:[%s115] sm:$0x38] %vm113, %v112
    %s117 = scalar_lea.vmem [#allocation0], 10
    %118 = vst.msk [vmem:[%s117] sm:$0xc0] %vm113, %v112
    %s119 = scalar_lea.vmem %s0, 141
    %v120 = vld [vmem:[%s119] sm:$0x1]
    %121 = vrot.lane.b32.xlu0 %v120, 104
    %v122 = vpop.permute.xlu0 %121
    %vm123 = vcmask 917312
    %s124 = scalar_lea.vmem [#allocation0], 18
    %125 = vst.msk [vmem:[%s124] sm:$0x1] %vm123, %v122
    %s126 = scalar_lea.vmem %s0, 12
    %s127 = smov 3
    %v128 = vld [vmem:[%s126] ss:$16 sm:%s127]
    %s129 = scalar_lea.vmem %s0, 12
    %s130 = smov 12
    %v131 = vld [vmem:[%s129] ss:$16 sm:%s130]
    %vm132 = vcmask 1043458
    %v133 = vsel %vm132, %v131, %v128
    %s134 = scalar_lea.vmem %s0, 12
    %s135 = smov 48
    %v136 = vld [vmem:[%s134] ss:$16 sm:%s135]
    %vm137 = vcmask 1045508
    %v138 = vsel %vm137, %v136, %v133
    %s139 = scalar_lea.vmem %s0, 12
    %s140 = smov 192
    %v141 = vld [vmem:[%s139] ss:$16 sm:%s140]
    %vm142 = vcmask 1047558
    %v143 = vsel %vm142, %v141, %v138
    %144 = vrot.lane.b32.xlu0 %v143, 96
    %v145 = vpop.permute.xlu0 %144
    %vm146 = vcmask 851712
    %147 = vst.msk [vmem:[#allocation0] sm:$0x7] %vm146, %v145
    %s148 = scalar_lea.vmem [#allocation0], 5
    %149 = vst.msk [vmem:[%s148] sm:$0x38] %vm146, %v145
    %s150 = scalar_lea.vmem [#allocation0], 10
    %151 = vst.msk [vmem:[%s150] sm:$0xc0] %vm146, %v145
    %s152 = scalar_lea.vmem %s0, 140
    %v153 = vld [vmem:[%s152] sm:$0x1]
    %154 = vrot.lane.b32.xlu0 %v153, 96
    %v155 = vpop.permute.xlu0 %154
    %vm156 = vcmask 851712
    %s157 = scalar_lea.vmem [#allocation0], 18
    %158 = vst.msk [vmem:[%s157] sm:$0x1] %vm156, %v155
    %s159 = scalar_lea.vmem %s0, 11
    %s160 = smov 3
    %v161 = vld [vmem:[%s159] ss:$16 sm:%s160]
    %s162 = scalar_lea.vmem %s0, 11
    %s163 = smov 12
    %v164 = vld [vmem:[%s162] ss:$16 sm:%s163]
    %vm165 = vcmask 1043458
    %v166 = vsel %vm165, %v164, %v161
    %s167 = scalar_lea.vmem %s0, 11
    %s168 = smov 48
    %v169 = vld [vmem:[%s167] ss:$16 sm:%s168]
    %vm170 = vcmask 1045508
    %v171 = vsel %vm170, %v169, %v166
    %s172 = scalar_lea.vmem %s0, 11
    %s173 = smov 192
    %v174 = vld [vmem:[%s172] ss:$16 sm:%s173]
    %vm175 = vcmask 1047558
    %v176 = vsel %vm175, %v174, %v171
    %177 = vrot.lane.b32.xlu0 %v176, 88
    %v178 = vpop.permute.xlu0 %177
    %vm179 = vcmask 786112
    %180 = vst.msk [vmem:[#allocation0] sm:$0x7] %vm179, %v178
    %s181 = scalar_lea.vmem [#allocation0], 5
    %182 = vst.msk [vmem:[%s181] sm:$0x38] %vm179, %v178
    %s183 = scalar_lea.vmem [#allocation0], 10
    %184 = vst.msk [vmem:[%s183] sm:$0xc0] %vm179, %v178
    %s185 = scalar_lea.vmem %s0, 139
    %v186 = vld [vmem:[%s185] sm:$0x1]
    %187 = vrot.lane.b32.xlu0 %v186, 88
    %v188 = vpop.permute.xlu0 %187
    %vm189 = vcmask 786112
    %s190 = scalar_lea.vmem [#allocation0], 18
    %191 = vst.msk [vmem:[%s190] sm:$0x1] %vm189, %v188
    %s192 = scalar_lea.vmem %s0, 10
    %s193 = smov 3
    %v194 = vld [vmem:[%s192] ss:$16 sm:%s193]
    %s195 = scalar_lea.vmem %s0, 10
    %s196 = smov 12
    %v197 = vld [vmem:[%s195] ss:$16 sm:%s196]
    %vm198 = vcmask 1043458
    %v199 = vsel %vm198, %v197, %v194
    %s200 = scalar_lea.vmem %s0, 10
    %s201 = smov 48
    %v202 = vld [vmem:[%s200] ss:$16 sm:%s201]
    %vm203 = vcmask 1045508
    %v204 = vsel %vm203, %v202, %v199
    %s205 = scalar_lea.vmem %s0, 10
    %s206 = smov 192
    %v207 = vld [vmem:[%s205] ss:$16 sm:%s206]
    %vm208 = vcmask 1047558
    %v209 = vsel %vm208, %v207, %v204
    %210 = vrot.lane.b32.xlu0 %v209, 80
    %v211 = vpop.permute.xlu0 %210
    %vm212 = vcmask 720512
    %213 = vst.msk [vmem:[#allocation0] sm:$0x7] %vm212, %v211
    %s214 = scalar_lea.vmem [#allocation0], 5
    %215 = vst.msk [vmem:[%s214] sm:$0x38] %vm212, %v211
    %s216 = scalar_lea.vmem [#allocation0], 10
    %217 = vst.msk [vmem:[%s216] sm:$0xc0] %vm212, %v211
    %s218 = scalar_lea.vmem %s0, 138
    %v219 = vld [vmem:[%s218] sm:$0x1]
    %220 = vrot.lane.b32.xlu0 %v219, 80
    %v221 = vpop.permute.xlu0 %220
    %vm222 = vcmask 720512
    %s223 = scalar_lea.vmem [#allocation0], 18
    %224 = vst.msk [vmem:[%s223] sm:$0x1] %vm222, %v221
    %s225 = scalar_lea.vmem %s0, 9
    %s226 = smov 3
    %v227 = vld [vmem:[%s225] ss:$16 sm:%s226]
    %s228 = scalar_lea.vmem %s0, 9
    %s229 = smov 12
    %v230 = vld [vmem:[%s228] ss:$16 sm:%s229]
    %vm231 = vcmask 1043458
    %v232 = vsel %vm231, %v230, %v227
    %s233 = scalar_lea.vmem %s0, 9
    %s234 = smov 48
    %v235 = vld [vmem:[%s233] ss:$16 sm:%s234]
    %vm236 = vcmask 1045508
    %v237 = vsel %vm236, %v235, %v232
    %s238 = scalar_lea.vmem %s0, 9
    %s239 = smov 192
    %v240 = vld [vmem:[%s238] ss:$16 sm:%s239]
    %vm241 = vcmask 1047558
    %v242 = vsel %vm241, %v240, %v237
    %243 = vrot.lane.b32.xlu0 %v242, 72
    %v244 = vpop.permute.xlu0 %243
    %vm245 = vcmask 654912
    %246 = vst.msk [vmem:[#allocation0] sm:$0x7] %vm245, %v244
    %s247 = scalar_lea.vmem [#allocation0], 5
    %248 = vst.msk [vmem:[%s247] sm:$0x38] %vm245, %v244
    %s249 = scalar_lea.vmem [#allocation0], 10
    %250 = vst.msk [vmem:[%s249] sm:$0xc0] %vm245, %v244
    %s251 = scalar_lea.vmem %s0, 137
    %v252 = vld [vmem:[%s251] sm:$0x1]
    %253 = vrot.lane.b32.xlu0 %v252, 72
    %v254 = vpop.permute.xlu0 %253
    %vm255 = vcmask 654912
    %s256 = scalar_lea.vmem [#allocation0], 18
    %257 = vst.msk [vmem:[%s256] sm:$0x1] %vm255, %v254
    %s258 = scalar_lea.vmem %s0, 8
    %s259 = smov 3
    %v260 = vld [vmem:[%s258] ss:$16 sm:%s259]
    %s261 = scalar_lea.vmem %s0, 8
    %s262 = smov 12
    %v263 = vld [vmem:[%s261] ss:$16 sm:%s262]
    %vm264 = vcmask 1043458
    %v265 = vsel %vm264, %v263, %v260
    %s266 = scalar_lea.vmem %s0, 8
    %s267 = smov 48
    %v268 = vld [vmem:[%s266] ss:$16 sm:%s267]
    %vm269 = vcmask 1045508
    %v270 = vsel %vm269, %v268, %v265
    %s271 = scalar_lea.vmem %s0, 8
    %s272 = smov 192
    %v273 = vld [vmem:[%s271] ss:$16 sm:%s272]
    %vm274 = vcmask 1047558
    %v275 = vsel %vm274, %v273, %v270
    %276 = vrot.lane.b32.xlu0 %v275, 64
    %v277 = vpop.permute.xlu0 %276
    %vm278 = vcmask 589312
    %279 = vst.msk [vmem:[#allocation0] sm:$0x7] %vm278, %v277
    %s280 = scalar_lea.vmem [#allocation0], 5
    %281 = vst.msk [vmem:[%s280] sm:$0x38] %vm278, %v277
    %s282 = scalar_lea.vmem [#allocation0], 10
    %283 = vst.msk [vmem:[%s282] sm:$0xc0] %vm278, %v277
    %s284 = scalar_lea.vmem %s0, 136
    %v285 = vld [vmem:[%s284] sm:$0x1]
    %286 = vrot.lane.b32.xlu0 %v285, 64
    %v287 = vpop.permute.xlu0 %286
    %vm288 = vcmask 589312
    %s289 = scalar_lea.vmem [#allocation0], 18
    %290 = vst.msk [vmem:[%s289] sm:$0x1] %vm288, %v287
    %s291 = scalar_lea.vmem %s0, 7
    %s292 = smov 3
    %v293 = vld [vmem:[%s291] ss:$16 sm:%s292]
    %s294 = scalar_lea.vmem %s0, 7
    %s295 = smov 12
    %v296 = vld [vmem:[%s294] ss:$16 sm:%s295]
    %vm297 = vcmask 1043458
    %v298 = vsel %vm297, %v296, %v293
    %s299 = scalar_lea.vmem %s0, 7
    %s300 = smov 48
    %v301 = vld [vmem:[%s299] ss:$16 sm:%s300]
    %vm302 = vcmask 1045508
    %v303 = vsel %vm302, %v301, %v298
    %s304 = scalar_lea.vmem %s0, 7
    %s305 = smov 192
    %v306 = vld [vmem:[%s304] ss:$16 sm:%s305]
    %vm307 = vcmask 1047558
    %v308 = vsel %vm307, %v306, %v303
    %309 = vrot.lane.b32.xlu0 %v308, 56
    %v310 = vpop.permute.xlu0 %309
    %vm311 = vcmask 523712
    %312 = vst.msk [vmem:[#allocation0] sm:$0x7] %vm311, %v310
    %s313 = scalar_lea.vmem [#allocation0], 5
    %314 = vst.msk [vmem:[%s313] sm:$0x38] %vm311, %v310
    %s315 = scalar_lea.vmem [#allocation0], 10
    %316 = vst.msk [vmem:[%s315] sm:$0xc0] %vm311, %v310
    %s317 = scalar_lea.vmem %s0, 135
    %v318 = vld [vmem:[%s317] sm:$0x1]
    %319 = vrot.lane.b32.xlu0 %v318, 56
    %v320 = vpop.permute.xlu0 %319
    %vm321 = vcmask 523712
    %s322 = scalar_lea.vmem [#allocation0], 18
    %323 = vst.msk [vmem:[%s322] sm:$0x1] %vm321, %v320
    %s324 = scalar_lea.vmem %s0, 6
    %s325 = smov 3
    %v326 = vld [vmem:[%s324] ss:$16 sm:%s325]
    %s327 = scalar_lea.vmem %s0, 6
    %s328 = smov 12
    %v329 = vld [vmem:[%s327] ss:$16 sm:%s328]
    %vm330 = vcmask 1043458
    %v331 = vsel %vm330, %v329, %v326
    %s332 = scalar_lea.vmem %s0, 6
    %s333 = smov 48
    %v334 = vld [vmem:[%s332] ss:$16 sm:%s333]
    %vm335 = vcmask 1045508
    %v336 = vsel %vm335, %v334, %v331
    %s337 = scalar_lea.vmem %s0, 6
    %s338 = smov 192
    %v339 = vld [vmem:[%s337] ss:$16 sm:%s338]
    %vm340 = vcmask 1047558
    %v341 = vsel %vm340, %v339, %v336
    %342 = vrot.lane.b32.xlu0 %v341, 48
    %v343 = vpop.permute.xlu0 %342
    %vm344 = vcmask 458112
    %345 = vst.msk [vmem:[#allocation0] sm:$0x7] %vm344, %v343
    %s346 = scalar_lea.vmem [#allocation0], 5
    %347 = vst.msk [vmem:[%s346] sm:$0x38] %vm344, %v343
    %s348 = scalar_lea.vmem [#allocation0], 10
    %349 = vst.msk [vmem:[%s348] sm:$0xc0] %vm344, %v343
    %s350 = scalar_lea.vmem %s0, 134
    %v351 = vld [vmem:[%s350] sm:$0x1]
    %352 = vrot.lane.b32.xlu0 %v351, 48
    %v353 = vpop.permute.xlu0 %352
    %vm354 = vcmask 458112
    %s355 = scalar_lea.vmem [#allocation0], 18
    %356 = vst.msk [vmem:[%s355] sm:$0x1] %vm354, %v353
    %s357 = scalar_lea.vmem %s0, 5
    %s358 = smov 3
    %v359 = vld [vmem:[%s357] ss:$16 sm:%s358]
    %s360 = scalar_lea.vmem %s0, 5
    %s361 = smov 12
    %v362 = vld [vmem:[%s360] ss:$16 sm:%s361]
    %vm363 = vcmask 1043458
    %v364 = vsel %vm363, %v362, %v359
    %s365 = scalar_lea.vmem %s0, 5
    %s366 = smov 48
    %v367 = vld [vmem:[%s365] ss:$16 sm:%s366]
    %vm368 = vcmask 1045508
    %v369 = vsel %vm368, %v367, %v364
    %s370 = scalar_lea.vmem %s0, 5
    %s371 = smov 192
    %v372 = vld [vmem:[%s370] ss:$16 sm:%s371]
    %vm373 = vcmask 1047558
    %v374 = vsel %vm373, %v372, %v369
    %375 = vrot.lane.b32.xlu0 %v374, 40
    %v376 = vpop.permute.xlu0 %375
    %vm377 = vcmask 392512
    %378 = vst.msk [vmem:[#allocation0] sm:$0x7] %vm377, %v376
    %s379 = scalar_lea.vmem [#allocation0], 5
    %380 = vst.msk [vmem:[%s379] sm:$0x38] %vm377, %v376
    %s381 = scalar_lea.vmem [#allocation0], 10
    %382 = vst.msk [vmem:[%s381] sm:$0xc0] %vm377, %v376
    %s383 = scalar_lea.vmem %s0, 133
    %v384 = vld [vmem:[%s383] sm:$0x1]
    %385 = vrot.lane.b32.xlu0 %v384, 40
    %v386 = vpop.permute.xlu0 %385
    %vm387 = vcmask 392512
    %s388 = scalar_lea.vmem [#allocation0], 18
    %389 = vst.msk [vmem:[%s388] sm:$0x1] %vm387, %v386
    %s390 = scalar_lea.vmem %s0, 4
    %s391 = smov 3
    %v392 = vld [vmem:[%s390] ss:$16 sm:%s391]
    %s393 = scalar_lea.vmem %s0, 4
    %s394 = smov 12
    %v395 = vld [vmem:[%s393] ss:$16 sm:%s394]
    %vm396 = vcmask 1043458
    %v397 = vsel %vm396, %v395, %v392
    %s398 = scalar_lea.vmem %s0, 4
    %s399 = smov 48
    %v400 = vld [vmem:[%s398] ss:$16 sm:%s399]
    %vm401 = vcmask 1045508
    %v402 = vsel %vm401, %v400, %v397
    %s403 = scalar_lea.vmem %s0, 4
    %s404 = smov 192
    %v405 = vld [vmem:[%s403] ss:$16 sm:%s404]
    %vm406 = vcmask 1047558
    %v407 = vsel %vm406, %v405, %v402
    %408 = vrot.lane.b32.xlu0 %v407, 32
    %v409 = vpop.permute.xlu0 %408
    %vm410 = vcmask 326912
    %411 = vst.msk [vmem:[#allocation0] sm:$0x7] %vm410, %v409
    %s412 = scalar_lea.vmem [#allocation0], 5
    %413 = vst.msk [vmem:[%s412] sm:$0x38] %vm410, %v409
    %s414 = scalar_lea.vmem [#allocation0], 10
    %415 = vst.msk [vmem:[%s414] sm:$0xc0] %vm410, %v409
    %s416 = scalar_lea.vmem %s0, 132
    %v417 = vld [vmem:[%s416] sm:$0x1]
    %418 = vrot.lane.b32.xlu0 %v417, 32
    %v419 = vpop.permute.xlu0 %418
    %vm420 = vcmask 326912
    %s421 = scalar_lea.vmem [#allocation0], 18
    %422 = vst.msk [vmem:[%s421] sm:$0x1] %vm420, %v419
    %s423 = scalar_lea.vmem %s0, 3
    %s424 = smov 3
    %v425 = vld [vmem:[%s423] ss:$16 sm:%s424]
    %s426 = scalar_lea.vmem %s0, 3
    %s427 = smov 12
    %v428 = vld [vmem:[%s426] ss:$16 sm:%s427]
    %vm429 = vcmask 1043458
    %v430 = vsel %vm429, %v428, %v425
    %s431 = scalar_lea.vmem %s0, 3
    %s432 = smov 48
    %v433 = vld [vmem:[%s431] ss:$16 sm:%s432]
    %vm434 = vcmask 1045508
    %v435 = vsel %vm434, %v433, %v430
    %s436 = scalar_lea.vmem %s0, 3
    %s437 = smov 192
    %v438 = vld [vmem:[%s436] ss:$16 sm:%s437]
    %vm439 = vcmask 1047558
    %v440 = vsel %vm439, %v438, %v435
    %441 = vrot.lane.b32.xlu0 %v440, 24
    %v442 = vpop.permute.xlu0 %441
    %vm443 = vcmask 261312
    %444 = vst.msk [vmem:[#allocation0] sm:$0x7] %vm443, %v442
    %s445 = scalar_lea.vmem [#allocation0], 5
    %446 = vst.msk [vmem:[%s445] sm:$0x38] %vm443, %v442
    %s447 = scalar_lea.vmem [#allocation0], 10
    %448 = vst.msk [vmem:[%s447] sm:$0xc0] %vm443, %v442
    %s449 = scalar_lea.vmem %s0, 131
    %v450 = vld [vmem:[%s449] sm:$0x1]
    %451 = vrot.lane.b32.xlu0 %v450, 24
    %v452 = vpop.permute.xlu0 %451
    %vm453 = vcmask 261312
    %s454 = scalar_lea.vmem [#allocation0], 18
    %455 = vst.msk [vmem:[%s454] sm:$0x1] %vm453, %v452
    %s456 = scalar_lea.vmem %s0, 2
    %s457 = smov 3
    %v458 = vld [vmem:[%s456] ss:$16 sm:%s457]
    %s459 = scalar_lea.vmem %s0, 2
    %s460 = smov 12
    %v461 = vld [vmem:[%s459] ss:$16 sm:%s460]
    %vm462 = vcmask 1043458
    %v463 = vsel %vm462, %v461, %v458
    %s464 = scalar_lea.vmem %s0, 2
    %s465 = smov 48
    %v466 = vld [vmem:[%s464] ss:$16 sm:%s465]
    %vm467 = vcmask 1045508
    %v468 = vsel %vm467, %v466, %v463
    %s469 = scalar_lea.vmem %s0, 2
    %s470 = smov 192
    %v471 = vld [vmem:[%s469] ss:$16 sm:%s470]
    %vm472 = vcmask 1047558
    %v473 = vsel %vm472, %v471, %v468
    %474 = vrot.lane.b32.xlu0 %v473, 16
    %v475 = vpop.permute.xlu0 %474
    %vm476 = vcmask 195712
    %477 = vst.msk [vmem:[#allocation0] sm:$0x7] %vm476, %v475
    %s478 = scalar_lea.vmem [#allocation0], 5
    %479 = vst.msk [vmem:[%s478] sm:$0x38] %vm476, %v475
    %s480 = scalar_lea.vmem [#allocation0], 10
    %481 = vst.msk [vmem:[%s480] sm:$0xc0] %vm476, %v475
    %s482 = scalar_lea.vmem %s0, 130
    %v483 = vld [vmem:[%s482] sm:$0x1]
    %484 = vrot.lane.b32.xlu0 %v483, 16
    %v485 = vpop.permute.xlu0 %484
    %vm486 = vcmask 195712
    %s487 = scalar_lea.vmem [#allocation0], 18
    %488 = vst.msk [vmem:[%s487] sm:$0x1] %vm486, %v485
    %s489 = scalar_lea.vmem %s0, 1
    %s490 = smov 3
    %v491 = vld [vmem:[%s489] ss:$16 sm:%s490]
    %s492 = scalar_lea.vmem %s0, 1
    %s493 = smov 12
    %v494 = vld [vmem:[%s492] ss:$16 sm:%s493]
    %vm495 = vcmask 1043458
    %v496 = vsel %vm495, %v494, %v491
    %s497 = scalar_lea.vmem %s0, 1
    %s498 = smov 48
    %v499 = vld [vmem:[%s497] ss:$16 sm:%s498]
    %vm500 = vcmask 1045508
    %v501 = vsel %vm500, %v499, %v496
    %s502 = scalar_lea.vmem %s0, 1
    %s503 = smov 192
    %v504 = vld [vmem:[%s502] ss:$16 sm:%s503]
    %vm505 = vcmask 1047558
    %v506 = vsel %vm505, %v504, %v501
    %507 = vrot.lane.b32.xlu0 %v506, 8
    %v508 = vpop.permute.xlu0 %507
    %vm509 = vcmask 130112
    %510 = vst.msk [vmem:[#allocation0] sm:$0x7] %vm509, %v508
    %s511 = scalar_lea.vmem [#allocation0], 5
    %512 = vst.msk [vmem:[%s511] sm:$0x38] %vm509, %v508
    %s513 = scalar_lea.vmem [#allocation0], 10
    %514 = vst.msk [vmem:[%s513] sm:$0xc0] %vm509, %v508
    %s515 = scalar_lea.vmem %s0, 129
    %v516 = vld [vmem:[%s515] sm:$0x1]
    %517 = vrot.lane.b32.xlu0 %v516, 8
    %v518 = vpop.permute.xlu0 %517
    %vm519 = vcmask 130112
    %s520 = scalar_lea.vmem [#allocation0], 18
    %521 = vst.msk [vmem:[%s520] sm:$0x1] %vm519, %v518
    %s523 = sshllo.u32 0, 4
    %v525 = vld [vmem:[#allocation0] sm:%s523]
    %s526 = sshllo.u32 0, 4
    %527 = vst [vmem:[%s1] sm:%s526] %v525
    %s528 = scalar_lea.vmem [#allocation0], 8
    %v529 = vld [vmem:[%s528] sm:%s523]
    %s530 = sshllo.u32 0, 4
    %s531 = scalar_lea.vmem %s1, 4
    %532 = vst [vmem:[%s531] sm:%s530] %v529
    %s533 = scalar_lea.vmem [#allocation0], 16
    %v534 = vld [vmem:[%s533] sm:%s523]
    %s535 = sshllo.u32 0, 4
    %s536 = smul.addr 4, 2
    %s537 = scalar_lea.vmem %s1, %s536
    %538 = vst [vmem:[%s537] sm:%s535] %v534

// kernel: conv_en_bn_2d.3
$region0: #{conv_en_bn_2d.3}
  #allocation0 [shape = 'u32[]', space=smem, size = 0x4, offset = 0x4, fixed_abs, tag = 'smem constant byte address 0x4 - core index']
  #allocation1 [shape = 'u32[144,128]{1,0:T(1,128)}', space=vmem, size = 0x12000, scoped, tag = 'internal scratch']
  %s0 = inlined_call_operand.vmem [shape: f32[2,18,144], index: 0, kind: input, shape index: {}]
  %s1 = inlined_call_operand.vmem [shape: f32[3,3,128], index: 1, kind: input, shape index: {}]
  %s2 = inlined_call_operand.vmem [shape: f32[1,128], index: 2, kind: input, shape index: {}]
  %s3 = inlined_call_operand.vmem [shape: f32[2,16,128], index: 3, kind: output, shape index: {}]
  %s4 = sld [smem:[#allocation0]]
  $region45: #{conv_en_bn_2d.3} parent=0
    _
  %s6 = ssub.s32 1, %s4
  %s7 = scalar_select 0, %s6, %s4
  loop: start=0, step=1, limit=4
  $region2: #{conv_en_bn_2d.3} parent=0 // loop_pre_header
    _
  $region3: #{conv_en_bn_2d.3} parent=0 // loop_header
    %s9 = sphi 0, %s13
    %p10 = scmp.ge.s32.totalorder %s9, 4
    %s19 = sphi 0, %s21
    %s22 = sphi 0, %s19
    %s23 = sphi 0, %s22
    %s39 = sphi 0, %s23
    %s43 = sphi 0, %s43
    %s45 = sphi 0, %s43
    %s46 = sphi 0, %s45
    %s60 = sphi 0, %s46
    %s64 = sphi 0, %s64
    %s66 = sphi 0, %s64
    %s67 = sphi 0, %s66
    %s81 = sphi 0, %s67
    %s87 = sphi 0, %s89
    %s90 = sphi 0, %s87
    %s91 = sphi 0, %s90
    %s107 = sphi 0, %s91
  $region4: #{conv_en_bn_2d.3} parent=0 // loop_header_branch
    %12 = sbr.rel (%p10) target = $region8
  $region5: #{conv_en_bn_2d.3} parent=0 // loop_body
    %s14 = ssub.s32 %s9, 1
    %s15 = ssub.s32 %s9, 2
    %s16 = sadd.s32 %s9, 1
    %s17 = ssub.s32 %s9, %s16
    %p18 = scmp.eq.s32.totalorder %s17, 0
    %s20 = sadd.s32 %s19, 1
    %s21 = scalar_select %p18, %s19, %s20
    %p24 = pneg %p18
    %p25 = scmp.eq.s32.totalorder %s9, 1
    %p26 = por %p24, %p25
    %p27 = scmp.ne.s32.totalorder %s19, %s22
    %p28 = scmp.eq.s32.totalorder %s9, 0
    %p29 = por %p27, %p28
    %p30 = scmp.ne.s32.totalorder %s19, %s22
    %p31 = scmp.eq.s32.totalorder %s14, 1
    %p32 = por %p30, %p31
    %p33 = scmp.ne.s32.totalorder %s22, %s23
    %p34 = scmp.eq.s32.totalorder %s14, 0
    %p35 = por %p33, %p34
    %p36 = scmp.ne.s32.totalorder %s22, %s23
    %p37 = scmp.eq.s32.totalorder %s15, 1
    %p38 = por %p36, %p37
    %p40 = scmp.ne.s32.totalorder %s23, %s39
    %p41 = scmp.eq.s32.totalorder %s15, 0
    %p42 = por %p40, %p41
    %s44 = sadd.s32 %s43, 1
    %p47 = scmp.eq.s32.totalorder %s9, 1
    %p48 = scmp.ne.s32.totalorder %s43, %s45
    %p49 = scmp.eq.s32.totalorder %s9, 0
    %p50 = por %p48, %p49
    %p51 = scmp.ne.s32.totalorder %s43, %s45
    %p52 = scmp.eq.s32.totalorder %s14, 1
    %p53 = por %p51, %p52
    %p54 = scmp.ne.s32.totalorder %s45, %s46
    %p55 = scmp.eq.s32.totalorder %s14, 0
    %p56 = por %p54, %p55
    %p57 = scmp.ne.s32.totalorder %s45, %s46
    %p58 = scmp.eq.s32.totalorder %s15, 1
    %p59 = por %p57, %p58
    %p61 = scmp.ne.s32.totalorder %s46, %s60
    %p62 = scmp.eq.s32.totalorder %s15, 0
    %p63 = por %p61, %p62
    %s65 = sadd.s32 %s64, 1
    %p68 = scmp.eq.s32.totalorder %s9, 1
    %p69 = scmp.ne.s32.totalorder %s64, %s66
    %p70 = scmp.eq.s32.totalorder %s9, 0
    %p71 = por %p69, %p70
    %p72 = scmp.ne.s32.totalorder %s64, %s66
    %p73 = scmp.eq.s32.totalorder %s14, 1
    %p74 = por %p72, %p73
    %p75 = scmp.ne.s32.totalorder %s66, %s67
    %p76 = scmp.eq.s32.totalorder %s14, 0
    %p77 = por %p75, %p76
    %p78 = scmp.ne.s32.totalorder %s66, %s67
    %p79 = scmp.eq.s32.totalorder %s15, 1
    %p80 = por %p78, %p79
    %p82 = scmp.ne.s32.totalorder %s67, %s81
    %p83 = scmp.eq.s32.totalorder %s15, 0
    %p84 = por %p82, %p83
    %s85 = ssub.s32 %s9, %s16
    %p86 = scmp.eq.s32.totalorder %s85, 0
    %s88 = sadd.s32 %s87, 1
    %s89 = scalar_select %p86, %s87, %s88
    %p92 = pneg %p86
    %p93 = scmp.eq.s32.totalorder %s9, 1
    %p94 = por %p92, %p93
    %p95 = scmp.ne.s32.totalorder %s87, %s90
    %p96 = scmp.eq.s32.totalorder %s9, 0
    %p97 = por %p95, %p96
    %p98 = scmp.ne.s32.totalorder %s87, %s90
    %p99 = scmp.eq.s32.totalorder %s14, 1
    %p100 = por %p98, %p99
    %p101 = scmp.ne.s32.totalorder %s90, %s91
    %p102 = scmp.eq.s32.totalorder %s14, 0
    %p103 = por %p101, %p102
    %p104 = scmp.ne.s32.totalorder %s90, %s91
    %p105 = scmp.eq.s32.totalorder %s15, 1
    %p106 = por %p104, %p105
    %p108 = scmp.ne.s32.totalorder %s91, %s107
    %p109 = scmp.eq.s32.totalorder %s15, 0
    %p110 = por %p108, %p109
    %p111 = scmp.le.s32.totalorder 1, %s9
    %p112 = scmp.lt.s32.totalorder %s9, 3
    %p113 = pnand %p111, %p112
    %p114 = pneg %p113
    // Predicated region
    $region9: #{conv_en_bn_2d.3} parent=5 // pred_check
      _
    $region10: #{conv_en_bn_2d.3} parent=5 // pred_check_branch
      %116 = sbr.rel (%p113) target = $region12
    $region11: #{conv_en_bn_2d.3} parent=5 // pred_region
      %s117 = ssub.s32 %s9, 1
      // Predicated region
      $region13: #{conv_en_bn_2d.3} parent=11 // pred_check
        %p118 = pneg %p56
      $region14: #{conv_en_bn_2d.3} parent=11 // pred_check_branch
        %120 = sbr.rel (%p118) target = $region16
      $region15: #{conv_en_bn_2d.3} parent=11 // pred_region
        _
      $region16: #{conv_en_bn_2d.3} parent=11 // pred_fallthru
        _
      // Predicated region
      $region17: #{conv_en_bn_2d.3} parent=11 // pred_check
        %p121 = pneg %p77
      $region18: #{conv_en_bn_2d.3} parent=11 // pred_check_branch
        %123 = sbr.rel (%p121) target = $region20
      $region19: #{conv_en_bn_2d.3} parent=11 // pred_region
        _
      $region20: #{conv_en_bn_2d.3} parent=11 // pred_fallthru
        _
    $region12: #{conv_en_bn_2d.3} parent=5 // pred_fallthru
      _
    %p124 = scmp.lt.s32.totalorder %s9, 2
    // Predicated region
    $region21: #{conv_en_bn_2d.3} parent=5 // pred_check
      %p125 = pneg %p124
    $region22: #{conv_en_bn_2d.3} parent=5 // pred_check_branch
      %127 = sbr.rel (%p125) target = $region24
    $region23: #{conv_en_bn_2d.3} parent=5 // pred_region
      // Predicated region
      $region25: #{conv_en_bn_2d.3} parent=23 // pred_check
        %p128 = pneg %p29
      $region26: #{conv_en_bn_2d.3} parent=23 // pred_check_branch
        %130 = sbr.rel (%p128) target = $region28
      $region27: #{conv_en_bn_2d.3} parent=23 // pred_region
        %p131 = scmp.lt.s32.totalorder %s9, 1
        %s132 = scalar_select %p131, %s9, 1
        %s133 = smul.addr %s132, 6
        %s134 = smul.addr %s133, 8
        %s135 = scalar_lea.vmem %s0, %s134
      $region28: #{conv_en_bn_2d.3} parent=23 // pred_fallthru
        _
    $region24: #{conv_en_bn_2d.3} parent=5 // pred_fallthru
      _
    %p136 = scmp.le.s32.totalorder 1, %s9
    %p137 = scmp.lt.s32.totalorder %s9, 3
    %p138 = pnand %p136, %p137
    %p139 = pneg %p138
    // Predicated region
    $region29: #{conv_en_bn_2d.3} parent=5 // pred_check
      _
    $region30: #{conv_en_bn_2d.3} parent=5 // pred_check_branch
      %141 = sbr.rel (%p138) target = $region32
    $region31: #{conv_en_bn_2d.3} parent=5 // pred_region
      %s142 = ssub.s32 %s9, 1
      %p143 = scmp.lt.s32.totalorder %s14, 1
      %s144 = scalar_select %p143, %s14, 1
      %s145 = smul.addr %s144, 6
      %s146 = smul.addr %s145, 8
      %s147 = scalar_lea.vmem %s0, %s146
      %p148 = pneg %p35
      %p149 = pneg %p32
      %p150 = pneg %p56
      %p151 = pneg %p53
      %p152 = pneg %p77
      %p153 = pneg %p74
      %p154 = pneg %p103
      %p155 = pneg %p100
      %p156 = scmp.lt.s32.totalorder %s14, 1
      %s157 = scalar_select %p156, %s14, 1
      %s158 = smul.addr %s157, 2
      %s159 = smul.addr %s158, 8
      %s160 = scalar_lea.vmem %s3, %s159
      %p161 = scmp.lt.s32.totalorder %s14, 1
      %s162 = scalar_select %p161, %s14, 1
      %s163 = smul.addr %s162, 6
      %s164 = smul.addr %s163, 8
      %s165 = scalar_lea.vmem %s0, %s164
      %p166 = scmp.lt.s32.totalorder %s14, 1
      %s167 = scalar_select %p166, %s14, 1
      %s168 = smul.addr %s167, 2
      %s169 = smul.addr %s168, 8
      %s170 = scalar_lea.vmem %s3, %s169
      %v171 = vld [vmem:[%s1] sm:$0x7]
      %v172 = vld [vmem:[%s1 + $0x4] sm:$0x7]
      %v173 = vld [vmem:[%s1 + $0x8] sm:$0x7]
      %v174 = vld [vmem:[%s2] sm:$0x1]
      %v176 = vlaneseq
      %v177 = vshrl.u32 %v176, 7
      %v178 = vsub.s32 0, %v177
      %v179 = vrot.slane %v174, %v178
      %v181 = vld [vmem:[%s165] sm:$0xff]
      %v182 = vld [vmem:[%s165 + $0x8] sm:$0xff]
      %v183 = vld [vmem:[%s165 + $0x10] sm:$0xff]
      %v184 = vld [vmem:[%s165 + $0x18] sm:$0xff]
      %v185 = vlaneseq
      %v186 = vshrl.u32 %v185, 7
      %v187 = vsub.s32 0, %v186
      %v188 = vrot.slane %v171, %v187
      %v189 = vmul.f32 %v181, %v188
      %v190 = vmul.f32 %v183, %v188
      %v191 = vadd.f32 %v179, %v189
      %v192 = vadd.f32 %v179, %v190
      %v193 = vlaneseq
      %v194 = vshrl.u32 %v193, 7
      %v195 = vsub.s32 1, %v194
      %v196 = vrot.slane %v171, %v195
      %198 = vrot.lane.b32.xlu0 %v196, 8
      %v199 = vpop.permute.xlu0 %198
      %v201 = vmul.f32 %v181, %v199
      %v202 = vmul.f32 %v182, %v199
      %v203 = vmul.f32 %v183, %v199
      %v204 = vmul.f32 %v184, %v199
      %209 = vrot.lane.b32.xlu0 %v201, 120
      %v210 = vpop.permute.xlu0 %209
      %211 = vrot.lane.b32.xlu0 %v202, 120
      %v212 = vpop.permute.xlu0 %211
      %213 = vrot.lane.b32.xlu0 %v203, 120
      %v214 = vpop.permute.xlu0 %213
      %215 = vrot.lane.b32.xlu0 %v204, 120
      %v216 = vpop.permute.xlu0 %215
      %vm217 = vcmask 982016
      %v218 = vsel %vm217, %v210, %v212
      %v219 = vsel %vm217, %v214, %v216
      %v222 = vadd.f32 %v191, %v218
      %v223 = vadd.f32 %v192, %v219
      %v224 = vlaneseq
      %v225 = vshrl.u32 %v224, 7
      %v226 = vsub.s32 2, %v225
      %v227 = vrot.slane %v171, %v226
      %229 = vrot.lane.b32.xlu0 %v227, 16
      %v230 = vpop.permute.xlu0 %229
      %v232 = vmul.f32 %v181, %v230
      %v233 = vmul.f32 %v182, %v230
      %v234 = vmul.f32 %v183, %v230
      %v235 = vmul.f32 %v184, %v230
      %240 = vrot.lane.b32.xlu0 %v232, 112
      %v241 = vpop.permute.xlu0 %240
      %242 = vrot.lane.b32.xlu0 %v233, 112
      %v243 = vpop.permute.xlu0 %242
      %244 = vrot.lane.b32.xlu0 %v234, 112
      %v245 = vpop.permute.xlu0 %244
      %246 = vrot.lane.b32.xlu0 %v235, 112
      %v247 = vpop.permute.xlu0 %246
      %vm248 = vcmask 916480
      %v249 = vsel %vm248, %v241, %v243
      %v250 = vsel %vm248, %v245, %v247
      %v253 = vadd.f32 %v222, %v249
      %v254 = vadd.f32 %v223, %v250
      %v255 = vld [vmem:[%s165] sm:$0xfe]
      %v256 = vld [vmem:[%s165 + $0x8] sm:$0xfe]
      %v257 = vld [vmem:[%s165 + $0x20] sm:$0x1]
      %v258 = vld [vmem:[%s165 + $0x28] sm:$0x1]
      %v259 = vlaneseq
      %v260 = vshrl.u32 %v259, 7
      %v261 = vsub.s32 0, %v260
      %v262 = vrot.slane %v172, %v261
      %v263 = vmul.f32 %v255, %v262
      %v264 = vmul.f32 %v183, %v262
      %v265 = vmul.f32 %v257, %v262
      %vm269 = vcmask 1046528
      %v270 = vrot.slane %v263, 1
      %v271 = vrot.slane %v264, 1
      %v272 = vsel %vm269, %v270, %v271
      %v273 = vrot.slane %v265, 1
      %v274 = vsel %vm269, %v271, %v273
      %v277 = vadd.f32 %v253, %v272
      %v278 = vadd.f32 %v254, %v274
      %v279 = vlaneseq
      %v280 = vshrl.u32 %v279, 7
      %v281 = vsub.s32 1, %v280
      %v282 = vrot.slane %v172, %v281
      %284 = vrot.lane.b32.xlu0 %v282, 8
      %v285 = vpop.permute.xlu0 %284
      %v287 = vmul.f32 %v255, %v285
      %v288 = vmul.f32 %v256, %v285
      %v289 = vmul.f32 %v183, %v285
      %v290 = vmul.f32 %v184, %v285
      %v291 = vmul.f32 %v257, %v285
      %v292 = vmul.f32 %v258, %v285
      %v299 = vrot.slane %v287, 1
      %v300 = vrot.slane %v289, 1
      %v301 = vsel %vm269, %v299, %v300
      %v302 = vrot.slane %v288, 1
      %v303 = vrot.slane %v290, 1
      %v304 = vsel %vm269, %v302, %v303
      %v305 = vrot.slane %v291, 1
      %v306 = vsel %vm269, %v300, %v305
      %v307 = vrot.slane %v292, 1
      %v308 = vsel %vm269, %v303, %v307
      %309 = vrot.lane.b32.xlu0 %v301, 120
      %v310 = vpop.permute.xlu0 %309
      %311 = vrot.lane.b32.xlu0 %v304, 120
      %v312 = vpop.permute.xlu0 %311
      %313 = vrot.lane.b32.xlu0 %v306, 120
      %v314 = vpop.permute.xlu0 %313
      %315 = vrot.lane.b32.xlu0 %v308, 120
      %v316 = vpop.permute.xlu0 %315
      %v317 = vsel %vm217, %v310, %v312
      %v318 = vsel %vm217, %v314, %v316
      %v321 = vadd.f32 %v277, %v317
      %v322 = vadd.f32 %v278, %v318
      %v323 = vlaneseq
      %v324 = vshrl.u32 %v323, 7
      %v325 = vsub.s32 2, %v324
      %v326 = vrot.slane %v172, %v325
      %328 = vrot.lane.b32.xlu0 %v326, 16
      %v329 = vpop.permute.xlu0 %328
      %v331 = vmul.f32 %v255, %v329
      %v332 = vmul.f32 %v256, %v329
      %v333 = vmul.f32 %v183, %v329
      %v334 = vmul.f32 %v184, %v329
      %v335 = vmul.f32 %v257, %v329
      %v336 = vmul.f32 %v258, %v329
      %v343 = vrot.slane %v331, 1
      %v344 = vrot.slane %v333, 1
      %v345 = vsel %vm269, %v343, %v344
      %v346 = vrot.slane %v332, 1
      %v347 = vrot.slane %v334, 1
      %v348 = vsel %vm269, %v346, %v347
      %v349 = vrot.slane %v335, 1
      %v350 = vsel %vm269, %v344, %v349
      %v351 = vrot.slane %v336, 1
      %v352 = vsel %vm269, %v347, %v351
      %353 = vrot.lane.b32.xlu0 %v345, 112
      %v354 = vpop.permute.xlu0 %353
      %355 = vrot.lane.b32.xlu0 %v348, 112
      %v356 = vpop.permute.xlu0 %355
      %357 = vrot.lane.b32.xlu0 %v350, 112
      %v358 = vpop.permute.xlu0 %357
      %359 = vrot.lane.b32.xlu0 %v352, 112
      %v360 = vpop.permute.xlu0 %359
      %v361 = vsel %vm248, %v354, %v356
      %v362 = vsel %vm248, %v358, %v360
      %v365 = vadd.f32 %v321, %v361
      %v366 = vadd.f32 %v322, %v362
      %v367 = vld [vmem:[%s165] sm:$0xfc]
      %v368 = vld [vmem:[%s165 + $0x8] sm:$0xfc]
      %v369 = vld [vmem:[%s165 + $0x20] sm:$0x3]
      %v370 = vld [vmem:[%s165 + $0x28] sm:$0x3]
      %v371 = vlaneseq
      %v372 = vshrl.u32 %v371, 7
      %v373 = vsub.s32 0, %v372
      %v374 = vrot.slane %v173, %v373
      %v375 = vmul.f32 %v367, %v374
      %v376 = vmul.f32 %v183, %v374
      %v377 = vmul.f32 %v369, %v374
      %vm381 = vcmask 1045504
      %v382 = vrot.slane %v375, 2
      %v383 = vrot.slane %v376, 2
      %v384 = vsel %vm381, %v382, %v383
      %v385 = vrot.slane %v377, 2
      %v386 = vsel %vm381, %v383, %v385
      %v389 = vadd.f32 %v365, %v384
      %v390 = vadd.f32 %v366, %v386
      %v391 = vlaneseq
      %v392 = vshrl.u32 %v391, 7
      %v393 = vsub.s32 1, %v392
      %v394 = vrot.slane %v173, %v393
      %396 = vrot.lane.b32.xlu0 %v394, 8
      %v397 = vpop.permute.xlu0 %396
      %v399 = vmul.f32 %v367, %v397
      %v400 = vmul.f32 %v368, %v397
      %v401 = vmul.f32 %v183, %v397
      %v402 = vmul.f32 %v184, %v397
      %v403 = vmul.f32 %v369, %v397
      %v404 = vmul.f32 %v370, %v397
      %v411 = vrot.slane %v399, 2
      %v412 = vrot.slane %v401, 2
      %v413 = vsel %vm381, %v411, %v412
      %v414 = vrot.slane %v400, 2
      %v415 = vrot.slane %v402, 2
      %v416 = vsel %vm381, %v414, %v415
      %v417 = vrot.slane %v403, 2
      %v418 = vsel %vm381, %v412, %v417
      %v419 = vrot.slane %v404, 2
      %v420 = vsel %vm381, %v415, %v419
      %421 = vrot.lane.b32.xlu0 %v413, 120
      %v422 = vpop.permute.xlu0 %421
      %423 = vrot.lane.b32.xlu0 %v416, 120
      %v424 = vpop.permute.xlu0 %423
      %425 = vrot.lane.b32.xlu0 %v418, 120
      %v426 = vpop.permute.xlu0 %425
      %427 = vrot.lane.b32.xlu0 %v420, 120
      %v428 = vpop.permute.xlu0 %427
      %v429 = vsel %vm217, %v422, %v424
      %v430 = vsel %vm217, %v426, %v428
      %v433 = vadd.f32 %v389, %v429
      %v434 = vadd.f32 %v390, %v430
      %v435 = vlaneseq
      %v436 = vshrl.u32 %v435, 7
      %v437 = vsub.s32 2, %v436
      %v438 = vrot.slane %v173, %v437
      %440 = vrot.lane.b32.xlu0 %v438, 16
      %v441 = vpop.permute.xlu0 %440
      %v443 = vmul.f32 %v367, %v441
      %v444 = vmul.f32 %v368, %v441
      %v445 = vmul.f32 %v183, %v441
      %v446 = vmul.f32 %v184, %v441
      %v447 = vmul.f32 %v369, %v441
      %v448 = vmul.f32 %v370, %v441
      %v455 = vrot.slane %v443, 2
      %v456 = vrot.slane %v445, 2
      %v457 = vsel %vm381, %v455, %v456
      %v458 = vrot.slane %v444, 2
      %v459 = vrot.slane %v446, 2
      %v460 = vsel %vm381, %v458, %v459
      %v461 = vrot.slane %v447, 2
      %v462 = vsel %vm381, %v456, %v461
      %v463 = vrot.slane %v448, 2
      %v464 = vsel %vm381, %v459, %v463
      %465 = vrot.lane.b32.xlu0 %v457, 112
      %v466 = vpop.permute.xlu0 %465
      %467 = vrot.lane.b32.xlu0 %v460, 112
      %v468 = vpop.permute.xlu0 %467
      %469 = vrot.lane.b32.xlu0 %v462, 112
      %v470 = vpop.permute.xlu0 %469
      %471 = vrot.lane.b32.xlu0 %v464, 112
      %v472 = vpop.permute.xlu0 %471
      %v473 = vsel %vm248, %v466, %v468
      %v474 = vsel %vm248, %v470, %v472
      %v477 = vadd.f32 %v433, %v473
      %v478 = vadd.f32 %v434, %v474
      %479 = vst [vmem:[%s170] sm:$0xff] %v477
      %480 = vst [vmem:[%s170 + $0x8] sm:$0xff] %v478
      %p481 = scmp.lt.s32.totalorder %s14, 1
      %s482 = scalar_select %p481, %s14, 1
      %s483 = smul.addr %s482, 2
      %s484 = smul.addr %s483, 8
      %s485 = scalar_lea.vmem %s3, %s484
      // Predicated region
      $region33: #{conv_en_bn_2d.3} parent=31 // pred_check
        %p486 = pneg %p100
      $region34: #{conv_en_bn_2d.3} parent=31 // pred_check_branch
        %488 = sbr.rel (%p486) target = $region36
      $region35: #{conv_en_bn_2d.3} parent=31 // pred_region
        _
      $region36: #{conv_en_bn_2d.3} parent=31 // pred_fallthru
        _
    $region32: #{conv_en_bn_2d.3} parent=5 // pred_fallthru
      _
    %p489 = scmp.le.s32.totalorder 2, %s9
    // Predicated region
    $region37: #{conv_en_bn_2d.3} parent=5 // pred_check
      %p490 = pneg %p489
    $region38: #{conv_en_bn_2d.3} parent=5 // pred_check_branch
      %492 = sbr.rel (%p490) target = $region40
    $region39: #{conv_en_bn_2d.3} parent=5 // pred_region
      %s493 = ssub.s32 %s9, 2
      // Predicated region
      $region41: #{conv_en_bn_2d.3} parent=39 // pred_check
        %p494 = pneg %p106
      $region42: #{conv_en_bn_2d.3} parent=39 // pred_check_branch
        %496 = sbr.rel (%p494) target = $region44
      $region43: #{conv_en_bn_2d.3} parent=39 // pred_region
        %p497 = scmp.lt.s32.totalorder %s15, 1
        %s498 = scalar_select %p497, %s15, 1
        %s499 = smul.addr %s498, 2
        %s500 = smul.addr %s499, 8
        %s501 = scalar_lea.vmem %s3, %s500
      $region44: #{conv_en_bn_2d.3} parent=39 // pred_fallthru
        _
    $region40: #{conv_en_bn_2d.3} parent=5 // pred_fallthru
      _
  $region6: #{conv_en_bn_2d.3} parent=0 // loop_footer
    %s13 = sadd.s32 1, %s9
  $region7: #{conv_en_bn_2d.3} parent=0 // loop_footer_branch
    %8 = sbr.rel target = $region3
  $region8: #{conv_en_bn_2d.3} parent=0 // loop_exit
    _

// kernel: conv_en_bn_2d.2
$region0: #{conv_en_bn_2d.2}
  #allocation0 [shape = 'u32[]', space=smem, size = 0x4, offset = 0x4, fixed_abs, tag = 'smem constant byte address 0x4 - core index']
  #allocation1 [shape = 'u32[144,128]{1,0:T(1,128)}', space=vmem, size = 0x12000, scoped, tag = 'internal scratch']
  %s0 = inlined_call_operand.vmem [shape: bf16[2,18,18,4], index: 0, kind: input, shape index: {}]
  %s1 = inlined_call_operand.vmem [shape: bf16[3,3,4,8], index: 1, kind: input, shape index: {}]
  %s2 = inlined_call_operand.vmem [shape: f32[2,16,16,8], index: 2, kind: output, shape index: {0}]
  %s3 = inlined_call_operand.vmem [shape: f32[2,1,8,8], index: 3, kind: output, shape index: {1}]
  %s4 = inlined_call_operand.vmem [shape: f32[2,1,8,8], index: 4, kind: output, shape index: {2}]
  %5 = xla_tuple %s2, %s3, %s4
  %s6 = sld [smem:[#allocation0]]
  $region57: #{conv_en_bn_2d.2} parent=0
    _
  %s8 = ssub.s32 1, %s6
  %s9 = scalar_select 0, %s8, %s6
  loop: start=0, step=1, limit=4
  $region2: #{conv_en_bn_2d.2} parent=0 // loop_pre_header
    _
  $region3: #{conv_en_bn_2d.2} parent=0 // loop_header
    %s11 = sphi 0, %s15
    %p12 = scmp.ge.s32.totalorder %s11, 4
    %s18 = sphi 0, %s37
    %s19 = sphi 0, %s33
    %s20 = sphi 0, %s29
    %s21 = sphi 0, %s18
    %s22 = sphi 0, %s19
    %s23 = sphi 0, %s20
    %s24 = sphi 0, %s21
    %s25 = sphi 0, %s22
    %s26 = sphi 0, %s23
    %s40 = sphi 0, %s42
    %s43 = sphi 0, %s40
    %s44 = sphi 0, %s43
    %s60 = sphi 0, %s44
    %s66 = sphi 0, %s68
    %s69 = sphi 0, %s66
    %s70 = sphi 0, %s69
    %s86 = sphi 0, %s70
    %s96 = sphi 0, %s98
    %s99 = sphi 0, %s96
    %s100 = sphi 0, %s99
    %s116 = sphi 0, %s100
    %s126 = sphi 0, %s128
    %s129 = sphi 0, %s126
    %s130 = sphi 0, %s129
    %s146 = sphi 0, %s130
    %s156 = sphi 0, %s158
    %s159 = sphi 0, %s156
    %s160 = sphi 0, %s159
    %s176 = sphi 0, %s160
  $region4: #{conv_en_bn_2d.2} parent=0 // loop_header_branch
    %14 = sbr.rel (%p12) target = $region8
  $region5: #{conv_en_bn_2d.2} parent=0 // loop_body
    %s16 = ssub.s32 %s11, 1
    %s17 = ssub.s32 %s11, 2
    %s27 = sadd.s32 1, %s20
    %p28 = scmp.ge.s32.totalorder %s27, 1
    %s29 = scalar_select %p28, 0, %s27
    %s30 = sadd.s32 1, %s19
    %s31 = scalar_select %p28, %s30, %s19
    %p32 = scmp.ge.s32.totalorder %s31, 1
    %s33 = scalar_select %p32, 0, %s31
    %s34 = sadd.s32 1, %s18
    %s35 = scalar_select %p32, %s34, %s18
    %p36 = scmp.ge.s32.totalorder %s35, 2
    %s37 = scalar_select %p36, 0, %s35
    %s38 = ssub.s32 %s18, %s37
    %p39 = scmp.eq.s32.totalorder %s38, 0
    %s41 = sadd.s32 %s40, 1
    %s42 = scalar_select %p39, %s40, %s41
    %p45 = pneg %p39
    %p46 = scmp.eq.s32.totalorder %s11, 1
    %p47 = por %p45, %p46
    %p48 = scmp.ne.s32.totalorder %s40, %s43
    %p49 = scmp.eq.s32.totalorder %s11, 0
    %p50 = por %p48, %p49
    %p51 = scmp.ne.s32.totalorder %s40, %s43
    %p52 = scmp.eq.s32.totalorder %s16, 1
    %p53 = por %p51, %p52
    %p54 = scmp.ne.s32.totalorder %s43, %s44
    %p55 = scmp.eq.s32.totalorder %s16, 0
    %p56 = por %p54, %p55
    %p57 = scmp.ne.s32.totalorder %s43, %s44
    %p58 = scmp.eq.s32.totalorder %s17, 1
    %p59 = por %p57, %p58
    %p61 = scmp.ne.s32.totalorder %s44, %s60
    %p62 = scmp.eq.s32.totalorder %s17, 0
    %p63 = por %p61, %p62
    %s64 = ssub.s32 %s20, %s29
    %p65 = scmp.eq.s32.totalorder %s64, 0
    %s67 = sadd.s32 %s66, 1
    %s68 = scalar_select %p65, %s66, %s67
    %p71 = pneg %p65
    %p72 = scmp.eq.s32.totalorder %s11, 1
    %p73 = por %p71, %p72
    %p74 = scmp.ne.s32.totalorder %s66, %s69
    %p75 = scmp.eq.s32.totalorder %s11, 0
    %p76 = por %p74, %p75
    %p77 = scmp.ne.s32.totalorder %s66, %s69
    %p78 = scmp.eq.s32.totalorder %s16, 1
    %p79 = por %p77, %p78
    %p80 = scmp.ne.s32.totalorder %s69, %s70
    %p81 = scmp.eq.s32.totalorder %s16, 0
    %p82 = por %p80, %p81
    %p83 = scmp.ne.s32.totalorder %s69, %s70
    %p84 = scmp.eq.s32.totalorder %s17, 1
    %p85 = por %p83, %p84
    %p87 = scmp.ne.s32.totalorder %s70, %s86
    %p88 = scmp.eq.s32.totalorder %s17, 0
    %p89 = por %p87, %p88
    %s90 = ssub.s32 %s18, %s37
    %s91 = ssub.s32 %s19, %s33
    %s92 = sor.u32 %s90, %s91
    %s93 = ssub.s32 %s20, %s29
    %s94 = sor.u32 %s92, %s93
    %p95 = scmp.eq.s32.totalorder %s94, 0
    %s97 = sadd.s32 %s96, 1
    %s98 = scalar_select %p95, %s96, %s97
    %p101 = pneg %p95
    %p102 = scmp.eq.s32.totalorder %s11, 1
    %p103 = por %p101, %p102
    %p104 = scmp.ne.s32.totalorder %s96, %s99
    %p105 = scmp.eq.s32.totalorder %s11, 0
    %p106 = por %p104, %p105
    %p107 = scmp.ne.s32.totalorder %s96, %s99
    %p108 = scmp.eq.s32.totalorder %s16, 1
    %p109 = por %p107, %p108
    %p110 = scmp.ne.s32.totalorder %s99, %s100
    %p111 = scmp.eq.s32.totalorder %s16, 0
    %p112 = por %p110, %p111
    %p113 = scmp.ne.s32.totalorder %s99, %s100
    %p114 = scmp.eq.s32.totalorder %s17, 1
    %p115 = por %p113, %p114
    %p117 = scmp.ne.s32.totalorder %s100, %s116
    %p118 = scmp.eq.s32.totalorder %s17, 0
    %p119 = por %p117, %p118
    %s120 = ssub.s32 %s18, %s37
    %s121 = ssub.s32 %s19, %s33
    %s122 = sor.u32 %s120, %s121
    %s123 = ssub.s32 %s20, %s29
    %s124 = sor.u32 %s122, %s123
    %p125 = scmp.eq.s32.totalorder %s124, 0
    %s127 = sadd.s32 %s126, 1
    %s128 = scalar_select %p125, %s126, %s127
    %p131 = pneg %p125
    %p132 = scmp.eq.s32.totalorder %s11, 1
    %p133 = por %p131, %p132
    %p134 = scmp.ne.s32.totalorder %s126, %s129
    %p135 = scmp.eq.s32.totalorder %s11, 0
    %p136 = por %p134, %p135
    %p137 = scmp.ne.s32.totalorder %s126, %s129
    %p138 = scmp.eq.s32.totalorder %s16, 1
    %p139 = por %p137, %p138
    %p140 = scmp.ne.s32.totalorder %s129, %s130
    %p141 = scmp.eq.s32.totalorder %s16, 0
    %p142 = por %p140, %p141
    %p143 = scmp.ne.s32.totalorder %s129, %s130
    %p144 = scmp.eq.s32.totalorder %s17, 1
    %p145 = por %p143, %p144
    %p147 = scmp.ne.s32.totalorder %s130, %s146
    %p148 = scmp.eq.s32.totalorder %s17, 0
    %p149 = por %p147, %p148
    %s150 = ssub.s32 %s18, %s37
    %s151 = ssub.s32 %s19, %s33
    %s152 = sor.u32 %s150, %s151
    %s153 = ssub.s32 %s20, %s29
    %s154 = sor.u32 %s152, %s153
    %p155 = scmp.eq.s32.totalorder %s154, 0
    %s157 = sadd.s32 %s156, 1
    %s158 = scalar_select %p155, %s156, %s157
    %p161 = pneg %p155
    %p162 = scmp.eq.s32.totalorder %s11, 1
    %p163 = por %p161, %p162
    %p164 = scmp.ne.s32.totalorder %s156, %s159
    %p165 = scmp.eq.s32.totalorder %s11, 0
    %p166 = por %p164, %p165
    %p167 = scmp.ne.s32.totalorder %s156, %s159
    %p168 = scmp.eq.s32.totalorder %s16, 1
    %p169 = por %p167, %p168
    %p170 = scmp.ne.s32.totalorder %s159, %s160
    %p171 = scmp.eq.s32.totalorder %s16, 0
    %p172 = por %p170, %p171
    %p173 = scmp.ne.s32.totalorder %s159, %s160
    %p174 = scmp.eq.s32.totalorder %s17, 1
    %p175 = por %p173, %p174
    %p177 = scmp.ne.s32.totalorder %s160, %s176
    %p178 = scmp.eq.s32.totalorder %s17, 0
    %p179 = por %p177, %p178
    %p180 = scmp.le.s32.totalorder 1, %s11
    %p181 = scmp.lt.s32.totalorder %s11, 3
    %p182 = pnand %p180, %p181
    %p183 = pneg %p182
    // Predicated region
    $region9: #{conv_en_bn_2d.2} parent=5 // pred_check
      _
    $region10: #{conv_en_bn_2d.2} parent=5 // pred_check_branch
      %185 = sbr.rel (%p182) target = $region12
    $region11: #{conv_en_bn_2d.2} parent=5 // pred_region
      %s186 = ssub.s32 %s11, 1
      // Predicated region
      $region13: #{conv_en_bn_2d.2} parent=11 // pred_check
        %p187 = pneg %p82
      $region14: #{conv_en_bn_2d.2} parent=11 // pred_check_branch
        %189 = sbr.rel (%p187) target = $region16
      $region15: #{conv_en_bn_2d.2} parent=11 // pred_region
        %p190 = scmp.lt.s32.totalorder %s23, 0
        %s191 = scalar_select %p190, %s23, 0
        %s192 = smul.addr %s191, 2
        %s193 = scalar_lea.vmem %s1, %s192
      $region16: #{conv_en_bn_2d.2} parent=11 // pred_fallthru
        _
    $region12: #{conv_en_bn_2d.2} parent=5 // pred_fallthru
      _
    %p194 = scmp.lt.s32.totalorder %s11, 2
    // Predicated region
    $region17: #{conv_en_bn_2d.2} parent=5 // pred_check
      %p195 = pneg %p194
    $region18: #{conv_en_bn_2d.2} parent=5 // pred_check_branch
      %197 = sbr.rel (%p195) target = $region20
    $region19: #{conv_en_bn_2d.2} parent=5 // pred_region
      // Predicated region
      $region21: #{conv_en_bn_2d.2} parent=19 // pred_check
        %p198 = pneg %p50
      $region22: #{conv_en_bn_2d.2} parent=19 // pred_check_branch
        %200 = sbr.rel (%p198) target = $region24
      $region23: #{conv_en_bn_2d.2} parent=19 // pred_region
        %p201 = scmp.lt.s32.totalorder %s18, 1
        %s202 = scalar_select %p201, %s18, 1
        %s203 = smul.addr %s202, 54
        %s204 = smul.addr %s203, 4
        %s205 = scalar_lea.vmem %s0, %s204
      $region24: #{conv_en_bn_2d.2} parent=19 // pred_fallthru
        _
    $region20: #{conv_en_bn_2d.2} parent=5 // pred_fallthru
      _
    %p206 = scmp.le.s32.totalorder 1, %s11
    %p207 = scmp.lt.s32.totalorder %s11, 3
    %p208 = pnand %p206, %p207
    %p209 = pneg %p208
    // Predicated region
    $region25: #{conv_en_bn_2d.2} parent=5 // pred_check
      _
    $region26: #{conv_en_bn_2d.2} parent=5 // pred_check_branch
      %211 = sbr.rel (%p208) target = $region28
    $region27: #{conv_en_bn_2d.2} parent=5 // pred_region
      %s212 = ssub.s32 %s11, 1
      %p213 = scmp.lt.s32.totalorder %s21, 1
      %s214 = scalar_select %p213, %s21, 1
      %s215 = smul.addr %s214, 54
      %s216 = smul.addr %s215, 4
      %s217 = scalar_lea.vmem %s0, %s216
      %p218 = pneg %p56
      %p219 = pneg %p53
      %p220 = scmp.lt.s32.totalorder %s23, 0
      %s221 = scalar_select %p220, %s23, 0
      %s222 = smul.addr %s221, 2
      %s223 = scalar_lea.vmem %s1, %s222
      %p224 = pneg %p82
      %p225 = pneg %p79
      %p226 = pneg %p112
      %p227 = pneg %p109
      %s228 = smul.u32 16, %s22
      %p229 = scmp.lt.s32.totalorder %s21, 1
      %s230 = scalar_select %p229, %s21, 1
      %p231 = scmp.lt.s32.totalorder %s228, 15
      %s232 = scalar_select %p231, %s228, 15
      %p233 = scmp.lt.s32.totalorder %s23, 0
      %s234 = scalar_select %p233, %s23, 0
      %s235 = smul.addr %s232, 2
      %s236 = sadd.s32 %s234, %s235
      %s237 = smul.addr %s230, 32
      %s238 = sadd.s32 %s236, %s237
      %s239 = smul.addr %s238, 8
      %s240 = scalar_lea.vmem %s2, %s239
      %p241 = pneg %p142
      %p242 = pneg %p139
      %p243 = scmp.lt.s32.totalorder %s21, 1
      %s244 = scalar_select %p243, %s21, 1
      %p245 = scmp.lt.s32.totalorder %s22, 0
      %s246 = scalar_select %p245, %s22, 0
      %p247 = scmp.lt.s32.totalorder %s23, 0
      %s248 = scalar_select %p247, %s23, 0
      %s249 = sadd.s32 %s248, %s246
      %s250 = sadd.s32 %s249, %s244
      %s251 = smul.addr %s250, 8
      %s252 = scalar_lea.vmem %s3, %s251
      %p253 = pneg %p172
      %p254 = pneg %p169
      %p255 = scmp.lt.s32.totalorder %s21, 1
      %s256 = scalar_select %p255, %s21, 1
      %p257 = scmp.lt.s32.totalorder %s22, 0
      %s258 = scalar_select %p257, %s22, 0
      %p259 = scmp.lt.s32.totalorder %s23, 0
      %s260 = scalar_select %p259, %s23, 0
      %s261 = sadd.s32 %s260, %s258
      %s262 = sadd.s32 %s261, %s256
      %s263 = smul.addr %s262, 8
      %s264 = scalar_lea.vmem %s4, %s263
      %p265 = scmp.lt.s32.totalorder %s21, 1
      %s266 = scalar_select %p265, %s21, 1
      %s267 = smul.addr %s266, 54
      %s268 = smul.addr %s267, 4
      %s269 = scalar_lea.vmem %s0, %s268
      %p270 = scmp.lt.s32.totalorder %s23, 0
      %s271 = scalar_select %p270, %s23, 0
      %s272 = smul.addr %s271, 2
      %s273 = scalar_lea.vmem %s1, %s272
      %s274 = smul.u32 16, %s22
      %p275 = scmp.lt.s32.totalorder %s21, 1
      %s276 = scalar_select %p275, %s21, 1
      %p277 = scmp.lt.s32.totalorder %s274, 15
      %s278 = scalar_select %p277, %s274, 15
      %p279 = scmp.lt.s32.totalorder %s23, 0
      %s280 = scalar_select %p279, %s23, 0
      %s281 = smul.addr %s278, 2
      %s282 = sadd.s32 %s280, %s281
      %s283 = smul.addr %s276, 32
      %s284 = sadd.s32 %s282, %s283
      %s285 = smul.addr %s284, 8
      %s286 = scalar_lea.vmem %s2, %s285
      %s287 = smul.u32 16, %s22
      %p288 = scmp.lt.s32.totalorder %s21, 1
      %s289 = scalar_select %p288, %s21, 1
      %p290 = scmp.lt.s32.totalorder %s22, 0
      %s291 = scalar_select %p290, %s22, 0
      %p292 = scmp.lt.s32.totalorder %s23, 0
      %s293 = scalar_select %p292, %s23, 0
      %s294 = sadd.s32 %s293, %s291
      %s295 = sadd.s32 %s294, %s289
      %s296 = smul.addr %s295, 8
      %s297 = scalar_lea.vmem %s3, %s296
      %p298 = scmp.lt.s32.totalorder %s21, 1
      %s299 = scalar_select %p298, %s21, 1
      %p300 = scmp.lt.s32.totalorder %s22, 0
      %s301 = scalar_select %p300, %s22, 0
      %p302 = scmp.lt.s32.totalorder %s23, 0
      %s303 = scalar_select %p302, %s23, 0
      %s304 = sadd.s32 %s303, %s301
      %s305 = sadd.s32 %s304, %s299
      %s306 = smul.addr %s305, 8
      %s307 = scalar_lea.vmem %s4, %s306
      %s309 = smul.u32 %s22, 16
      %s310 = smul.u32 %s309, 3
      %s311 = smul.addr %s310, 4
      %s312 = scalar_lea.vmem %s269, %s311
      %v313 = vld [vmem:[%s312] sm:$0xf]
      %v314 = vld [vmem:[%s312 + $0x4] sm:$0xf]
      %v315 = vld [vmem:[%s312 + $0x8] sm:$0x1]
      %v316 = vld [vmem:[%s312 + $0xc] sm:$0xf]
      %v317 = vld [vmem:[%s312 + $0x10] sm:$0xf]
      %v318 = vld [vmem:[%s312 + $0x14] sm:$0x1]
      %v319 = vld [vmem:[%s312 + $0x18] sm:$0xf]
      %v320 = vld [vmem:[%s312 + $0x1c] sm:$0xf]
      %v321 = vld [vmem:[%s312 + $0x20] sm:$0x1]
      %v322 = vld [vmem:[%s312 + $0x24] sm:$0xf]
      %v323 = vld [vmem:[%s312 + $0x28] sm:$0xf]
      %v324 = vld [vmem:[%s312 + $0x2c] sm:$0x1]
      %v325 = vld [vmem:[%s312 + $0x30] sm:$0xf]
      %v326 = vld [vmem:[%s312 + $0x34] sm:$0xf]
      %v327 = vld [vmem:[%s312 + $0x38] sm:$0x1]
      %v328 = vld [vmem:[%s312 + $0x3c] sm:$0xf]
      %v329 = vld [vmem:[%s312 + $0x40] sm:$0xf]
      %v330 = vld [vmem:[%s312 + $0x44] sm:$0x1]
      %v331 = vld [vmem:[%s312 + $0x48] sm:$0xf]
      %v332 = vld [vmem:[%s312 + $0x4c] sm:$0xf]
      %v333 = vld [vmem:[%s312 + $0x50] sm:$0x1]
      %v334 = vld [vmem:[%s312 + $0x54] sm:$0xf]
      %v335 = vld [vmem:[%s312 + $0x58] sm:$0xf]
      %v336 = vld [vmem:[%s312 + $0x5c] sm:$0x1]
      %v337 = vld [vmem:[%s312 + $0x60] sm:$0xf]
      %v338 = vld [vmem:[%s312 + $0x64] sm:$0xf]
      %v339 = vld [vmem:[%s312 + $0x68] sm:$0x1]
      %v340 = vld [vmem:[%s312 + $0x6c] sm:$0xf]
      %v341 = vld [vmem:[%s312 + $0x70] sm:$0xf]
      %v342 = vld [vmem:[%s312 + $0x74] sm:$0x1]
      %v343 = vld [vmem:[%s312 + $0x78] sm:$0xf]
      %v344 = vld [vmem:[%s312 + $0x7c] sm:$0xf]
      %v345 = vld [vmem:[%s312 + $0x80] sm:$0x1]
      %v346 = vld [vmem:[%s312 + $0x84] sm:$0xf]
      %v347 = vld [vmem:[%s312 + $0x88] sm:$0xf]
      %v348 = vld [vmem:[%s312 + $0x8c] sm:$0x1]
      %v349 = vld [vmem:[%s312 + $0x90] sm:$0xf]
      %v350 = vld [vmem:[%s312 + $0x94] sm:$0xf]
      %v351 = vld [vmem:[%s312 + $0x98] sm:$0x1]
      %v352 = vld [vmem:[%s312 + $0x9c] sm:$0xf]
      %v353 = vld [vmem:[%s312 + $0xa0] sm:$0xf]
      %v354 = vld [vmem:[%s312 + $0xa4] sm:$0x1]
      %v355 = vld [vmem:[%s312 + $0xa8] sm:$0xf]
      %v356 = vld [vmem:[%s312 + $0xac] sm:$0xf]
      %v357 = vld [vmem:[%s312 + $0xb0] sm:$0x1]
      %v358 = vld [vmem:[%s312 + $0xb4] sm:$0xf]
      %v359 = vld [vmem:[%s312 + $0xb8] sm:$0xf]
      %v360 = vld [vmem:[%s312 + $0xbc] sm:$0x1]
      %v361 = vld [vmem:[%s273] sm:$0x3]
      %vm362 = vsmask.f32 3328
      %vm363 = vsmask.f32 7440
      %vm364 = vmor %vm362, %vm363
      %v366 = vshrl.u32 %v313, 16
      %v368 = vrot.slane %v366, 4
      %v369 = vshll.u32 %v313, 16
      %v371 = vrot.slane %v369, 5
      %v372 = vor.u32 %v368, %v371
      %v373 = vrot.slane %v372, 4
      %v375 = vshll.u32 %v314, 16
      %v377 = vrot.slane %v375, 5
      %v378 = vsel %vm364, %v373, %v377
      %v379 = vshrl.u32 %v314, 16
      %v381 = vrot.slane %v379, 4
      %v382 = vor.u32 %v381, %v377
      %v383 = vrot.slane %v382, 4
      %v385 = vshll.u32 %v315, 16
      %v387 = vrot.slane %v385, 5
      %v388 = vsel %vm364, %v383, %v387
      %v390 = vshrl.u32 %v316, 16
      %v392 = vrot.slane %v390, 4
      %v393 = vshll.u32 %v316, 16
      %v395 = vrot.slane %v393, 5
      %v396 = vor.u32 %v392, %v395
      %v397 = vrot.slane %v396, 4
      %v399 = vshll.u32 %v317, 16
      %v401 = vrot.slane %v399, 5
      %v402 = vsel %vm364, %v397, %v401
      %v403 = vshrl.u32 %v317, 16
      %v405 = vrot.slane %v403, 4
      %v406 = vor.u32 %v405, %v401
      %v407 = vrot.slane %v406, 4
      %v409 = vshll.u32 %v318, 16
      %v411 = vrot.slane %v409, 5
      %v412 = vsel %vm364, %v407, %v411
      %v414 = vshrl.u32 %v319, 16
      %v416 = vrot.slane %v414, 4
      %v417 = vshll.u32 %v319, 16
      %v419 = vrot.slane %v417, 5
      %v420 = vor.u32 %v416, %v419
      %v421 = vrot.slane %v420, 4
      %v423 = vshll.u32 %v320, 16
      %v425 = vrot.slane %v423, 5
      %v426 = vsel %vm364, %v421, %v425
      %v427 = vshrl.u32 %v320, 16
      %v429 = vrot.slane %v427, 4
      %v430 = vor.u32 %v429, %v425
      %v431 = vrot.slane %v430, 4
      %v433 = vshll.u32 %v321, 16
      %v435 = vrot.slane %v433, 5
      %v436 = vsel %vm364, %v431, %v435
      %v438 = vshrl.u32 %v322, 16
      %v440 = vrot.slane %v438, 4
      %v441 = vshll.u32 %v322, 16
      %v443 = vrot.slane %v441, 5
      %v444 = vor.u32 %v440, %v443
      %v445 = vrot.slane %v444, 4
      %v447 = vshll.u32 %v323, 16
      %v449 = vrot.slane %v447, 5
      %v450 = vsel %vm364, %v445, %v449
      %v451 = vshrl.u32 %v323, 16
      %v453 = vrot.slane %v451, 4
      %v454 = vor.u32 %v453, %v449
      %v455 = vrot.slane %v454, 4
      %v457 = vshll.u32 %v324, 16
      %v459 = vrot.slane %v457, 5
      %v460 = vsel %vm364, %v455, %v459
      %v462 = vshrl.u32 %v325, 16
      %v464 = vrot.slane %v462, 4
      %v465 = vshll.u32 %v325, 16
      %v467 = vrot.slane %v465, 5
      %v468 = vor.u32 %v464, %v467
      %v469 = vrot.slane %v468, 4
      %v471 = vshll.u32 %v326, 16
      %v473 = vrot.slane %v471, 5
      %v474 = vsel %vm364, %v469, %v473
      %v475 = vshrl.u32 %v326, 16
      %v477 = vrot.slane %v475, 4
      %v478 = vor.u32 %v477, %v473
      %v479 = vrot.slane %v478, 4
      %v481 = vshll.u32 %v327, 16
      %v483 = vrot.slane %v481, 5
      %v484 = vsel %vm364, %v479, %v483
      %v486 = vshrl.u32 %v328, 16
      %v488 = vrot.slane %v486, 4
      %v489 = vshll.u32 %v328, 16
      %v491 = vrot.slane %v489, 5
      %v492 = vor.u32 %v488, %v491
      %v493 = vrot.slane %v492, 4
      %v495 = vshll.u32 %v329, 16
      %v497 = vrot.slane %v495, 5
      %v498 = vsel %vm364, %v493, %v497
      %v499 = vshrl.u32 %v329, 16
      %v501 = vrot.slane %v499, 4
      %v502 = vor.u32 %v501, %v497
      %v503 = vrot.slane %v502, 4
      %v505 = vshll.u32 %v330, 16
      %v507 = vrot.slane %v505, 5
      %v508 = vsel %vm364, %v503, %v507
      %v510 = vshrl.u32 %v331, 16
      %v512 = vrot.slane %v510, 4
      %v513 = vshll.u32 %v331, 16
      %v515 = vrot.slane %v513, 5
      %v516 = vor.u32 %v512, %v515
      %v517 = vrot.slane %v516, 4
      %v519 = vshll.u32 %v332, 16
      %v521 = vrot.slane %v519, 5
      %v522 = vsel %vm364, %v517, %v521
      %v523 = vshrl.u32 %v332, 16
      %v525 = vrot.slane %v523, 4
      %v526 = vor.u32 %v525, %v521
      %v527 = vrot.slane %v526, 4
      %v529 = vshll.u32 %v333, 16
      %v531 = vrot.slane %v529, 5
      %v532 = vsel %vm364, %v527, %v531
      %v534 = vshrl.u32 %v334, 16
      %v536 = vrot.slane %v534, 4
      %v537 = vshll.u32 %v334, 16
      %v539 = vrot.slane %v537, 5
      %v540 = vor.u32 %v536, %v539
      %v541 = vrot.slane %v540, 4
      %v543 = vshll.u32 %v335, 16
      %v545 = vrot.slane %v543, 5
      %v546 = vsel %vm364, %v541, %v545
      %v547 = vshrl.u32 %v335, 16
      %v549 = vrot.slane %v547, 4
      %v550 = vor.u32 %v549, %v545
      %v551 = vrot.slane %v550, 4
      %v553 = vshll.u32 %v336, 16
      %v555 = vrot.slane %v553, 5
      %v556 = vsel %vm364, %v551, %v555
      %v558 = vshrl.u32 %v337, 16
      %v560 = vrot.slane %v558, 4
      %v561 = vshll.u32 %v337, 16
      %v563 = vrot.slane %v561, 5
      %v564 = vor.u32 %v560, %v563
      %v565 = vrot.slane %v564, 4
      %v567 = vshll.u32 %v338, 16
      %v569 = vrot.slane %v567, 5
      %v570 = vsel %vm364, %v565, %v569
      %v571 = vshrl.u32 %v338, 16
      %v573 = vrot.slane %v571, 4
      %v574 = vor.u32 %v573, %v569
      %v575 = vrot.slane %v574, 4
      %v577 = vshll.u32 %v339, 16
      %v579 = vrot.slane %v577, 5
      %v580 = vsel %vm364, %v575, %v579
      %v582 = vshrl.u32 %v340, 16
      %v584 = vrot.slane %v582, 4
      %v585 = vshll.u32 %v340, 16
      %v587 = vrot.slane %v585, 5
      %v588 = vor.u32 %v584, %v587
      %v589 = vrot.slane %v588, 4
      %v591 = vshll.u32 %v341, 16
      %v593 = vrot.slane %v591, 5
      %v594 = vsel %vm364, %v589, %v593
      %v595 = vshrl.u32 %v341, 16
      %v597 = vrot.slane %v595, 4
      %v598 = vor.u32 %v597, %v593
      %v599 = vrot.slane %v598, 4
      %v601 = vshll.u32 %v342, 16
      %v603 = vrot.slane %v601, 5
      %v604 = vsel %vm364, %v599, %v603
      %v606 = vshrl.u32 %v343, 16
      %v608 = vrot.slane %v606, 4
      %v609 = vshll.u32 %v343, 16
      %v611 = vrot.slane %v609, 5
      %v612 = vor.u32 %v608, %v611
      %v613 = vrot.slane %v612, 4
      %v615 = vshll.u32 %v344, 16
      %v617 = vrot.slane %v615, 5
      %v618 = vsel %vm364, %v613, %v617
      %v619 = vshrl.u32 %v344, 16
      %v621 = vrot.slane %v619, 4
      %v622 = vor.u32 %v621, %v617
      %v623 = vrot.slane %v622, 4
      %v625 = vshll.u32 %v345, 16
      %v627 = vrot.slane %v625, 5
      %v628 = vsel %vm364, %v623, %v627
      %v630 = vshrl.u32 %v346, 16
      %v632 = vrot.slane %v630, 4
      %v633 = vshll.u32 %v346, 16
      %v635 = vrot.slane %v633, 5
      %v636 = vor.u32 %v632, %v635
      %v637 = vrot.slane %v636, 4
      %v639 = vshll.u32 %v347, 16
      %v641 = vrot.slane %v639, 5
      %v642 = vsel %vm364, %v637, %v641
      %v643 = vshrl.u32 %v347, 16
      %v645 = vrot.slane %v643, 4
      %v646 = vor.u32 %v645, %v641
      %v647 = vrot.slane %v646, 4
      %v649 = vshll.u32 %v348, 16
      %v651 = vrot.slane %v649, 5
      %v652 = vsel %vm364, %v647, %v651
      %v654 = vshrl.u32 %v349, 16
      %v656 = vrot.slane %v654, 4
      %v657 = vshll.u32 %v349, 16
      %v659 = vrot.slane %v657, 5
      %v660 = vor.u32 %v656, %v659
      %v661 = vrot.slane %v660, 4
      %v663 = vshll.u32 %v350, 16
      %v665 = vrot.slane %v663, 5
      %v666 = vsel %vm364, %v661, %v665
      %v667 = vshrl.u32 %v350, 16
      %v669 = vrot.slane %v667, 4
      %v670 = vor.u32 %v669, %v665
      %v671 = vrot.slane %v670, 4
      %v673 = vshll.u32 %v351, 16
      %v675 = vrot.slane %v673, 5
      %v676 = vsel %vm364, %v671, %v675
      %v678 = vshrl.u32 %v352, 16
      %v680 = vrot.slane %v678, 4
      %v681 = vshll.u32 %v352, 16
      %v683 = vrot.slane %v681, 5
      %v684 = vor.u32 %v680, %v683
      %v685 = vrot.slane %v684, 4
      %v687 = vshll.u32 %v353, 16
      %v689 = vrot.slane %v687, 5
      %v690 = vsel %vm364, %v685, %v689
      %v691 = vshrl.u32 %v353, 16
      %v693 = vrot.slane %v691, 4
      %v694 = vor.u32 %v693, %v689
      %v695 = vrot.slane %v694, 4
      %v697 = vshll.u32 %v354, 16
      %v699 = vrot.slane %v697, 5
      %v700 = vsel %vm364, %v695, %v699
      %v702 = vshrl.u32 %v355, 16
      %v704 = vrot.slane %v702, 4
      %v705 = vshll.u32 %v355, 16
      %v707 = vrot.slane %v705, 5
      %v708 = vor.u32 %v704, %v707
      %v709 = vrot.slane %v708, 4
      %v711 = vshll.u32 %v356, 16
      %v713 = vrot.slane %v711, 5
      %v714 = vsel %vm364, %v709, %v713
      %v715 = vshrl.u32 %v356, 16
      %v717 = vrot.slane %v715, 4
      %v718 = vor.u32 %v717, %v713
      %v719 = vrot.slane %v718, 4
      %v721 = vshll.u32 %v357, 16
      %v723 = vrot.slane %v721, 5
      %v724 = vsel %vm364, %v719, %v723
      %v726 = vshrl.u32 %v358, 16
      %v728 = vrot.slane %v726, 4
      %v729 = vshll.u32 %v358, 16
      %v731 = vrot.slane %v729, 5
      %v732 = vor.u32 %v728, %v731
      %v733 = vrot.slane %v732, 4
      %v735 = vshll.u32 %v359, 16
      %v737 = vrot.slane %v735, 5
      %v738 = vsel %vm364, %v733, %v737
      %v739 = vshrl.u32 %v359, 16
      %v741 = vrot.slane %v739, 4
      %v742 = vor.u32 %v741, %v737
      %v743 = vrot.slane %v742, 4
      %v745 = vshll.u32 %v360, 16
      %v747 = vrot.slane %v745, 5
      %v748 = vsel %vm364, %v743, %v747
      %s749 = scalar_lea.vmem %s273, 2
      %v750 = vld [vmem:[%s749] sm:$0x3]
      %v751 = vunpack.c.l.b16 %v378
      %v752 = vunpack.c.l.b16 %v388
      %v753 = vunpack.c.l.b16 %v402
      %v754 = vunpack.c.l.b16 %v412
      %v755 = vunpack.c.l.b16 %v426
      %v756 = vunpack.c.l.b16 %v436
      %v757 = vunpack.c.l.b16 %v450
      %v758 = vunpack.c.l.b16 %v460
      %v759 = vunpack.c.l.b16 %v474
      %v760 = vunpack.c.l.b16 %v484
      %v761 = vunpack.c.l.b16 %v498
      %v762 = vunpack.c.l.b16 %v508
      %v763 = vunpack.c.l.b16 %v522
      %v764 = vunpack.c.l.b16 %v532
      %v765 = vunpack.c.l.b16 %v546
      %v766 = vunpack.c.l.b16 %v556
      %v767 = vunpack.c.l.b16 %v570
      %v768 = vunpack.c.l.b16 %v580
      %v769 = vunpack.c.l.b16 %v594
      %v770 = vunpack.c.l.b16 %v604
      %v771 = vunpack.c.l.b16 %v618
      %v772 = vunpack.c.l.b16 %v628
      %v773 = vunpack.c.l.b16 %v642
      %v774 = vunpack.c.l.b16 %v652
      %v775 = vunpack.c.l.b16 %v666
      %v776 = vunpack.c.l.b16 %v676
      %v777 = vunpack.c.l.b16 %v690
      %v778 = vunpack.c.l.b16 %v700
      %v779 = vunpack.c.l.b16 %v714
      %v780 = vunpack.c.l.b16 %v724
      %v781 = vunpack.c.l.b16 %v738
      %v782 = vunpack.c.l.b16 %v748
      %v783 = vpack.c.b16 %v752, %v751
      %v784 = vpack.c.b16 %v754, %v753
      %v785 = vpack.c.b16 %v756, %v755
      %v786 = vpack.c.b16 %v758, %v757
      %v787 = vpack.c.b16 %v760, %v759
      %v788 = vpack.c.b16 %v762, %v761
      %v789 = vpack.c.b16 %v764, %v763
      %v790 = vpack.c.b16 %v766, %v765
      %v791 = vpack.c.b16 %v768, %v767
      %v792 = vpack.c.b16 %v770, %v769
      %v793 = vpack.c.b16 %v772, %v771
      %v794 = vpack.c.b16 %v774, %v773
      %v795 = vpack.c.b16 %v776, %v775
      %v796 = vpack.c.b16 %v778, %v777
      %v797 = vpack.c.b16 %v780, %v779
      %v798 = vpack.c.b16 %v782, %v781
      %vm799 = vcmask 31744
      %v801 = vsel %vm799, %v783, 0
      %v804 = vsel %vm799, %v784, 0
      %v807 = vsel %vm799, %v785, 0
      %v810 = vsel %vm799, %v786, 0
      %v813 = vsel %vm799, %v787, 0
      %v816 = vsel %vm799, %v788, 0
      %v819 = vsel %vm799, %v789, 0
      %v822 = vsel %vm799, %v790, 0
      %v825 = vsel %vm799, %v791, 0
      %v828 = vsel %vm799, %v792, 0
      %v831 = vsel %vm799, %v793, 0
      %v834 = vsel %vm799, %v794, 0
      %v837 = vsel %vm799, %v795, 0
      %v840 = vsel %vm799, %v796, 0
      %v843 = vsel %vm799, %v797, 0
      %v846 = vsel %vm799, %v798, 0
      %vm848 = vcmask 1041408
      %v850 = vsel %vm848, %v750, 0
      %852 = vmatprep.subr.bf16.mxu0 0
      %853 = vmatpush1.bf16.msra.mxu0 %v850
      %854 = vmatprep.subr.bf16.mxu0 0
      %855 = vmatpush1.bf16.msra.mxu0 0
      %856 = vmatprep.subr.bf16.mxu0 0
      %857 = vmatpush1.bf16.msra.mxu0 0
      %858 = vmatprep.subr.bf16.mxu0 0
      %859 = vmatpush1.bf16.msra.mxu0 0
      %860 = vmatprep.subr.bf16.mxu0 0
      %861 = vmatpush1.bf16.msra.mxu0 0
      %862 = vmatprep.subr.bf16.mxu0 0
      %863 = vmatpush1.bf16.msra.mxu0 0
      %864 = vmatprep.subr.bf16.mxu0 0
      %865 = vmatpush1.bf16.msra.mxu0 0
      %866 = vmatprep.subr.bf16.mxu0 0
      %867 = vmatpush1.bf16.msra.mxu0 0
      %868 = vmatprep.subr.bf16.mxu0 0
      %869 = vmatpush1.bf16.msra.mxu0 0
      %870 = vmatprep.subr.bf16.mxu0 0
      %871 = vmatpush1.bf16.msra.mxu0 0
      %872 = vmatprep.subr.bf16.mxu0 0
      %873 = vmatpush1.bf16.msra.mxu0 0
      %874 = vmatprep.subr.bf16.mxu0 0
      %875 = vmatpush1.bf16.msra.mxu0 0
      %876 = vmatprep.subr.bf16.mxu0 0
      %877 = vmatpush1.bf16.msra.mxu0 0
      %878 = vmatprep.subr.bf16.mxu0 0
      %879 = vmatpush1.bf16.msra.mxu0 0
      %880 = vmatprep.subr.bf16.mxu0 0
      %881 = vmatpush1.bf16.msra.mxu0 0
      %882 = vmatprep.subr.bf16.mxu0 0
      %883 = vmatpush1.bf16.msra.mxu0 0
      %884 = vmatprep.mubr.bf16.mxu0 0
      %885 = vmatmul.mubr.bf16.gmra.mrb[0].mxu0 %v801
      %v886 = vpop.f32.mrb[0].mxu0
      %v887 = vadd.f32 0.0, %v886
      %v888 = vpop.f32.mrb[0].mxu0
      %v889 = vpop.f32.mrb[0].mxu0
      %v890 = vadd.f32 0.0, %v889
      %v891 = vpop.f32.mrb[0].mxu0
      %892 = vmatprep.mubr.bf16.mxu0 0
      %893 = vmatmul.mubr.bf16.gmra.mrb[0].mxu0 %v804
      %v894 = vpop.f32.mrb[0].mxu0
      %v895 = vadd.f32 0.0, %v894
      %v896 = vpop.f32.mrb[0].mxu0
      %v897 = vpop.f32.mrb[0].mxu0
      %v898 = vadd.f32 0.0, %v897
      %v899 = vpop.f32.mrb[0].mxu0
      %900 = vmatprep.mubr.bf16.mxu0 0
      %901 = vmatmul.mubr.bf16.gmra.mrb[0].mxu0 %v807
      %v902 = vpop.f32.mrb[0].mxu0
      %v903 = vadd.f32 0.0, %v902
      %v904 = vpop.f32.mrb[0].mxu0
      %v905 = vpop.f32.mrb[0].mxu0
      %v906 = vadd.f32 0.0, %v905
      %v907 = vpop.f32.mrb[0].mxu0
      %908 = vmatprep.mubr.bf16.mxu0 0
      %909 = vmatmul.mubr.bf16.gmra.mrb[0].mxu0 %v810
      %v910 = vpop.f32.mrb[0].mxu0
      %v911 = vadd.f32 0.0, %v910
      %v912 = vpop.f32.mrb[0].mxu0
      %v913 = vpop.f32.mrb[0].mxu0
      %v914 = vadd.f32 0.0, %v913
      %v915 = vpop.f32.mrb[0].mxu0
      %916 = vmatprep.mubr.bf16.mxu0 0
      %917 = vmatmul.mubr.bf16.gmra.mrb[0].mxu0 %v813
      %v918 = vpop.f32.mrb[0].mxu0
      %v919 = vadd.f32 0.0, %v918
      %v920 = vpop.f32.mrb[0].mxu0
      %v921 = vpop.f32.mrb[0].mxu0
      %v922 = vadd.f32 0.0, %v921
      %v923 = vpop.f32.mrb[0].mxu0
      %924 = vmatprep.mubr.bf16.mxu0 0
      %925 = vmatmul.mubr.bf16.gmra.mrb[0].mxu0 %v816
      %v926 = vpop.f32.mrb[0].mxu0
      %v927 = vadd.f32 0.0, %v926
      %v928 = vpop.f32.mrb[0].mxu0
      %v929 = vpop.f32.mrb[0].mxu0
      %v930 = vadd.f32 0.0, %v929
      %v931 = vpop.f32.mrb[0].mxu0
      %932 = vmatprep.mubr.bf16.mxu0 0
      %933 = vmatmul.mubr.bf16.gmra.mrb[0].mxu0 %v819
      %v934 = vpop.f32.mrb[0].mxu0
      %v935 = vadd.f32 0.0, %v934
      %v936 = vpop.f32.mrb[0].mxu0
      %v937 = vpop.f32.mrb[0].mxu0
      %v938 = vadd.f32 0.0, %v937
      %v939 = vpop.f32.mrb[0].mxu0
      %940 = vmatprep.mubr.bf16.mxu0 0
      %941 = vmatmul.mubr.bf16.gmra.mrb[0].mxu0 %v822
      %v942 = vpop.f32.mrb[0].mxu0
      %v943 = vadd.f32 0.0, %v942
      %v944 = vpop.f32.mrb[0].mxu0
      %v945 = vpop.f32.mrb[0].mxu0
      %v946 = vadd.f32 0.0, %v945
      %v947 = vpop.f32.mrb[0].mxu0
      %948 = vmatprep.mubr.bf16.mxu0 0
      %949 = vmatmul.mubr.bf16.gmra.mrb[0].mxu0 %v825
      %v950 = vpop.f32.mrb[0].mxu0
      %v951 = vadd.f32 0.0, %v950
      %v952 = vpop.f32.mrb[0].mxu0
      %v953 = vpop.f32.mrb[0].mxu0
      %v954 = vadd.f32 0.0, %v953
      %v955 = vpop.f32.mrb[0].mxu0
      %956 = vmatprep.mubr.bf16.mxu0 0
      %957 = vmatmul.mubr.bf16.gmra.mrb[0].mxu0 %v828
      %v958 = vpop.f32.mrb[0].mxu0
      %v959 = vadd.f32 0.0, %v958
      %v960 = vpop.f32.mrb[0].mxu0
      %v961 = vpop.f32.mrb[0].mxu0
      %v962 = vadd.f32 0.0, %v961
      %v963 = vpop.f32.mrb[0].mxu0
      %964 = vmatprep.mubr.bf16.mxu0 0
      %965 = vmatmul.mubr.bf16.gmra.mrb[0].mxu0 %v831
      %v966 = vpop.f32.mrb[0].mxu0
      %v967 = vadd.f32 0.0, %v966
      %v968 = vpop.f32.mrb[0].mxu0
      %v969 = vpop.f32.mrb[0].mxu0
      %v970 = vadd.f32 0.0, %v969
      %v971 = vpop.f32.mrb[0].mxu0
      %972 = vmatprep.mubr.bf16.mxu0 0
      %973 = vmatmul.mubr.bf16.gmra.mrb[0].mxu0 %v834
      %v974 = vpop.f32.mrb[0].mxu0
      %v975 = vadd.f32 0.0, %v974
      %v976 = vpop.f32.mrb[0].mxu0
      %v977 = vpop.f32.mrb[0].mxu0
      %v978 = vadd.f32 0.0, %v977
      %v979 = vpop.f32.mrb[0].mxu0
      %980 = vmatprep.mubr.bf16.mxu0 0
      %981 = vmatmul.mubr.bf16.gmra.mrb[0].mxu0 %v837
      %v982 = vpop.f32.mrb[0].mxu0
      %v983 = vadd.f32 0.0, %v982
      %v984 = vpop.f32.mrb[0].mxu0
      %v985 = vpop.f32.mrb[0].mxu0
      %v986 = vadd.f32 0.0, %v985
      %v987 = vpop.f32.mrb[0].mxu0
      %988 = vmatprep.mubr.bf16.mxu0 0
      %989 = vmatmul.mubr.bf16.gmra.mrb[0].mxu0 %v840
      %v990 = vpop.f32.mrb[0].mxu0
      %v991 = vadd.f32 0.0, %v990
      %v992 = vpop.f32.mrb[0].mxu0
      %v993 = vpop.f32.mrb[0].mxu0
      %v994 = vadd.f32 0.0, %v993
      %v995 = vpop.f32.mrb[0].mxu0
      %996 = vmatprep.mubr.bf16.mxu0 0
      %997 = vmatmul.mubr.bf16.gmra.mrb[0].mxu0 %v843
      %v998 = vpop.f32.mrb[0].mxu0
      %v999 = vadd.f32 0.0, %v998
      %v1000 = vpop.f32.mrb[0].mxu0
      %v1001 = vpop.f32.mrb[0].mxu0
      %v1002 = vadd.f32 0.0, %v1001
      %v1003 = vpop.f32.mrb[0].mxu0
      %1004 = vmatprep.mubr.bf16.mxu0 0
      %1005 = vmatmul.mubr.bf16.gmra.mrb[0].mxu0 %v846
      %v1006 = vpop.f32.mrb[0].mxu0
      %v1007 = vadd.f32 0.0, %v1006
      %v1008 = vpop.f32.mrb[0].mxu0
      %v1009 = vpop.f32.mrb[0].mxu0
      %v1010 = vadd.f32 0.0, %v1009
      %v1011 = vpop.f32.mrb[0].mxu0
      %1012 = vdwg.mxu0
      %v1045 = vunpack.c.l.b16 %v313
      %v1046 = vunpack.c.l.b16 %v314
      %v1047 = vunpack.c.l.b16 %v316
      %v1048 = vunpack.c.l.b16 %v317
      %v1049 = vunpack.c.l.b16 %v319
      %v1050 = vunpack.c.l.b16 %v320
      %v1051 = vunpack.c.l.b16 %v322
      %v1052 = vunpack.c.l.b16 %v323
      %v1053 = vunpack.c.l.b16 %v325
      %v1054 = vunpack.c.l.b16 %v326
      %v1055 = vunpack.c.l.b16 %v328
      %v1056 = vunpack.c.l.b16 %v329
      %v1057 = vunpack.c.l.b16 %v331
      %v1058 = vunpack.c.l.b16 %v332
      %v1059 = vunpack.c.l.b16 %v334
      %v1060 = vunpack.c.l.b16 %v335
      %v1061 = vunpack.c.l.b16 %v337
      %v1062 = vunpack.c.l.b16 %v338
      %v1063 = vunpack.c.l.b16 %v340
      %v1064 = vunpack.c.l.b16 %v341
      %v1065 = vunpack.c.l.b16 %v343
      %v1066 = vunpack.c.l.b16 %v344
      %v1067 = vunpack.c.l.b16 %v346
      %v1068 = vunpack.c.l.b16 %v347
      %v1069 = vunpack.c.l.b16 %v349
      %v1070 = vunpack.c.l.b16 %v350
      %v1071 = vunpack.c.l.b16 %v352
      %v1072 = vunpack.c.l.b16 %v353
      %v1073 = vunpack.c.l.b16 %v355
      %v1074 = vunpack.c.l.b16 %v356
      %v1075 = vunpack.c.l.b16 %v358
      %v1076 = vunpack.c.l.b16 %v359
      %v1077 = vpack.c.b16 %v1046, %v1045
      %v1078 = vpack.c.b16 %v1048, %v1047
      %v1079 = vpack.c.b16 %v1050, %v1049
      %v1080 = vpack.c.b16 %v1052, %v1051
      %v1081 = vpack.c.b16 %v1054, %v1053
      %v1082 = vpack.c.b16 %v1056, %v1055
      %v1083 = vpack.c.b16 %v1058, %v1057
      %v1084 = vpack.c.b16 %v1060, %v1059
      %v1085 = vpack.c.b16 %v1062, %v1061
      %v1086 = vpack.c.b16 %v1064, %v1063
      %v1087 = vpack.c.b16 %v1066, %v1065
      %v1088 = vpack.c.b16 %v1068, %v1067
      %v1089 = vpack.c.b16 %v1070, %v1069
      %v1090 = vpack.c.b16 %v1072, %v1071
      %v1091 = vpack.c.b16 %v1074, %v1073
      %v1092 = vpack.c.b16 %v1076, %v1075
      %v1094 = vsel %vm799, %v1077, 0
      %v1097 = vsel %vm799, %v1078, 0
      %v1100 = vsel %vm799, %v1079, 0
      %v1103 = vsel %vm799, %v1080, 0
      %v1106 = vsel %vm799, %v1081, 0
      %v1109 = vsel %vm799, %v1082, 0
      %v1112 = vsel %vm799, %v1083, 0
      %v1115 = vsel %vm799, %v1084, 0
      %v1118 = vsel %vm799, %v1085, 0
      %v1121 = vsel %vm799, %v1086, 0
      %v1124 = vsel %vm799, %v1087, 0
      %v1127 = vsel %vm799, %v1088, 0
      %v1130 = vsel %vm799, %v1089, 0
      %v1133 = vsel %vm799, %v1090, 0
      %v1136 = vsel %vm799, %v1091, 0
      %v1139 = vsel %vm799, %v1092, 0
      %v1142 = vsel %vm848, %v361, 0
      %1144 = vmatprep.subr.bf16.mxu0 0
      %1145 = vmatpush1.bf16.msra.mxu0 %v1142
      %1146 = vmatprep.subr.bf16.mxu0 0
      %1147 = vmatpush1.bf16.msra.mxu0 0
      %1148 = vmatprep.subr.bf16.mxu0 0
      %1149 = vmatpush1.bf16.msra.mxu0 0
      %1150 = vmatprep.subr.bf16.mxu0 0
      %1151 = vmatpush1.bf16.msra.mxu0 0
      %1152 = vmatprep.subr.bf16.mxu0 0
      %1153 = vmatpush1.bf16.msra.mxu0 0
      %1154 = vmatprep.subr.bf16.mxu0 0
      %1155 = vmatpush1.bf16.msra.mxu0 0
      %1156 = vmatprep.subr.bf16.mxu0 0
      %1157 = vmatpush1.bf16.msra.mxu0 0
      %1158 = vmatprep.subr.bf16.mxu0 0
      %1159 = vmatpush1.bf16.msra.mxu0 0
      %1160 = vmatprep.subr.bf16.mxu0 0
      %1161 = vmatpush1.bf16.msra.mxu0 0
      %1162 = vmatprep.subr.bf16.mxu0 0
      %1163 = vmatpush1.bf16.msra.mxu0 0
      %1164 = vmatprep.subr.bf16.mxu0 0
      %1165 = vmatpush1.bf16.msra.mxu0 0
      %1166 = vmatprep.subr.bf16.mxu0 0
      %1167 = vmatpush1.bf16.msra.mxu0 0
      %1168 = vmatprep.subr.bf16.mxu0 0
      %1169 = vmatpush1.bf16.msra.mxu0 0
      %1170 = vmatprep.subr.bf16.mxu0 0
      %1171 = vmatpush1.bf16.msra.mxu0 0
      %1172 = vmatprep.subr.bf16.mxu0 0
      %1173 = vmatpush1.bf16.msra.mxu0 0
      %1174 = vmatprep.subr.bf16.mxu0 0
      %1175 = vmatpush1.bf16.msra.mxu0 0
      %1176 = vmatprep.mubr.bf16.mxu0 0
      %1177 = vmatmul.mubr.bf16.gmra.mrb[0].mxu0 %v1094
      %v1178 = vpop.f32.mrb[0].mxu0
      %v1179 = vadd.f32 %v887, %v1178
      %v1180 = vpop.f32.mrb[0].mxu0
      %v1181 = vpop.f32.mrb[0].mxu0
      %v1182 = vadd.f32 %v890, %v1181
      %v1183 = vpop.f32.mrb[0].mxu0
      %1184 = vmatprep.mubr.bf16.mxu0 0
      %1185 = vmatmul.mubr.bf16.gmra.mrb[0].mxu0 %v1097
      %v1186 = vpop.f32.mrb[0].mxu0
      %v1187 = vadd.f32 %v895, %v1186
      %v1188 = vpop.f32.mrb[0].mxu0
      %v1189 = vpop.f32.mrb[0].mxu0
      %v1190 = vadd.f32 %v898, %v1189
      %v1191 = vpop.f32.mrb[0].mxu0
      %1192 = vmatprep.mubr.bf16.mxu0 0
      %1193 = vmatmul.mubr.bf16.gmra.mrb[0].mxu0 %v1100
      %v1194 = vpop.f32.mrb[0].mxu0
      %v1195 = vadd.f32 %v903, %v1194
      %v1196 = vpop.f32.mrb[0].mxu0
      %v1197 = vpop.f32.mrb[0].mxu0
      %v1198 = vadd.f32 %v906, %v1197
      %v1199 = vpop.f32.mrb[0].mxu0
      %1200 = vmatprep.mubr.bf16.mxu0 0
      %1201 = vmatmul.mubr.bf16.gmra.mrb[0].mxu0 %v1103
      %v1202 = vpop.f32.mrb[0].mxu0
      %v1203 = vadd.f32 %v911, %v1202
      %v1204 = vpop.f32.mrb[0].mxu0
      %v1205 = vpop.f32.mrb[0].mxu0
      %v1206 = vadd.f32 %v914, %v1205
      %v1207 = vpop.f32.mrb[0].mxu0
      %1208 = vmatprep.mubr.bf16.mxu0 0
      %1209 = vmatmul.mubr.bf16.gmra.mrb[0].mxu0 %v1106
      %v1210 = vpop.f32.mrb[0].mxu0
      %v1211 = vadd.f32 %v919, %v1210
      %v1212 = vpop.f32.mrb[0].mxu0
      %v1213 = vpop.f32.mrb[0].mxu0
      %v1214 = vadd.f32 %v922, %v1213
      %v1215 = vpop.f32.mrb[0].mxu0
      %1216 = vmatprep.mubr.bf16.mxu0 0
      %1217 = vmatmul.mubr.bf16.gmra.mrb[0].mxu0 %v1109
      %v1218 = vpop.f32.mrb[0].mxu0
      %v1219 = vadd.f32 %v927, %v1218
      %v1220 = vpop.f32.mrb[0].mxu0
      %v1221 = vpop.f32.mrb[0].mxu0
      %v1222 = vadd.f32 %v930, %v1221
      %v1223 = vpop.f32.mrb[0].mxu0
      %1224 = vmatprep.mubr.bf16.mxu0 0
      %1225 = vmatmul.mubr.bf16.gmra.mrb[0].mxu0 %v1112
      %v1226 = vpop.f32.mrb[0].mxu0
      %v1227 = vadd.f32 %v935, %v1226
      %v1228 = vpop.f32.mrb[0].mxu0
      %v1229 = vpop.f32.mrb[0].mxu0
      %v1230 = vadd.f32 %v938, %v1229
      %v1231 = vpop.f32.mrb[0].mxu0
      %1232 = vmatprep.mubr.bf16.mxu0 0
      %1233 = vmatmul.mubr.bf16.gmra.mrb[0].mxu0 %v1115
      %v1234 = vpop.f32.mrb[0].mxu0
      %v1235 = vadd.f32 %v943, %v1234
      %v1236 = vpop.f32.mrb[0].mxu0
      %v1237 = vpop.f32.mrb[0].mxu0
      %v1238 = vadd.f32 %v946, %v1237
      %v1239 = vpop.f32.mrb[0].mxu0
      %1240 = vmatprep.mubr.bf16.mxu0 0
      %1241 = vmatmul.mubr.bf16.gmra.mrb[0].mxu0 %v1118
      %v1242 = vpop.f32.mrb[0].mxu0
      %v1243 = vadd.f32 %v951, %v1242
      %v1244 = vpop.f32.mrb[0].mxu0
      %v1245 = vpop.f32.mrb[0].mxu0
      %v1246 = vadd.f32 %v954, %v1245
      %v1247 = vpop.f32.mrb[0].mxu0
      %1248 = vmatprep.mubr.bf16.mxu0 0
      %1249 = vmatmul.mubr.bf16.gmra.mrb[0].mxu0 %v1121
      %v1250 = vpop.f32.mrb[0].mxu0
      %v1251 = vadd.f32 %v959, %v1250
      %v1252 = vpop.f32.mrb[0].mxu0
      %v1253 = vpop.f32.mrb[0].mxu0
      %v1254 = vadd.f32 %v962, %v1253
      %v1255 = vpop.f32.mrb[0].mxu0
      %1256 = vmatprep.mubr.bf16.mxu0 0
      %1257 = vmatmul.mubr.bf16.gmra.mrb[0].mxu0 %v1124
      %v1258 = vpop.f32.mrb[0].mxu0
      %v1259 = vadd.f32 %v967, %v1258
      %v1260 = vpop.f32.mrb[0].mxu0
      %v1261 = vpop.f32.mrb[0].mxu0
      %v1262 = vadd.f32 %v970, %v1261
      %v1263 = vpop.f32.mrb[0].mxu0
      %1264 = vmatprep.mubr.bf16.mxu0 0
      %1265 = vmatmul.mubr.bf16.gmra.mrb[0].mxu0 %v1127
      %v1266 = vpop.f32.mrb[0].mxu0
      %v1267 = vadd.f32 %v975, %v1266
      %v1268 = vpop.f32.mrb[0].mxu0
      %v1269 = vpop.f32.mrb[0].mxu0
      %v1270 = vadd.f32 %v978, %v1269
      %v1271 = vpop.f32.mrb[0].mxu0
      %1272 = vmatprep.mubr.bf16.mxu0 0
      %1273 = vmatmul.mubr.bf16.gmra.mrb[0].mxu0 %v1130
      %v1274 = vpop.f32.mrb[0].mxu0
      %v1275 = vadd.f32 %v983, %v1274
      %v1276 = vpop.f32.mrb[0].mxu0
      %v1277 = vpop.f32.mrb[0].mxu0
      %v1278 = vadd.f32 %v986, %v1277
      %v1279 = vpop.f32.mrb[0].mxu0
      %1280 = vmatprep.mubr.bf16.mxu0 0
      %1281 = vmatmul.mubr.bf16.gmra.mrb[0].mxu0 %v1133
      %v1282 = vpop.f32.mrb[0].mxu0
      %v1283 = vadd.f32 %v991, %v1282
      %v1284 = vpop.f32.mrb[0].mxu0
      %v1285 = vpop.f32.mrb[0].mxu0
      %v1286 = vadd.f32 %v994, %v1285
      %v1287 = vpop.f32.mrb[0].mxu0
      %1288 = vmatprep.mubr.bf16.mxu0 0
      %1289 = vmatmul.mubr.bf16.gmra.mrb[0].mxu0 %v1136
      %v1290 = vpop.f32.mrb[0].mxu0
      %v1291 = vadd.f32 %v999, %v1290
      %v1292 = vpop.f32.mrb[0].mxu0
      %v1293 = vpop.f32.mrb[0].mxu0
      %v1294 = vadd.f32 %v1002, %v1293
      %v1295 = vpop.f32.mrb[0].mxu0
      %1296 = vmatprep.mubr.bf16.mxu0 0
      %1297 = vmatmul.mubr.bf16.gmra.mrb[0].mxu0 %v1139
      %v1298 = vpop.f32.mrb[0].mxu0
      %v1299 = vadd.f32 %v1007, %v1298
      %v1300 = vpop.f32.mrb[0].mxu0
      %v1301 = vpop.f32.mrb[0].mxu0
      %v1302 = vadd.f32 %v1010, %v1301
      %v1303 = vpop.f32.mrb[0].mxu0
      %1304 = vdwg.mxu0
      %vm1321 = vcmask 1042432
      %vm1322 = vcmask 1046532
      %vm1323 = vmor %vm1321, %vm1322
      %v1324 = vrot.slane %v313, 5
      %v1325 = vrot.slane %v1324, 4
      %v1326 = vrot.slane %v314, 5
      %v1327 = vsel %vm1323, %v1325, %v1326
      %v1328 = vrot.slane %v1326, 4
      %v1329 = vrot.slane %v315, 5
      %v1330 = vsel %vm1323, %v1328, %v1329
      %v1331 = vrot.slane %v316, 5
      %v1332 = vrot.slane %v1331, 4
      %v1333 = vrot.slane %v317, 5
      %v1334 = vsel %vm1323, %v1332, %v1333
      %v1335 = vrot.slane %v1333, 4
      %v1336 = vrot.slane %v318, 5
      %v1337 = vsel %vm1323, %v1335, %v1336
      %v1338 = vrot.slane %v319, 5
      %v1339 = vrot.slane %v1338, 4
      %v1340 = vrot.slane %v320, 5
      %v1341 = vsel %vm1323, %v1339, %v1340
      %v1342 = vrot.slane %v1340, 4
      %v1343 = vrot.slane %v321, 5
      %v1344 = vsel %vm1323, %v1342, %v1343
      %v1345 = vrot.slane %v322, 5
      %v1346 = vrot.slane %v1345, 4
      %v1347 = vrot.slane %v323, 5
      %v1348 = vsel %vm1323, %v1346, %v1347
      %v1349 = vrot.slane %v1347, 4
      %v1350 = vrot.slane %v324, 5
      %v1351 = vsel %vm1323, %v1349, %v1350
      %v1352 = vrot.slane %v325, 5
      %v1353 = vrot.slane %v1352, 4
      %v1354 = vrot.slane %v326, 5
      %v1355 = vsel %vm1323, %v1353, %v1354
      %v1356 = vrot.slane %v1354, 4
      %v1357 = vrot.slane %v327, 5
      %v1358 = vsel %vm1323, %v1356, %v1357
      %v1359 = vrot.slane %v328, 5
      %v1360 = vrot.slane %v1359, 4
      %v1361 = vrot.slane %v329, 5
      %v1362 = vsel %vm1323, %v1360, %v1361
      %v1363 = vrot.slane %v1361, 4
      %v1364 = vrot.slane %v330, 5
      %v1365 = vsel %vm1323, %v1363, %v1364
      %v1366 = vrot.slane %v331, 5
      %v1367 = vrot.slane %v1366, 4
      %v1368 = vrot.slane %v332, 5
      %v1369 = vsel %vm1323, %v1367, %v1368
      %v1370 = vrot.slane %v1368, 4
      %v1371 = vrot.slane %v333, 5
      %v1372 = vsel %vm1323, %v1370, %v1371
      %v1373 = vrot.slane %v334, 5
      %v1374 = vrot.slane %v1373, 4
      %v1375 = vrot.slane %v335, 5
      %v1376 = vsel %vm1323, %v1374, %v1375
      %v1377 = vrot.slane %v1375, 4
      %v1378 = vrot.slane %v336, 5
      %v1379 = vsel %vm1323, %v1377, %v1378
      %v1380 = vrot.slane %v337, 5
      %v1381 = vrot.slane %v1380, 4
      %v1382 = vrot.slane %v338, 5
      %v1383 = vsel %vm1323, %v1381, %v1382
      %v1384 = vrot.slane %v1382, 4
      %v1385 = vrot.slane %v339, 5
      %v1386 = vsel %vm1323, %v1384, %v1385
      %v1387 = vrot.slane %v340, 5
      %v1388 = vrot.slane %v1387, 4
      %v1389 = vrot.slane %v341, 5
      %v1390 = vsel %vm1323, %v1388, %v1389
      %v1391 = vrot.slane %v1389, 4
      %v1392 = vrot.slane %v342, 5
      %v1393 = vsel %vm1323, %v1391, %v1392
      %v1394 = vrot.slane %v343, 5
      %v1395 = vrot.slane %v1394, 4
      %v1396 = vrot.slane %v344, 5
      %v1397 = vsel %vm1323, %v1395, %v1396
      %v1398 = vrot.slane %v1396, 4
      %v1399 = vrot.slane %v345, 5
      %v1400 = vsel %vm1323, %v1398, %v1399
      %v1401 = vrot.slane %v346, 5
      %v1402 = vrot.slane %v1401, 4
      %v1403 = vrot.slane %v347, 5
      %v1404 = vsel %vm1323, %v1402, %v1403
      %v1405 = vrot.slane %v1403, 4
      %v1406 = vrot.slane %v348, 5
      %v1407 = vsel %vm1323, %v1405, %v1406
      %v1408 = vrot.slane %v349, 5
      %v1409 = vrot.slane %v1408, 4
      %v1410 = vrot.slane %v350, 5
      %v1411 = vsel %vm1323, %v1409, %v1410
      %v1412 = vrot.slane %v1410, 4
      %v1413 = vrot.slane %v351, 5
      %v1414 = vsel %vm1323, %v1412, %v1413
      %v1415 = vrot.slane %v352, 5
      %v1416 = vrot.slane %v1415, 4
      %v1417 = vrot.slane %v353, 5
      %v1418 = vsel %vm1323, %v1416, %v1417
      %v1419 = vrot.slane %v1417, 4
      %v1420 = vrot.slane %v354, 5
      %v1421 = vsel %vm1323, %v1419, %v1420
      %v1422 = vrot.slane %v355, 5
      %v1423 = vrot.slane %v1422, 4
      %v1424 = vrot.slane %v356, 5
      %v1425 = vsel %vm1323, %v1423, %v1424
      %v1426 = vrot.slane %v1424, 4
      %v1427 = vrot.slane %v357, 5
      %v1428 = vsel %vm1323, %v1426, %v1427
      %v1429 = vrot.slane %v358, 5
      %v1430 = vrot.slane %v1429, 4
      %v1431 = vrot.slane %v359, 5
      %v1432 = vsel %vm1323, %v1430, %v1431
      %v1433 = vrot.slane %v1431, 4
      %v1434 = vrot.slane %v360, 5
      %v1435 = vsel %vm1323, %v1433, %v1434
      %s1436 = scalar_lea.vmem %s273, 4
      %v1437 = vld [vmem:[%s1436] sm:$0x3]
      %v1438 = vunpack.c.l.b16 %v1327
      %v1439 = vunpack.c.l.b16 %v1330
      %v1440 = vunpack.c.l.b16 %v1334
      %v1441 = vunpack.c.l.b16 %v1337
      %v1442 = vunpack.c.l.b16 %v1341
      %v1443 = vunpack.c.l.b16 %v1344
      %v1444 = vunpack.c.l.b16 %v1348
      %v1445 = vunpack.c.l.b16 %v1351
      %v1446 = vunpack.c.l.b16 %v1355
      %v1447 = vunpack.c.l.b16 %v1358
      %v1448 = vunpack.c.l.b16 %v1362
      %v1449 = vunpack.c.l.b16 %v1365
      %v1450 = vunpack.c.l.b16 %v1369
      %v1451 = vunpack.c.l.b16 %v1372
      %v1452 = vunpack.c.l.b16 %v1376
      %v1453 = vunpack.c.l.b16 %v1379
      %v1454 = vunpack.c.l.b16 %v1383
      %v1455 = vunpack.c.l.b16 %v1386
      %v1456 = vunpack.c.l.b16 %v1390
      %v1457 = vunpack.c.l.b16 %v1393
      %v1458 = vunpack.c.l.b16 %v1397
      %v1459 = vunpack.c.l.b16 %v1400
      %v1460 = vunpack.c.l.b16 %v1404
      %v1461 = vunpack.c.l.b16 %v1407
      %v1462 = vunpack.c.l.b16 %v1411
      %v1463 = vunpack.c.l.b16 %v1414
      %v1464 = vunpack.c.l.b16 %v1418
      %v1465 = vunpack.c.l.b16 %v1421
      %v1466 = vunpack.c.l.b16 %v1425
      %v1467 = vunpack.c.l.b16 %v1428
      %v1468 = vunpack.c.l.b16 %v1432
      %v1469 = vunpack.c.l.b16 %v1435
      %v1470 = vpack.c.b16 %v1439, %v1438
      %v1471 = vpack.c.b16 %v1441, %v1440
      %v1472 = vpack.c.b16 %v1443, %v1442
      %v1473 = vpack.c.b16 %v1445, %v1444
      %v1474 = vpack.c.b16 %v1447, %v1446
      %v1475 = vpack.c.b16 %v1449, %v1448
      %v1476 = vpack.c.b16 %v1451, %v1450
      %v1477 = vpack.c.b16 %v1453, %v1452
      %v1478 = vpack.c.b16 %v1455, %v1454
      %v1479 = vpack.c.b16 %v1457, %v1456
      %v1480 = vpack.c.b16 %v1459, %v1458
      %v1481 = vpack.c.b16 %v1461, %v1460
      %v1482 = vpack.c.b16 %v1463, %v1462
      %v1483 = vpack.c.b16 %v1465, %v1464
      %v1484 = vpack.c.b16 %v1467, %v1466
      %v1485 = vpack.c.b16 %v1469, %v1468
      %v1487 = vsel %vm799, %v1470, 0
      %v1490 = vsel %vm799, %v1471, 0
      %v1493 = vsel %vm799, %v1472, 0
      %v1496 = vsel %vm799, %v1473, 0
      %v1499 = vsel %vm799, %v1474, 0
      %v1502 = vsel %vm799, %v1475, 0
      %v1505 = vsel %vm799, %v1476, 0
      %v1508 = vsel %vm799, %v1477, 0
      %v1511 = vsel %vm799, %v1478, 0
      %v1514 = vsel %vm799, %v1479, 0
      %v1517 = vsel %vm799, %v1480, 0
      %v1520 = vsel %vm799, %v1481, 0
      %v1523 = vsel %vm799, %v1482, 0
      %v1526 = vsel %vm799, %v1483, 0
      %v1529 = vsel %vm799, %v1484, 0
      %v1532 = vsel %vm799, %v1485, 0
      %v1535 = vsel %vm848, %v1437, 0
      %1537 = vmatprep.subr.bf16.mxu0 0
      %1538 = vmatpush1.bf16.msra.mxu0 %v1535
      %1539 = vmatprep.subr.bf16.mxu0 0
      %1540 = vmatpush1.bf16.msra.mxu0 0
      %1541 = vmatprep.subr.bf16.mxu0 0
      %1542 = vmatpush1.bf16.msra.mxu0 0
      %1543 = vmatprep.subr.bf16.mxu0 0
      %1544 = vmatpush1.bf16.msra.mxu0 0
      %1545 = vmatprep.subr.bf16.mxu0 0
      %1546 = vmatpush1.bf16.msra.mxu0 0
      %1547 = vmatprep.subr.bf16.mxu0 0
      %1548 = vmatpush1.bf16.msra.mxu0 0
      %1549 = vmatprep.subr.bf16.mxu0 0
      %1550 = vmatpush1.bf16.msra.mxu0 0
      %1551 = vmatprep.subr.bf16.mxu0 0
      %1552 = vmatpush1.bf16.msra.mxu0 0
      %1553 = vmatprep.subr.bf16.mxu0 0
      %1554 = vmatpush1.bf16.msra.mxu0 0
      %1555 = vmatprep.subr.bf16.mxu0 0
      %1556 = vmatpush1.bf16.msra.mxu0 0
      %1557 = vmatprep.subr.bf16.mxu0 0
      %1558 = vmatpush1.bf16.msra.mxu0 0
      %1559 = vmatprep.subr.bf16.mxu0 0
      %1560 = vmatpush1.bf16.msra.mxu0 0
      %1561 = vmatprep.subr.bf16.mxu0 0
      %1562 = vmatpush1.bf16.msra.mxu0 0
      %1563 = vmatprep.subr.bf16.mxu0 0
      %1564 = vmatpush1.bf16.msra.mxu0 0
      %1565 = vmatprep.subr.bf16.mxu0 0
      %1566 = vmatpush1.bf16.msra.mxu0 0
      %1567 = vmatprep.subr.bf16.mxu0 0
      %1568 = vmatpush1.bf16.msra.mxu0 0
      %1569 = vmatprep.mubr.bf16.mxu0 0
      %1570 = vmatmul.mubr.bf16.gmra.mrb[0].mxu0 %v1487
      %v1571 = vpop.f32.mrb[0].mxu0
      %v1572 = vadd.f32 0.0, %v1571
      %v1573 = vpop.f32.mrb[0].mxu0
      %v1574 = vpop.f32.mrb[0].mxu0
      %v1575 = vadd.f32 0.0, %v1574
      %v1576 = vpop.f32.mrb[0].mxu0
      %1577 = vmatprep.mubr.bf16.mxu0 0
      %1578 = vmatmul.mubr.bf16.gmra.mrb[0].mxu0 %v1490
      %v1579 = vpop.f32.mrb[0].mxu0
      %v1580 = vadd.f32 0.0, %v1579
      %v1581 = vpop.f32.mrb[0].mxu0
      %v1582 = vpop.f32.mrb[0].mxu0
      %v1583 = vadd.f32 0.0, %v1582
      %v1584 = vpop.f32.mrb[0].mxu0
      %1585 = vmatprep.mubr.bf16.mxu0 0
      %1586 = vmatmul.mubr.bf16.gmra.mrb[0].mxu0 %v1493
      %v1587 = vpop.f32.mrb[0].mxu0
      %v1588 = vadd.f32 0.0, %v1587
      %v1589 = vpop.f32.mrb[0].mxu0
      %v1590 = vpop.f32.mrb[0].mxu0
      %v1591 = vadd.f32 0.0, %v1590
      %v1592 = vpop.f32.mrb[0].mxu0
      %1593 = vmatprep.mubr.bf16.mxu0 0
      %1594 = vmatmul.mubr.bf16.gmra.mrb[0].mxu0 %v1496
      %v1595 = vpop.f32.mrb[0].mxu0
      %v1596 = vadd.f32 0.0, %v1595
      %v1597 = vpop.f32.mrb[0].mxu0
      %v1598 = vpop.f32.mrb[0].mxu0
      %v1599 = vadd.f32 0.0, %v1598
      %v1600 = vpop.f32.mrb[0].mxu0
      %1601 = vmatprep.mubr.bf16.mxu0 0
      %1602 = vmatmul.mubr.bf16.gmra.mrb[0].mxu0 %v1499
      %v1603 = vpop.f32.mrb[0].mxu0
      %v1604 = vadd.f32 0.0, %v1603
      %v1605 = vpop.f32.mrb[0].mxu0
      %v1606 = vpop.f32.mrb[0].mxu0
      %v1607 = vadd.f32 0.0, %v1606
      %v1608 = vpop.f32.mrb[0].mxu0
      %1609 = vmatprep.mubr.bf16.mxu0 0
      %1610 = vmatmul.mubr.bf16.gmra.mrb[0].mxu0 %v1502
      %v1611 = vpop.f32.mrb[0].mxu0
      %v1612 = vadd.f32 0.0, %v1611
      %v1613 = vpop.f32.mrb[0].mxu0
      %v1614 = vpop.f32.mrb[0].mxu0
      %v1615 = vadd.f32 0.0, %v1614
      %v1616 = vpop.f32.mrb[0].mxu0
      %1617 = vmatprep.mubr.bf16.mxu0 0
      %1618 = vmatmul.mubr.bf16.gmra.mrb[0].mxu0 %v1505
      %v1619 = vpop.f32.mrb[0].mxu0
      %v1620 = vadd.f32 0.0, %v1619
      %v1621 = vpop.f32.mrb[0].mxu0
      %v1622 = vpop.f32.mrb[0].mxu0
      %v1623 = vadd.f32 0.0, %v1622
      %v1624 = vpop.f32.mrb[0].mxu0
      %1625 = vmatprep.mubr.bf16.mxu0 0
      %1626 = vmatmul.mubr.bf16.gmra.mrb[0].mxu0 %v1508
      %v1627 = vpop.f32.mrb[0].mxu0
      %v1628 = vadd.f32 0.0, %v1627
      %v1629 = vpop.f32.mrb[0].mxu0
      %v1630 = vpop.f32.mrb[0].mxu0
      %v1631 = vadd.f32 0.0, %v1630
      %v1632 = vpop.f32.mrb[0].mxu0
      %1633 = vmatprep.mubr.bf16.mxu0 0
      %1634 = vmatmul.mubr.bf16.gmra.mrb[0].mxu0 %v1511
      %v1635 = vpop.f32.mrb[0].mxu0
      %v1636 = vadd.f32 0.0, %v1635
      %v1637 = vpop.f32.mrb[0].mxu0
      %v1638 = vpop.f32.mrb[0].mxu0
      %v1639 = vadd.f32 0.0, %v1638
      %v1640 = vpop.f32.mrb[0].mxu0
      %1641 = vmatprep.mubr.bf16.mxu0 0
      %1642 = vmatmul.mubr.bf16.gmra.mrb[0].mxu0 %v1514
      %v1643 = vpop.f32.mrb[0].mxu0
      %v1644 = vadd.f32 0.0, %v1643
      %v1645 = vpop.f32.mrb[0].mxu0
      %v1646 = vpop.f32.mrb[0].mxu0
      %v1647 = vadd.f32 0.0, %v1646
      %v1648 = vpop.f32.mrb[0].mxu0
      %1649 = vmatprep.mubr.bf16.mxu0 0
      %1650 = vmatmul.mubr.bf16.gmra.mrb[0].mxu0 %v1517
      %v1651 = vpop.f32.mrb[0].mxu0
      %v1652 = vadd.f32 0.0, %v1651
      %v1653 = vpop.f32.mrb[0].mxu0
      %v1654 = vpop.f32.mrb[0].mxu0
      %v1655 = vadd.f32 0.0, %v1654
      %v1656 = vpop.f32.mrb[0].mxu0
      %1657 = vmatprep.mubr.bf16.mxu0 0
      %1658 = vmatmul.mubr.bf16.gmra.mrb[0].mxu0 %v1520
      %v1659 = vpop.f32.mrb[0].mxu0
      %v1660 = vadd.f32 0.0, %v1659
      %v1661 = vpop.f32.mrb[0].mxu0
      %v1662 = vpop.f32.mrb[0].mxu0
      %v1663 = vadd.f32 0.0, %v1662
      %v1664 = vpop.f32.mrb[0].mxu0
      %1665 = vmatprep.mubr.bf16.mxu0 0
      %1666 = vmatmul.mubr.bf16.gmra.mrb[0].mxu0 %v1523
      %v1667 = vpop.f32.mrb[0].mxu0
      %v1668 = vadd.f32 0.0, %v1667
      %v1669 = vpop.f32.mrb[0].mxu0
      %v1670 = vpop.f32.mrb[0].mxu0
      %v1671 = vadd.f32 0.0, %v1670
      %v1672 = vpop.f32.mrb[0].mxu0
      %1673 = vmatprep.mubr.bf16.mxu0 0
      %1674 = vmatmul.mubr.bf16.gmra.mrb[0].mxu0 %v1526
      %v1675 = vpop.f32.mrb[0].mxu0
      %v1676 = vadd.f32 0.0, %v1675
      %v1677 = vpop.f32.mrb[0].mxu0
      %v1678 = vpop.f32.mrb[0].mxu0
      %v1679 = vadd.f32 0.0, %v1678
      %v1680 = vpop.f32.mrb[0].mxu0
      %1681 = vmatprep.mubr.bf16.mxu0 0
      %1682 = vmatmul.mubr.bf16.gmra.mrb[0].mxu0 %v1529
      %v1683 = vpop.f32.mrb[0].mxu0
      %v1684 = vadd.f32 0.0, %v1683
      %v1685 = vpop.f32.mrb[0].mxu0
      %v1686 = vpop.f32.mrb[0].mxu0
      %v1687 = vadd.f32 0.0, %v1686
      %v1688 = vpop.f32.mrb[0].mxu0
      %1689 = vmatprep.mubr.bf16.mxu0 0
      %1690 = vmatmul.mubr.bf16.gmra.mrb[0].mxu0 %v1532
      %v1691 = vpop.f32.mrb[0].mxu0
      %v1692 = vadd.f32 0.0, %v1691
      %v1693 = vpop.f32.mrb[0].mxu0
      %v1694 = vpop.f32.mrb[0].mxu0
      %v1695 = vadd.f32 0.0, %v1694
      %v1696 = vpop.f32.mrb[0].mxu0
      %1697 = vdwg.mxu0
      %v1698 = vadd.f32 %v1179, %v1572
      %v1699 = vadd.f32 %v1182, %v1575
      %v1700 = vadd.f32 %v1187, %v1580
      %v1701 = vadd.f32 %v1190, %v1583
      %v1702 = vadd.f32 %v1195, %v1588
      %v1703 = vadd.f32 %v1198, %v1591
      %v1704 = vadd.f32 %v1203, %v1596
      %v1705 = vadd.f32 %v1206, %v1599
      %v1706 = vadd.f32 %v1211, %v1604
      %v1707 = vadd.f32 %v1214, %v1607
      %v1708 = vadd.f32 %v1219, %v1612
      %v1709 = vadd.f32 %v1222, %v1615
      %v1710 = vadd.f32 %v1227, %v1620
      %v1711 = vadd.f32 %v1230, %v1623
      %v1712 = vadd.f32 %v1235, %v1628
      %v1713 = vadd.f32 %v1238, %v1631
      %v1714 = vadd.f32 %v1243, %v1636
      %v1715 = vadd.f32 %v1246, %v1639
      %v1716 = vadd.f32 %v1251, %v1644
      %v1717 = vadd.f32 %v1254, %v1647
      %v1718 = vadd.f32 %v1259, %v1652
      %v1719 = vadd.f32 %v1262, %v1655
      %v1720 = vadd.f32 %v1267, %v1660
      %v1721 = vadd.f32 %v1270, %v1663
      %v1722 = vadd.f32 %v1275, %v1668
      %v1723 = vadd.f32 %v1278, %v1671
      %v1724 = vadd.f32 %v1283, %v1676
      %v1725 = vadd.f32 %v1286, %v1679
      %v1726 = vadd.f32 %v1291, %v1684
      %v1727 = vadd.f32 %v1294, %v1687
      %v1728 = vadd.f32 %v1299, %v1692
      %v1729 = vadd.f32 %v1302, %v1695
      %s1730 = sadd.s32 %s309, 1
      %s1731 = smul.u32 %s1730, 3
      %s1732 = smul.addr %s1731, 4
      %s1733 = scalar_lea.vmem %s269, %s1732
      %v1734 = vld [vmem:[%s1733] sm:$0xf]
      %v1735 = vld [vmem:[%s1733 + $0x4] sm:$0xf]
      %v1736 = vld [vmem:[%s1733 + $0x8] sm:$0x1]
      %v1737 = vld [vmem:[%s1733 + $0xc] sm:$0xf]
      %v1738 = vld [vmem:[%s1733 + $0x10] sm:$0xf]
      %v1739 = vld [vmem:[%s1733 + $0x14] sm:$0x1]
      %v1740 = vld [vmem:[%s1733 + $0x18] sm:$0xf]
      %v1741 = vld [vmem:[%s1733 + $0x1c] sm:$0xf]
      %v1742 = vld [vmem:[%s1733 + $0x20] sm:$0x1]
      %v1743 = vld [vmem:[%s1733 + $0x24] sm:$0xf]
      %v1744 = vld [vmem:[%s1733 + $0x28] sm:$0xf]
      %v1745 = vld [vmem:[%s1733 + $0x2c] sm:$0x1]
      %v1746 = vld [vmem:[%s1733 + $0x30] sm:$0xf]
      %v1747 = vld [vmem:[%s1733 + $0x34] sm:$0xf]
      %v1748 = vld [vmem:[%s1733 + $0x38] sm:$0x1]
      %v1749 = vld [vmem:[%s1733 + $0x3c] sm:$0xf]
      %v1750 = vld [vmem:[%s1733 + $0x40] sm:$0xf]
      %v1751 = vld [vmem:[%s1733 + $0x44] sm:$0x1]
      %v1752 = vld [vmem:[%s1733 + $0x48] sm:$0xf]
      %v1753 = vld [vmem:[%s1733 + $0x4c] sm:$0xf]
      %v1754 = vld [vmem:[%s1733 + $0x50] sm:$0x1]
      %v1755 = vld [vmem:[%s1733 + $0x54] sm:$0xf]
      %v1756 = vld [vmem:[%s1733 + $0x58] sm:$0xf]
      %v1757 = vld [vmem:[%s1733 + $0x5c] sm:$0x1]
      %v1758 = vld [vmem:[%s1733 + $0x60] sm:$0xf]
      %v1759 = vld [vmem:[%s1733 + $0x64] sm:$0xf]
      %v1760 = vld [vmem:[%s1733 + $0x68] sm:$0x1]
      %v1761 = vld [vmem:[%s1733 + $0x6c] sm:$0xf]
      %v1762 = vld [vmem:[%s1733 + $0x70] sm:$0xf]
      %v1763 = vld [vmem:[%s1733 + $0x74] sm:$0x1]
      %v1764 = vld [vmem:[%s1733 + $0x78] sm:$0xf]
      %v1765 = vld [vmem:[%s1733 + $0x7c] sm:$0xf]
      %v1766 = vld [vmem:[%s1733 + $0x80] sm:$0x1]
      %v1767 = vld [vmem:[%s1733 + $0x84] sm:$0xf]
      %v1768 = vld [vmem:[%s1733 + $0x88] sm:$0xf]
      %v1769 = vld [vmem:[%s1733 + $0x8c] sm:$0x1]
      %v1770 = vld [vmem:[%s1733 + $0x90] sm:$0xf]
      %v1771 = vld [vmem:[%s1733 + $0x94] sm:$0xf]
      %v1772 = vld [vmem:[%s1733 + $0x98] sm:$0x1]
      %v1773 = vld [vmem:[%s1733 + $0x9c] sm:$0xf]
      %v1774 = vld [vmem:[%s1733 + $0xa0] sm:$0xf]
      %v1775 = vld [vmem:[%s1733 + $0xa4] sm:$0x1]
      %v1776 = vld [vmem:[%s1733 + $0xa8] sm:$0xf]
      %v1777 = vld [vmem:[%s1733 + $0xac] sm:$0xf]
      %v1778 = vld [vmem:[%s1733 + $0xb0] sm:$0x1]
      %v1779 = vld [vmem:[%s1733 + $0xb4] sm:$0xf]
      %v1780 = vld [vmem:[%s1733 + $0xb8] sm:$0xf]
      %v1781 = vld [vmem:[%s1733 + $0xbc] sm:$0x1]
      %s1782 = scalar_lea.vmem %s273, 6
      %v1783 = vld [vmem:[%s1782] sm:$0x3]
      %v1816 = vunpack.c.l.b16 %v1734
      %v1817 = vunpack.c.l.b16 %v1735
      %v1818 = vunpack.c.l.b16 %v1737
      %v1819 = vunpack.c.l.b16 %v1738
      %v1820 = vunpack.c.l.b16 %v1740
      %v1821 = vunpack.c.l.b16 %v1741
      %v1822 = vunpack.c.l.b16 %v1743
      %v1823 = vunpack.c.l.b16 %v1744
      %v1824 = vunpack.c.l.b16 %v1746
      %v1825 = vunpack.c.l.b16 %v1747
      %v1826 = vunpack.c.l.b16 %v1749
      %v1827 = vunpack.c.l.b16 %v1750
      %v1828 = vunpack.c.l.b16 %v1752
      %v1829 = vunpack.c.l.b16 %v1753
      %v1830 = vunpack.c.l.b16 %v1755
      %v1831 = vunpack.c.l.b16 %v1756
      %v1832 = vunpack.c.l.b16 %v1758
      %v1833 = vunpack.c.l.b16 %v1759
      %v1834 = vunpack.c.l.b16 %v1761
      %v1835 = vunpack.c.l.b16 %v1762
      %v1836 = vunpack.c.l.b16 %v1764
      %v1837 = vunpack.c.l.b16 %v1765
      %v1838 = vunpack.c.l.b16 %v1767
      %v1839 = vunpack.c.l.b16 %v1768
      %v1840 = vunpack.c.l.b16 %v1770
      %v1841 = vunpack.c.l.b16 %v1771
      %v1842 = vunpack.c.l.b16 %v1773
      %v1843 = vunpack.c.l.b16 %v1774
      %v1844 = vunpack.c.l.b16 %v1776
      %v1845 = vunpack.c.l.b16 %v1777
      %v1846 = vunpack.c.l.b16 %v1779
      %v1847 = vunpack.c.l.b16 %v1780
      %v1848 = vpack.c.b16 %v1817, %v1816
      %v1849 = vpack.c.b16 %v1819, %v1818
      %v1850 = vpack.c.b16 %v1821, %v1820
      %v1851 = vpack.c.b16 %v1823, %v1822
      %v1852 = vpack.c.b16 %v1825, %v1824
      %v1853 = vpack.c.b16 %v1827, %v1826
      %v1854 = vpack.c.b16 %v1829, %v1828
      %v1855 = vpack.c.b16 %v1831, %v1830
      %v1856 = vpack.c.b16 %v1833, %v1832
      %v1857 = vpack.c.b16 %v1835, %v1834
      %v1858 = vpack.c.b16 %v1837, %v1836
      %v1859 = vpack.c.b16 %v1839, %v1838
      %v1860 = vpack.c.b16 %v1841, %v1840
      %v1861 = vpack.c.b16 %v1843, %v1842
      %v1862 = vpack.c.b16 %v1845, %v1844
      %v1863 = vpack.c.b16 %v1847, %v1846
      %v1865 = vsel %vm799, %v1848, 0
      %v1868 = vsel %vm799, %v1849, 0
      %v1871 = vsel %vm799, %v1850, 0
      %v1874 = vsel %vm799, %v1851, 0
      %v1877 = vsel %vm799, %v1852, 0
      %v1880 = vsel %vm799, %v1853, 0
      %v1883 = vsel %vm799, %v1854, 0
      %v1886 = vsel %vm799, %v1855, 0
      %v1889 = vsel %vm799, %v1856, 0
      %v1892 = vsel %vm799, %v1857, 0
      %v1895 = vsel %vm799, %v1858, 0
      %v1898 = vsel %vm799, %v1859, 0
      %v1901 = vsel %vm799, %v1860, 0
      %v1904 = vsel %vm799, %v1861, 0
      %v1907 = vsel %vm799, %v1862, 0
      %v1910 = vsel %vm799, %v1863, 0
      %v1913 = vsel %vm848, %v1783, 0
      %1915 = vmatprep.subr.bf16.mxu0 0
      %1916 = vmatpush1.bf16.msra.mxu0 %v1913
      %1917 = vmatprep.subr.bf16.mxu0 0
      %1918 = vmatpush1.bf16.msra.mxu0 0
      %1919 = vmatprep.subr.bf16.mxu0 0
      %1920 = vmatpush1.bf16.msra.mxu0 0
      %1921 = vmatprep.subr.bf16.mxu0 0
      %1922 = vmatpush1.bf16.msra.mxu0 0
      %1923 = vmatprep.subr.bf16.mxu0 0
      %1924 = vmatpush1.bf16.msra.mxu0 0
      %1925 = vmatprep.subr.bf16.mxu0 0
      %1926 = vmatpush1.bf16.msra.mxu0 0
      %1927 = vmatprep.subr.bf16.mxu0 0
      %1928 = vmatpush1.bf16.msra.mxu0 0
      %1929 = vmatprep.subr.bf16.mxu0 0
      %1930 = vmatpush1.bf16.msra.mxu0 0
      %1931 = vmatprep.subr.bf16.mxu0 0
      %1932 = vmatpush1.bf16.msra.mxu0 0
      %1933 = vmatprep.subr.bf16.mxu0 0
      %1934 = vmatpush1.bf16.msra.mxu0 0
      %1935 = vmatprep.subr.bf16.mxu0 0
      %1936 = vmatpush1.bf16.msra.mxu0 0
      %1937 = vmatprep.subr.bf16.mxu0 0
      %1938 = vmatpush1.bf16.msra.mxu0 0
      %1939 = vmatprep.subr.bf16.mxu0 0
      %1940 = vmatpush1.bf16.msra.mxu0 0
      %1941 = vmatprep.subr.bf16.mxu0 0
      %1942 = vmatpush1.bf16.msra.mxu0 0
      %1943 = vmatprep.subr.bf16.mxu0 0
      %1944 = vmatpush1.bf16.msra.mxu0 0
      %1945 = vmatprep.subr.bf16.mxu0 0
      %1946 = vmatpush1.bf16.msra.mxu0 0
      %1947 = vmatprep.mubr.bf16.mxu0 0
      %1948 = vmatmul.mubr.bf16.gmra.mrb[0].mxu0 %v1865
      %v1949 = vpop.f32.mrb[0].mxu0
      %v1950 = vadd.f32 0.0, %v1949
      %v1951 = vpop.f32.mrb[0].mxu0
      %v1952 = vpop.f32.mrb[0].mxu0
      %v1953 = vadd.f32 0.0, %v1952
      %v1954 = vpop.f32.mrb[0].mxu0
      %1955 = vmatprep.mubr.bf16.mxu0 0
      %1956 = vmatmul.mubr.bf16.gmra.mrb[0].mxu0 %v1868
      %v1957 = vpop.f32.mrb[0].mxu0
      %v1958 = vadd.f32 0.0, %v1957
      %v1959 = vpop.f32.mrb[0].mxu0
      %v1960 = vpop.f32.mrb[0].mxu0
      %v1961 = vadd.f32 0.0, %v1960
      %v1962 = vpop.f32.mrb[0].mxu0
      %1963 = vmatprep.mubr.bf16.mxu0 0
      %1964 = vmatmul.mubr.bf16.gmra.mrb[0].mxu0 %v1871
      %v1965 = vpop.f32.mrb[0].mxu0
      %v1966 = vadd.f32 0.0, %v1965
      %v1967 = vpop.f32.mrb[0].mxu0
      %v1968 = vpop.f32.mrb[0].mxu0
      %v1969 = vadd.f32 0.0, %v1968
      %v1970 = vpop.f32.mrb[0].mxu0
      %1971 = vmatprep.mubr.bf16.mxu0 0
      %1972 = vmatmul.mubr.bf16.gmra.mrb[0].mxu0 %v1874
      %v1973 = vpop.f32.mrb[0].mxu0
      %v1974 = vadd.f32 0.0, %v1973
      %v1975 = vpop.f32.mrb[0].mxu0
      %v1976 = vpop.f32.mrb[0].mxu0
      %v1977 = vadd.f32 0.0, %v1976
      %v1978 = vpop.f32.mrb[0].mxu0
      %1979 = vmatprep.mubr.bf16.mxu0 0
      %1980 = vmatmul.mubr.bf16.gmra.mrb[0].mxu0 %v1877
      %v1981 = vpop.f32.mrb[0].mxu0
      %v1982 = vadd.f32 0.0, %v1981
      %v1983 = vpop.f32.mrb[0].mxu0
      %v1984 = vpop.f32.mrb[0].mxu0
      %v1985 = vadd.f32 0.0, %v1984
      %v1986 = vpop.f32.mrb[0].mxu0
      %1987 = vmatprep.mubr.bf16.mxu0 0
      %1988 = vmatmul.mubr.bf16.gmra.mrb[0].mxu0 %v1880
      %v1989 = vpop.f32.mrb[0].mxu0
      %v1990 = vadd.f32 0.0, %v1989
      %v1991 = vpop.f32.mrb[0].mxu0
      %v1992 = vpop.f32.mrb[0].mxu0
      %v1993 = vadd.f32 0.0, %v1992
      %v1994 = vpop.f32.mrb[0].mxu0
      %1995 = vmatprep.mubr.bf16.mxu0 0
      %1996 = vmatmul.mubr.bf16.gmra.mrb[0].mxu0 %v1883
      %v1997 = vpop.f32.mrb[0].mxu0
      %v1998 = vadd.f32 0.0, %v1997
      %v1999 = vpop.f32.mrb[0].mxu0
      %v2000 = vpop.f32.mrb[0].mxu0
      %v2001 = vadd.f32 0.0, %v2000
      %v2002 = vpop.f32.mrb[0].mxu0
      %2003 = vmatprep.mubr.bf16.mxu0 0
      %2004 = vmatmul.mubr.bf16.gmra.mrb[0].mxu0 %v1886
      %v2005 = vpop.f32.mrb[0].mxu0
      %v2006 = vadd.f32 0.0, %v2005
      %v2007 = vpop.f32.mrb[0].mxu0
      %v2008 = vpop.f32.mrb[0].mxu0
      %v2009 = vadd.f32 0.0, %v2008
      %v2010 = vpop.f32.mrb[0].mxu0
      %2011 = vmatprep.mubr.bf16.mxu0 0
      %2012 = vmatmul.mubr.bf16.gmra.mrb[0].mxu0 %v1889
      %v2013 = vpop.f32.mrb[0].mxu0
      %v2014 = vadd.f32 0.0, %v2013
      %v2015 = vpop.f32.mrb[0].mxu0
      %v2016 = vpop.f32.mrb[0].mxu0
      %v2017 = vadd.f32 0.0, %v2016
      %v2018 = vpop.f32.mrb[0].mxu0
      %2019 = vmatprep.mubr.bf16.mxu0 0
      %2020 = vmatmul.mubr.bf16.gmra.mrb[0].mxu0 %v1892
      %v2021 = vpop.f32.mrb[0].mxu0
      %v2022 = vadd.f32 0.0, %v2021
      %v2023 = vpop.f32.mrb[0].mxu0
      %v2024 = vpop.f32.mrb[0].mxu0
      %v2025 = vadd.f32 0.0, %v2024
      %v2026 = vpop.f32.mrb[0].mxu0
      %2027 = vmatprep.mubr.bf16.mxu0 0
      %2028 = vmatmul.mubr.bf16.gmra.mrb[0].mxu0 %v1895
      %v2029 = vpop.f32.mrb[0].mxu0
      %v2030 = vadd.f32 0.0, %v2029
      %v2031 = vpop.f32.mrb[0].mxu0
      %v2032 = vpop.f32.mrb[0].mxu0
      %v2033 = vadd.f32 0.0, %v2032
      %v2034 = vpop.f32.mrb[0].mxu0
      %2035 = vmatprep.mubr.bf16.mxu0 0
      %2036 = vmatmul.mubr.bf16.gmra.mrb[0].mxu0 %v1898
      %v2037 = vpop.f32.mrb[0].mxu0
      %v2038 = vadd.f32 0.0, %v2037
      %v2039 = vpop.f32.mrb[0].mxu0
      %v2040 = vpop.f32.mrb[0].mxu0
      %v2041 = vadd.f32 0.0, %v2040
      %v2042 = vpop.f32.mrb[0].mxu0
      %2043 = vmatprep.mubr.bf16.mxu0 0
      %2044 = vmatmul.mubr.bf16.gmra.mrb[0].mxu0 %v1901
      %v2045 = vpop.f32.mrb[0].mxu0
      %v2046 = vadd.f32 0.0, %v2045
      %v2047 = vpop.f32.mrb[0].mxu0
      %v2048 = vpop.f32.mrb[0].mxu0
      %v2049 = vadd.f32 0.0, %v2048
      %v2050 = vpop.f32.mrb[0].mxu0
      %2051 = vmatprep.mubr.bf16.mxu0 0
      %2052 = vmatmul.mubr.bf16.gmra.mrb[0].mxu0 %v1904
      %v2053 = vpop.f32.mrb[0].mxu0
      %v2054 = vadd.f32 0.0, %v2053
      %v2055 = vpop.f32.mrb[0].mxu0
      %v2056 = vpop.f32.mrb[0].mxu0
      %v2057 = vadd.f32 0.0, %v2056
      %v2058 = vpop.f32.mrb[0].mxu0
      %2059 = vmatprep.mubr.bf16.mxu0 0
      %2060 = vmatmul.mubr.bf16.gmra.mrb[0].mxu0 %v1907
      %v2061 = vpop.f32.mrb[0].mxu0
      %v2062 = vadd.f32 0.0, %v2061
      %v2063 = vpop.f32.mrb[0].mxu0
      %v2064 = vpop.f32.mrb[0].mxu0
      %v2065 = vadd.f32 0.0, %v2064
      %v2066 = vpop.f32.mrb[0].mxu0
      %2067 = vmatprep.mubr.bf16.mxu0 0
      %2068 = vmatmul.mubr.bf16.gmra.mrb[0].mxu0 %v1910
      %v2069 = vpop.f32.mrb[0].mxu0
      %v2070 = vadd.f32 0.0, %v2069
      %v2071 = vpop.f32.mrb[0].mxu0
      %v2072 = vpop.f32.mrb[0].mxu0
      %v2073 = vadd.f32 0.0, %v2072
      %v2074 = vpop.f32.mrb[0].mxu0
      %2075 = vdwg.mxu0
      %v2076 = vadd.f32 %v1698, %v1950
      %v2077 = vadd.f32 %v1699, %v1953
      %v2078 = vadd.f32 %v1700, %v1958
      %v2079 = vadd.f32 %v1701, %v1961
      %v2080 = vadd.f32 %v1702, %v1966
      %v2081 = vadd.f32 %v1703, %v1969
      %v2082 = vadd.f32 %v1704, %v1974
      %v2083 = vadd.f32 %v1705, %v1977
      %v2084 = vadd.f32 %v1706, %v1982
      %v2085 = vadd.f32 %v1707, %v1985
      %v2086 = vadd.f32 %v1708, %v1990
      %v2087 = vadd.f32 %v1709, %v1993
      %v2088 = vadd.f32 %v1710, %v1998
      %v2089 = vadd.f32 %v1711, %v2001
      %v2090 = vadd.f32 %v1712, %v2006
      %v2091 = vadd.f32 %v1713, %v2009
      %v2092 = vadd.f32 %v1714, %v2014
      %v2093 = vadd.f32 %v1715, %v2017
      %v2094 = vadd.f32 %v1716, %v2022
      %v2095 = vadd.f32 %v1717, %v2025
      %v2096 = vadd.f32 %v1718, %v2030
      %v2097 = vadd.f32 %v1719, %v2033
      %v2098 = vadd.f32 %v1720, %v2038
      %v2099 = vadd.f32 %v1721, %v2041
      %v2100 = vadd.f32 %v1722, %v2046
      %v2101 = vadd.f32 %v1723, %v2049
      %v2102 = vadd.f32 %v1724, %v2054
      %v2103 = vadd.f32 %v1725, %v2057
      %v2104 = vadd.f32 %v1726, %v2062
      %v2105 = vadd.f32 %v1727, %v2065
      %v2106 = vadd.f32 %v1728, %v2070
      %v2107 = vadd.f32 %v1729, %v2073
      %v2109 = vshrl.u32 %v1734, 16
      %v2111 = vrot.slane %v2109, 4
      %v2112 = vshll.u32 %v1734, 16
      %v2114 = vrot.slane %v2112, 5
      %v2115 = vor.u32 %v2111, %v2114
      %v2116 = vrot.slane %v2115, 4
      %v2118 = vshll.u32 %v1735, 16
      %v2120 = vrot.slane %v2118, 5
      %v2121 = vsel %vm364, %v2116, %v2120
      %v2122 = vshrl.u32 %v1735, 16
      %v2124 = vrot.slane %v2122, 4
      %v2125 = vor.u32 %v2124, %v2120
      %v2126 = vrot.slane %v2125, 4
      %v2128 = vshll.u32 %v1736, 16
      %v2130 = vrot.slane %v2128, 5
      %v2131 = vsel %vm364, %v2126, %v2130
      %v2133 = vshrl.u32 %v1737, 16
      %v2135 = vrot.slane %v2133, 4
      %v2136 = vshll.u32 %v1737, 16
      %v2138 = vrot.slane %v2136, 5
      %v2139 = vor.u32 %v2135, %v2138
      %v2140 = vrot.slane %v2139, 4
      %v2142 = vshll.u32 %v1738, 16
      %v2144 = vrot.slane %v2142, 5
      %v2145 = vsel %vm364, %v2140, %v2144
      %v2146 = vshrl.u32 %v1738, 16
      %v2148 = vrot.slane %v2146, 4
      %v2149 = vor.u32 %v2148, %v2144
      %v2150 = vrot.slane %v2149, 4
      %v2152 = vshll.u32 %v1739, 16
      %v2154 = vrot.slane %v2152, 5
      %v2155 = vsel %vm364, %v2150, %v2154
      %v2157 = vshrl.u32 %v1740, 16
      %v2159 = vrot.slane %v2157, 4
      %v2160 = vshll.u32 %v1740, 16
      %v2162 = vrot.slane %v2160, 5
      %v2163 = vor.u32 %v2159, %v2162
      %v2164 = vrot.slane %v2163, 4
      %v2166 = vshll.u32 %v1741, 16
      %v2168 = vrot.slane %v2166, 5
      %v2169 = vsel %vm364, %v2164, %v2168
      %v2170 = vshrl.u32 %v1741, 16
      %v2172 = vrot.slane %v2170, 4
      %v2173 = vor.u32 %v2172, %v2168
      %v2174 = vrot.slane %v2173, 4
      %v2176 = vshll.u32 %v1742, 16
      %v2178 = vrot.slane %v2176, 5
      %v2179 = vsel %vm364, %v2174, %v2178
      %v2181 = vshrl.u32 %v1743, 16
      %v2183 = vrot.slane %v2181, 4
      %v2184 = vshll.u32 %v1743, 16
      %v2186 = vrot.slane %v2184, 5
      %v2187 = vor.u32 %v2183, %v2186
      %v2188 = vrot.slane %v2187, 4
      %v2190 = vshll.u32 %v1744, 16
      %v2192 = vrot.slane %v2190, 5
      %v2193 = vsel %vm364, %v2188, %v2192
      %v2194 = vshrl.u32 %v1744, 16
      %v2196 = vrot.slane %v2194, 4
      %v2197 = vor.u32 %v2196, %v2192
      %v2198 = vrot.slane %v2197, 4
      %v2200 = vshll.u32 %v1745, 16
      %v2202 = vrot.slane %v2200, 5
      %v2203 = vsel %vm364, %v2198, %v2202
      %v2205 = vshrl.u32 %v1746, 16
      %v2207 = vrot.slane %v2205, 4
      %v2208 = vshll.u32 %v1746, 16
      %v2210 = vrot.slane %v2208, 5
      %v2211 = vor.u32 %v2207, %v2210
      %v2212 = vrot.slane %v2211, 4
      %v2214 = vshll.u32 %v1747, 16
      %v2216 = vrot.slane %v2214, 5
      %v2217 = vsel %vm364, %v2212, %v2216
      %v2218 = vshrl.u32 %v1747, 16
      %v2220 = vrot.slane %v2218, 4
      %v2221 = vor.u32 %v2220, %v2216
      %v2222 = vrot.slane %v2221, 4
      %v2224 = vshll.u32 %v1748, 16
      %v2226 = vrot.slane %v2224, 5
      %v2227 = vsel %vm364, %v2222, %v2226
      %v2229 = vshrl.u32 %v1749, 16
      %v2231 = vrot.slane %v2229, 4
      %v2232 = vshll.u32 %v1749, 16
      %v2234 = vrot.slane %v2232, 5
      %v2235 = vor.u32 %v2231, %v2234
      %v2236 = vrot.slane %v2235, 4
      %v2238 = vshll.u32 %v1750, 16
      %v2240 = vrot.slane %v2238, 5
      %v2241 = vsel %vm364, %v2236, %v2240
      %v2242 = vshrl.u32 %v1750, 16
      %v2244 = vrot.slane %v2242, 4
      %v2245 = vor.u32 %v2244, %v2240
      %v2246 = vrot.slane %v2245, 4
      %v2248 = vshll.u32 %v1751, 16
      %v2250 = vrot.slane %v2248, 5
      %v2251 = vsel %vm364, %v2246, %v2250
      %v2253 = vshrl.u32 %v1752, 16
      %v2255 = vrot.slane %v2253, 4
      %v2256 = vshll.u32 %v1752, 16
      %v2258 = vrot.slane %v2256, 5
      %v2259 = vor.u32 %v2255, %v2258
      %v2260 = vrot.slane %v2259, 4
      %v2262 = vshll.u32 %v1753, 16
      %v2264 = vrot.slane %v2262, 5
      %v2265 = vsel %vm364, %v2260, %v2264
      %v2266 = vshrl.u32 %v1753, 16
      %v2268 = vrot.slane %v2266, 4
      %v2269 = vor.u32 %v2268, %v2264
      %v2270 = vrot.slane %v2269, 4
      %v2272 = vshll.u32 %v1754, 16
      %v2274 = vrot.slane %v2272, 5
      %v2275 = vsel %vm364, %v2270, %v2274
      %v2277 = vshrl.u32 %v1755, 16
      %v2279 = vrot.slane %v2277, 4
      %v2280 = vshll.u32 %v1755, 16
      %v2282 = vrot.slane %v2280, 5
      %v2283 = vor.u32 %v2279, %v2282
      %v2284 = vrot.slane %v2283, 4
      %v2286 = vshll.u32 %v1756, 16
      %v2288 = vrot.slane %v2286, 5
      %v2289 = vsel %vm364, %v2284, %v2288
      %v2290 = vshrl.u32 %v1756, 16
      %v2292 = vrot.slane %v2290, 4
      %v2293 = vor.u32 %v2292, %v2288
      %v2294 = vrot.slane %v2293, 4
      %v2296 = vshll.u32 %v1757, 16
      %v2298 = vrot.slane %v2296, 5
      %v2299 = vsel %vm364, %v2294, %v2298
      %v2301 = vshrl.u32 %v1758, 16
      %v2303 = vrot.slane %v2301, 4
      %v2304 = vshll.u32 %v1758, 16
      %v2306 = vrot.slane %v2304, 5
      %v2307 = vor.u32 %v2303, %v2306
      %v2308 = vrot.slane %v2307, 4
      %v2310 = vshll.u32 %v1759, 16
      %v2312 = vrot.slane %v2310, 5
      %v2313 = vsel %vm364, %v2308, %v2312
      %v2314 = vshrl.u32 %v1759, 16
      %v2316 = vrot.slane %v2314, 4
      %v2317 = vor.u32 %v2316, %v2312
      %v2318 = vrot.slane %v2317, 4
      %v2320 = vshll.u32 %v1760, 16
      %v2322 = vrot.slane %v2320, 5
      %v2323 = vsel %vm364, %v2318, %v2322
      %v2325 = vshrl.u32 %v1761, 16
      %v2327 = vrot.slane %v2325, 4
      %v2328 = vshll.u32 %v1761, 16
      %v2330 = vrot.slane %v2328, 5
      %v2331 = vor.u32 %v2327, %v2330
      %v2332 = vrot.slane %v2331, 4
      %v2334 = vshll.u32 %v1762, 16
      %v2336 = vrot.slane %v2334, 5
      %v2337 = vsel %vm364, %v2332, %v2336
      %v2338 = vshrl.u32 %v1762, 16
      %v2340 = vrot.slane %v2338, 4
      %v2341 = vor.u32 %v2340, %v2336
      %v2342 = vrot.slane %v2341, 4
      %v2344 = vshll.u32 %v1763, 16
      %v2346 = vrot.slane %v2344, 5
      %v2347 = vsel %vm364, %v2342, %v2346
      %v2349 = vshrl.u32 %v1764, 16
      %v2351 = vrot.slane %v2349, 4
      %v2352 = vshll.u32 %v1764, 16
      %v2354 = vrot.slane %v2352, 5
      %v2355 = vor.u32 %v2351, %v2354
      %v2356 = vrot.slane %v2355, 4
      %v2358 = vshll.u32 %v1765, 16
      %v2360 = vrot.slane %v2358, 5
      %v2361 = vsel %vm364, %v2356, %v2360
      %v2362 = vshrl.u32 %v1765, 16
      %v2364 = vrot.slane %v2362, 4
      %v2365 = vor.u32 %v2364, %v2360
      %v2366 = vrot.slane %v2365, 4
      %v2368 = vshll.u32 %v1766, 16
      %v2370 = vrot.slane %v2368, 5
      %v2371 = vsel %vm364, %v2366, %v2370
      %v2373 = vshrl.u32 %v1767, 16
      %v2375 = vrot.slane %v2373, 4
      %v2376 = vshll.u32 %v1767, 16
      %v2378 = vrot.slane %v2376, 5
      %v2379 = vor.u32 %v2375, %v2378
      %v2380 = vrot.slane %v2379, 4
      %v2382 = vshll.u32 %v1768, 16
      %v2384 = vrot.slane %v2382, 5
      %v2385 = vsel %vm364, %v2380, %v2384
      %v2386 = vshrl.u32 %v1768, 16
      %v2388 = vrot.slane %v2386, 4
      %v2389 = vor.u32 %v2388, %v2384
      %v2390 = vrot.slane %v2389, 4
      %v2392 = vshll.u32 %v1769, 16
      %v2394 = vrot.slane %v2392, 5
      %v2395 = vsel %vm364, %v2390, %v2394
      %v2397 = vshrl.u32 %v1770, 16
      %v2399 = vrot.slane %v2397, 4
      %v2400 = vshll.u32 %v1770, 16
      %v2402 = vrot.slane %v2400, 5
      %v2403 = vor.u32 %v2399, %v2402
      %v2404 = vrot.slane %v2403, 4
      %v2406 = vshll.u32 %v1771, 16
      %v2408 = vrot.slane %v2406, 5
      %v2409 = vsel %vm364, %v2404, %v2408
      %v2410 = vshrl.u32 %v1771, 16
      %v2412 = vrot.slane %v2410, 4
      %v2413 = vor.u32 %v2412, %v2408
      %v2414 = vrot.slane %v2413, 4
      %v2416 = vshll.u32 %v1772, 16
      %v2418 = vrot.slane %v2416, 5
      %v2419 = vsel %vm364, %v2414, %v2418
      %v2421 = vshrl.u32 %v1773, 16
      %v2423 = vrot.slane %v2421, 4
      %v2424 = vshll.u32 %v1773, 16
      %v2426 = vrot.slane %v2424, 5
      %v2427 = vor.u32 %v2423, %v2426
      %v2428 = vrot.slane %v2427, 4
      %v2430 = vshll.u32 %v1774, 16
      %v2432 = vrot.slane %v2430, 5
      %v2433 = vsel %vm364, %v2428, %v2432
      %v2434 = vshrl.u32 %v1774, 16
      %v2436 = vrot.slane %v2434, 4
      %v2437 = vor.u32 %v2436, %v2432
      %v2438 = vrot.slane %v2437, 4
      %v2440 = vshll.u32 %v1775, 16
      %v2442 = vrot.slane %v2440, 5
      %v2443 = vsel %vm364, %v2438, %v2442
      %v2445 = vshrl.u32 %v1776, 16
      %v2447 = vrot.slane %v2445, 4
      %v2448 = vshll.u32 %v1776, 16
      %v2450 = vrot.slane %v2448, 5
      %v2451 = vor.u32 %v2447, %v2450
      %v2452 = vrot.slane %v2451, 4
      %v2454 = vshll.u32 %v1777, 16
      %v2456 = vrot.slane %v2454, 5
      %v2457 = vsel %vm364, %v2452, %v2456
      %v2458 = vshrl.u32 %v1777, 16
      %v2460 = vrot.slane %v2458, 4
      %v2461 = vor.u32 %v2460, %v2456
      %v2462 = vrot.slane %v2461, 4
      %v2464 = vshll.u32 %v1778, 16
      %v2466 = vrot.slane %v2464, 5
      %v2467 = vsel %vm364, %v2462, %v2466
      %v2469 = vshrl.u32 %v1779, 16
      %v2471 = vrot.slane %v2469, 4
      %v2472 = vshll.u32 %v1779, 16
      %v2474 = vrot.slane %v2472, 5
      %v2475 = vor.u32 %v2471, %v2474
      %v2476 = vrot.slane %v2475, 4
      %v2478 = vshll.u32 %v1780, 16
      %v2480 = vrot.slane %v2478, 5
      %v2481 = vsel %vm364, %v2476, %v2480
      %v2482 = vshrl.u32 %v1780, 16
      %v2484 = vrot.slane %v2482, 4
      %v2485 = vor.u32 %v2484, %v2480
      %v2486 = vrot.slane %v2485, 4
      %v2488 = vshll.u32 %v1781, 16
      %v2490 = vrot.slane %v2488, 5
      %v2491 = vsel %vm364, %v2486, %v2490
      %s2492 = scalar_lea.vmem %s273, 8
      %v2493 = vld [vmem:[%s2492] sm:$0x3]
      %v2494 = vunpack.c.l.b16 %v2121
      %v2495 = vunpack.c.l.b16 %v2131
      %v2496 = vunpack.c.l.b16 %v2145
      %v2497 = vunpack.c.l.b16 %v2155
      %v2498 = vunpack.c.l.b16 %v2169
      %v2499 = vunpack.c.l.b16 %v2179
      %v2500 = vunpack.c.l.b16 %v2193
      %v2501 = vunpack.c.l.b16 %v2203
      %v2502 = vunpack.c.l.b16 %v2217
      %v2503 = vunpack.c.l.b16 %v2227
      %v2504 = vunpack.c.l.b16 %v2241
      %v2505 = vunpack.c.l.b16 %v2251
      %v2506 = vunpack.c.l.b16 %v2265
      %v2507 = vunpack.c.l.b16 %v2275
      %v2508 = vunpack.c.l.b16 %v2289
      %v2509 = vunpack.c.l.b16 %v2299
      %v2510 = vunpack.c.l.b16 %v2313
      %v2511 = vunpack.c.l.b16 %v2323
      %v2512 = vunpack.c.l.b16 %v2337
      %v2513 = vunpack.c.l.b16 %v2347
      %v2514 = vunpack.c.l.b16 %v2361
      %v2515 = vunpack.c.l.b16 %v2371
      %v2516 = vunpack.c.l.b16 %v2385
      %v2517 = vunpack.c.l.b16 %v2395
      %v2518 = vunpack.c.l.b16 %v2409
      %v2519 = vunpack.c.l.b16 %v2419
      %v2520 = vunpack.c.l.b16 %v2433
      %v2521 = vunpack.c.l.b16 %v2443
      %v2522 = vunpack.c.l.b16 %v2457
      %v2523 = vunpack.c.l.b16 %v2467
      %v2524 = vunpack.c.l.b16 %v2481
      %v2525 = vunpack.c.l.b16 %v2491
      %v2526 = vpack.c.b16 %v2495, %v2494
      %v2527 = vpack.c.b16 %v2497, %v2496
      %v2528 = vpack.c.b16 %v2499, %v2498
      %v2529 = vpack.c.b16 %v2501, %v2500
      %v2530 = vpack.c.b16 %v2503, %v2502
      %v2531 = vpack.c.b16 %v2505, %v2504
      %v2532 = vpack.c.b16 %v2507, %v2506
      %v2533 = vpack.c.b16 %v2509, %v2508
      %v2534 = vpack.c.b16 %v2511, %v2510
      %v2535 = vpack.c.b16 %v2513, %v2512
      %v2536 = vpack.c.b16 %v2515, %v2514
      %v2537 = vpack.c.b16 %v2517, %v2516
      %v2538 = vpack.c.b16 %v2519, %v2518
      %v2539 = vpack.c.b16 %v2521, %v2520
      %v2540 = vpack.c.b16 %v2523, %v2522
      %v2541 = vpack.c.b16 %v2525, %v2524
      %v2543 = vsel %vm799, %v2526, 0
      %v2546 = vsel %vm799, %v2527, 0
      %v2549 = vsel %vm799, %v2528, 0
      %v2552 = vsel %vm799, %v2529, 0
      %v2555 = vsel %vm799, %v2530, 0
      %v2558 = vsel %vm799, %v2531, 0
      %v2561 = vsel %vm799, %v2532, 0
      %v2564 = vsel %vm799, %v2533, 0
      %v2567 = vsel %vm799, %v2534, 0
      %v2570 = vsel %vm799, %v2535, 0
      %v2573 = vsel %vm799, %v2536, 0
      %v2576 = vsel %vm799, %v2537, 0
      %v2579 = vsel %vm799, %v2538, 0
      %v2582 = vsel %vm799, %v2539, 0
      %v2585 = vsel %vm799, %v2540, 0
      %v2588 = vsel %vm799, %v2541, 0
      %v2591 = vsel %vm848, %v2493, 0
      %2593 = vmatprep.subr.bf16.mxu0 0
      %2594 = vmatpush1.bf16.msra.mxu0 %v2591
      %2595 = vmatprep.subr.bf16.mxu0 0
      %2596 = vmatpush1.bf16.msra.mxu0 0
      %2597 = vmatprep.subr.bf16.mxu0 0
      %2598 = vmatpush1.bf16.msra.mxu0 0
      %2599 = vmatprep.subr.bf16.mxu0 0
      %2600 = vmatpush1.bf16.msra.mxu0 0
      %2601 = vmatprep.subr.bf16.mxu0 0
      %2602 = vmatpush1.bf16.msra.mxu0 0
      %2603 = vmatprep.subr.bf16.mxu0 0
      %2604 = vmatpush1.bf16.msra.mxu0 0
      %2605 = vmatprep.subr.bf16.mxu0 0
      %2606 = vmatpush1.bf16.msra.mxu0 0
      %2607 = vmatprep.subr.bf16.mxu0 0
      %2608 = vmatpush1.bf16.msra.mxu0 0
      %2609 = vmatprep.subr.bf16.mxu0 0
      %2610 = vmatpush1.bf16.msra.mxu0 0
      %2611 = vmatprep.subr.bf16.mxu0 0
      %2612 = vmatpush1.bf16.msra.mxu0 0
      %2613 = vmatprep.subr.bf16.mxu0 0
      %2614 = vmatpush1.bf16.msra.mxu0 0
      %2615 = vmatprep.subr.bf16.mxu0 0
      %2616 = vmatpush1.bf16.msra.mxu0 0
      %2617 = vmatprep.subr.bf16.mxu0 0
      %2618 = vmatpush1.bf16.msra.mxu0 0
      %2619 = vmatprep.subr.bf16.mxu0 0
      %2620 = vmatpush1.bf16.msra.mxu0 0
      %2621 = vmatprep.subr.bf16.mxu0 0
      %2622 = vmatpush1.bf16.msra.mxu0 0
      %2623 = vmatprep.subr.bf16.mxu0 0
      %2624 = vmatpush1.bf16.msra.mxu0 0
      %2625 = vmatprep.mubr.bf16.mxu0 0
      %2626 = vmatmul.mubr.bf16.gmra.mrb[0].mxu0 %v2543
      %v2627 = vpop.f32.mrb[0].mxu0
      %v2628 = vadd.f32 0.0, %v2627
      %v2629 = vpop.f32.mrb[0].mxu0
      %v2630 = vpop.f32.mrb[0].mxu0
      %v2631 = vadd.f32 0.0, %v2630
      %v2632 = vpop.f32.mrb[0].mxu0
      %2633 = vmatprep.mubr.bf16.mxu0 0
      %2634 = vmatmul.mubr.bf16.gmra.mrb[0].mxu0 %v2546
      %v2635 = vpop.f32.mrb[0].mxu0
      %v2636 = vadd.f32 0.0, %v2635
      %v2637 = vpop.f32.mrb[0].mxu0
      %v2638 = vpop.f32.mrb[0].mxu0
      %v2639 = vadd.f32 0.0, %v2638
      %v2640 = vpop.f32.mrb[0].mxu0
      %2641 = vmatprep.mubr.bf16.mxu0 0
      %2642 = vmatmul.mubr.bf16.gmra.mrb[0].mxu0 %v2549
      %v2643 = vpop.f32.mrb[0].mxu0
      %v2644 = vadd.f32 0.0, %v2643
      %v2645 = vpop.f32.mrb[0].mxu0
      %v2646 = vpop.f32.mrb[0].mxu0
      %v2647 = vadd.f32 0.0, %v2646
      %v2648 = vpop.f32.mrb[0].mxu0
      %2649 = vmatprep.mubr.bf16.mxu0 0
      %2650 = vmatmul.mubr.bf16.gmra.mrb[0].mxu0 %v2552
      %v2651 = vpop.f32.mrb[0].mxu0
      %v2652 = vadd.f32 0.0, %v2651
      %v2653 = vpop.f32.mrb[0].mxu0
      %v2654 = vpop.f32.mrb[0].mxu0
      %v2655 = vadd.f32 0.0, %v2654
      %v2656 = vpop.f32.mrb[0].mxu0
      %2657 = vmatprep.mubr.bf16.mxu0 0
      %2658 = vmatmul.mubr.bf16.gmra.mrb[0].mxu0 %v2555
      %v2659 = vpop.f32.mrb[0].mxu0
      %v2660 = vadd.f32 0.0, %v2659
      %v2661 = vpop.f32.mrb[0].mxu0
      %v2662 = vpop.f32.mrb[0].mxu0
      %v2663 = vadd.f32 0.0, %v2662
      %v2664 = vpop.f32.mrb[0].mxu0
      %2665 = vmatprep.mubr.bf16.mxu0 0
      %2666 = vmatmul.mubr.bf16.gmra.mrb[0].mxu0 %v2558
      %v2667 = vpop.f32.mrb[0].mxu0
      %v2668 = vadd.f32 0.0, %v2667
      %v2669 = vpop.f32.mrb[0].mxu0
      %v2670 = vpop.f32.mrb[0].mxu0
      %v2671 = vadd.f32 0.0, %v2670
      %v2672 = vpop.f32.mrb[0].mxu0
      %2673 = vmatprep.mubr.bf16.mxu0 0
      %2674 = vmatmul.mubr.bf16.gmra.mrb[0].mxu0 %v2561
      %v2675 = vpop.f32.mrb[0].mxu0
      %v2676 = vadd.f32 0.0, %v2675
      %v2677 = vpop.f32.mrb[0].mxu0
      %v2678 = vpop.f32.mrb[0].mxu0
      %v2679 = vadd.f32 0.0, %v2678
      %v2680 = vpop.f32.mrb[0].mxu0
      %2681 = vmatprep.mubr.bf16.mxu0 0
      %2682 = vmatmul.mubr.bf16.gmra.mrb[0].mxu0 %v2564
      %v2683 = vpop.f32.mrb[0].mxu0
      %v2684 = vadd.f32 0.0, %v2683
      %v2685 = vpop.f32.mrb[0].mxu0
      %v2686 = vpop.f32.mrb[0].mxu0
      %v2687 = vadd.f32 0.0, %v2686
      %v2688 = vpop.f32.mrb[0].mxu0
      %2689 = vmatprep.mubr.bf16.mxu0 0
      %2690 = vmatmul.mubr.bf16.gmra.mrb[0].mxu0 %v2567
      %v2691 = vpop.f32.mrb[0].mxu0
      %v2692 = vadd.f32 0.0, %v2691
      %v2693 = vpop.f32.mrb[0].mxu0
      %v2694 = vpop.f32.mrb[0].mxu0
      %v2695 = vadd.f32 0.0, %v2694
      %v2696 = vpop.f32.mrb[0].mxu0
      %2697 = vmatprep.mubr.bf16.mxu0 0
      %2698 = vmatmul.mubr.bf16.gmra.mrb[0].mxu0 %v2570
      %v2699 = vpop.f32.mrb[0].mxu0
      %v2700 = vadd.f32 0.0, %v2699
      %v2701 = vpop.f32.mrb[0].mxu0
      %v2702 = vpop.f32.mrb[0].mxu0
      %v2703 = vadd.f32 0.0, %v2702
      %v2704 = vpop.f32.mrb[0].mxu0
      %2705 = vmatprep.mubr.bf16.mxu0 0
      %2706 = vmatmul.mubr.bf16.gmra.mrb[0].mxu0 %v2573
      %v2707 = vpop.f32.mrb[0].mxu0
      %v2708 = vadd.f32 0.0, %v2707
      %v2709 = vpop.f32.mrb[0].mxu0
      %v2710 = vpop.f32.mrb[0].mxu0
      %v2711 = vadd.f32 0.0, %v2710
      %v2712 = vpop.f32.mrb[0].mxu0
      %2713 = vmatprep.mubr.bf16.mxu0 0
      %2714 = vmatmul.mubr.bf16.gmra.mrb[0].mxu0 %v2576
      %v2715 = vpop.f32.mrb[0].mxu0
      %v2716 = vadd.f32 0.0, %v2715
      %v2717 = vpop.f32.mrb[0].mxu0
      %v2718 = vpop.f32.mrb[0].mxu0
      %v2719 = vadd.f32 0.0, %v2718
      %v2720 = vpop.f32.mrb[0].mxu0
      %2721 = vmatprep.mubr.bf16.mxu0 0
      %2722 = vmatmul.mubr.bf16.gmra.mrb[0].mxu0 %v2579
      %v2723 = vpop.f32.mrb[0].mxu0
      %v2724 = vadd.f32 0.0, %v2723
      %v2725 = vpop.f32.mrb[0].mxu0
      %v2726 = vpop.f32.mrb[0].mxu0
      %v2727 = vadd.f32 0.0, %v2726
      %v2728 = vpop.f32.mrb[0].mxu0
      %2729 = vmatprep.mubr.bf16.mxu0 0
      %2730 = vmatmul.mubr.bf16.gmra.mrb[0].mxu0 %v2582
      %v2731 = vpop.f32.mrb[0].mxu0
      %v2732 = vadd.f32 0.0, %v2731
      %v2733 = vpop.f32.mrb[0].mxu0
      %v2734 = vpop.f32.mrb[0].mxu0
      %v2735 = vadd.f32 0.0, %v2734
      %v2736 = vpop.f32.mrb[0].mxu0
      %2737 = vmatprep.mubr.bf16.mxu0 0
      %2738 = vmatmul.mubr.bf16.gmra.mrb[0].mxu0 %v2585
      %v2739 = vpop.f32.mrb[0].mxu0
      %v2740 = vadd.f32 0.0, %v2739
      %v2741 = vpop.f32.mrb[0].mxu0
      %v2742 = vpop.f32.mrb[0].mxu0
      %v2743 = vadd.f32 0.0, %v2742
      %v2744 = vpop.f32.mrb[0].mxu0
      %2745 = vmatprep.mubr.bf16.mxu0 0
      %2746 = vmatmul.mubr.bf16.gmra.mrb[0].mxu0 %v2588
      %v2747 = vpop.f32.mrb[0].mxu0
      %v2748 = vadd.f32 0.0, %v2747
      %v2749 = vpop.f32.mrb[0].mxu0
      %v2750 = vpop.f32.mrb[0].mxu0
      %v2751 = vadd.f32 0.0, %v2750
      %v2752 = vpop.f32.mrb[0].mxu0
      %2753 = vdwg.mxu0
      %v2754 = vadd.f32 %v2076, %v2628
      %v2755 = vadd.f32 %v2077, %v2631
      %v2756 = vadd.f32 %v2078, %v2636
      %v2757 = vadd.f32 %v2079, %v2639
      %v2758 = vadd.f32 %v2080, %v2644
      %v2759 = vadd.f32 %v2081, %v2647
      %v2760 = vadd.f32 %v2082, %v2652
      %v2761 = vadd.f32 %v2083, %v2655
      %v2762 = vadd.f32 %v2084, %v2660
      %v2763 = vadd.f32 %v2085, %v2663
      %v2764 = vadd.f32 %v2086, %v2668
      %v2765 = vadd.f32 %v2087, %v2671
      %v2766 = vadd.f32 %v2088, %v2676
      %v2767 = vadd.f32 %v2089, %v2679
      %v2768 = vadd.f32 %v2090, %v2684
      %v2769 = vadd.f32 %v2091, %v2687
      %v2770 = vadd.f32 %v2092, %v2692
      %v2771 = vadd.f32 %v2093, %v2695
      %v2772 = vadd.f32 %v2094, %v2700
      %v2773 = vadd.f32 %v2095, %v2703
      %v2774 = vadd.f32 %v2096, %v2708
      %v2775 = vadd.f32 %v2097, %v2711
      %v2776 = vadd.f32 %v2098, %v2716
      %v2777 = vadd.f32 %v2099, %v2719
      %v2778 = vadd.f32 %v2100, %v2724
      %v2779 = vadd.f32 %v2101, %v2727
      %v2780 = vadd.f32 %v2102, %v2732
      %v2781 = vadd.f32 %v2103, %v2735
      %v2782 = vadd.f32 %v2104, %v2740
      %v2783 = vadd.f32 %v2105, %v2743
      %v2784 = vadd.f32 %v2106, %v2748
      %v2785 = vadd.f32 %v2107, %v2751
      %v2802 = vrot.slane %v1734, 5
      %v2803 = vrot.slane %v2802, 4
      %v2804 = vrot.slane %v1735, 5
      %v2805 = vsel %vm1323, %v2803, %v2804
      %v2806 = vrot.slane %v2804, 4
      %v2807 = vrot.slane %v1736, 5
      %v2808 = vsel %vm1323, %v2806, %v2807
      %v2809 = vrot.slane %v1737, 5
      %v2810 = vrot.slane %v2809, 4
      %v2811 = vrot.slane %v1738, 5
      %v2812 = vsel %vm1323, %v2810, %v2811
      %v2813 = vrot.slane %v2811, 4
      %v2814 = vrot.slane %v1739, 5
      %v2815 = vsel %vm1323, %v2813, %v2814
      %v2816 = vrot.slane %v1740, 5
      %v2817 = vrot.slane %v2816, 4
      %v2818 = vrot.slane %v1741, 5
      %v2819 = vsel %vm1323, %v2817, %v2818
      %v2820 = vrot.slane %v2818, 4
      %v2821 = vrot.slane %v1742, 5
      %v2822 = vsel %vm1323, %v2820, %v2821
      %v2823 = vrot.slane %v1743, 5
      %v2824 = vrot.slane %v2823, 4
      %v2825 = vrot.slane %v1744, 5
      %v2826 = vsel %vm1323, %v2824, %v2825
      %v2827 = vrot.slane %v2825, 4
      %v2828 = vrot.slane %v1745, 5
      %v2829 = vsel %vm1323, %v2827, %v2828
      %v2830 = vrot.slane %v1746, 5
      %v2831 = vrot.slane %v2830, 4
      %v2832 = vrot.slane %v1747, 5
      %v2833 = vsel %vm1323, %v2831, %v2832
      %v2834 = vrot.slane %v2832, 4
      %v2835 = vrot.slane %v1748, 5
      %v2836 = vsel %vm1323, %v2834, %v2835
      %v2837 = vrot.slane %v1749, 5
      %v2838 = vrot.slane %v2837, 4
      %v2839 = vrot.slane %v1750, 5
      %v2840 = vsel %vm1323, %v2838, %v2839
      %v2841 = vrot.slane %v2839, 4
      %v2842 = vrot.slane %v1751, 5
      %v2843 = vsel %vm1323, %v2841, %v2842
      %v2844 = vrot.slane %v1752, 5
      %v2845 = vrot.slane %v2844, 4
      %v2846 = vrot.slane %v1753, 5
      %v2847 = vsel %vm1323, %v2845, %v2846
      %v2848 = vrot.slane %v2846, 4
      %v2849 = vrot.slane %v1754, 5
      %v2850 = vsel %vm1323, %v2848, %v2849
      %v2851 = vrot.slane %v1755, 5
      %v2852 = vrot.slane %v2851, 4
      %v2853 = vrot.slane %v1756, 5
      %v2854 = vsel %vm1323, %v2852, %v2853
      %v2855 = vrot.slane %v2853, 4
      %v2856 = vrot.slane %v1757, 5
      %v2857 = vsel %vm1323, %v2855, %v2856
      %v2858 = vrot.slane %v1758, 5
      %v2859 = vrot.slane %v2858, 4
      %v2860 = vrot.slane %v1759, 5
      %v2861 = vsel %vm1323, %v2859, %v2860
      %v2862 = vrot.slane %v2860, 4
      %v2863 = vrot.slane %v1760, 5
      %v2864 = vsel %vm1323, %v2862, %v2863
      %v2865 = vrot.slane %v1761, 5
      %v2866 = vrot.slane %v2865, 4
      %v2867 = vrot.slane %v1762, 5
      %v2868 = vsel %vm1323, %v2866, %v2867
      %v2869 = vrot.slane %v2867, 4
      %v2870 = vrot.slane %v1763, 5
      %v2871 = vsel %vm1323, %v2869, %v2870
      %v2872 = vrot.slane %v1764, 5
      %v2873 = vrot.slane %v2872, 4
      %v2874 = vrot.slane %v1765, 5
      %v2875 = vsel %vm1323, %v2873, %v2874
      %v2876 = vrot.slane %v2874, 4
      %v2877 = vrot.slane %v1766, 5
      %v2878 = vsel %vm1323, %v2876, %v2877
      %v2879 = vrot.slane %v1767, 5
      %v2880 = vrot.slane %v2879, 4
      %v2881 = vrot.slane %v1768, 5
      %v2882 = vsel %vm1323, %v2880, %v2881
      %v2883 = vrot.slane %v2881, 4
      %v2884 = vrot.slane %v1769, 5
      %v2885 = vsel %vm1323, %v2883, %v2884
      %v2886 = vrot.slane %v1770, 5
      %v2887 = vrot.slane %v2886, 4
      %v2888 = vrot.slane %v1771, 5
      %v2889 = vsel %vm1323, %v2887, %v2888
      %v2890 = vrot.slane %v2888, 4
      %v2891 = vrot.slane %v1772, 5
      %v2892 = vsel %vm1323, %v2890, %v2891
      %v2893 = vrot.slane %v1773, 5
      %v2894 = vrot.slane %v2893, 4
      %v2895 = vrot.slane %v1774, 5
      %v2896 = vsel %vm1323, %v2894, %v2895
      %v2897 = vrot.slane %v2895, 4
      %v2898 = vrot.slane %v1775, 5
      %v2899 = vsel %vm1323, %v2897, %v2898
      %v2900 = vrot.slane %v1776, 5
      %v2901 = vrot.slane %v2900, 4
      %v2902 = vrot.slane %v1777, 5
      %v2903 = vsel %vm1323, %v2901, %v2902
      %v2904 = vrot.slane %v2902, 4
      %v2905 = vrot.slane %v1778, 5
      %v2906 = vsel %vm1323, %v2904, %v2905
      %v2907 = vrot.slane %v1779, 5
      %v2908 = vrot.slane %v2907, 4
      %v2909 = vrot.slane %v1780, 5
      %v2910 = vsel %vm1323, %v2908, %v2909
      %v2911 = vrot.slane %v2909, 4
      %v2912 = vrot.slane %v1781, 5
      %v2913 = vsel %vm1323, %v2911, %v2912
      %s2914 = scalar_lea.vmem %s273, 10
      %v2915 = vld [vmem:[%s2914] sm:$0x3]
      %v2916 = vunpack.c.l.b16 %v2805
      %v2917 = vunpack.c.l.b16 %v2808
      %v2918 = vunpack.c.l.b16 %v2812
      %v2919 = vunpack.c.l.b16 %v2815
      %v2920 = vunpack.c.l.b16 %v2819
      %v2921 = vunpack.c.l.b16 %v2822
      %v2922 = vunpack.c.l.b16 %v2826
      %v2923 = vunpack.c.l.b16 %v2829
      %v2924 = vunpack.c.l.b16 %v2833
      %v2925 = vunpack.c.l.b16 %v2836
      %v2926 = vunpack.c.l.b16 %v2840
      %v2927 = vunpack.c.l.b16 %v2843
      %v2928 = vunpack.c.l.b16 %v2847
      %v2929 = vunpack.c.l.b16 %v2850
      %v2930 = vunpack.c.l.b16 %v2854
      %v2931 = vunpack.c.l.b16 %v2857
      %v2932 = vunpack.c.l.b16 %v2861
      %v2933 = vunpack.c.l.b16 %v2864
      %v2934 = vunpack.c.l.b16 %v2868
      %v2935 = vunpack.c.l.b16 %v2871
      %v2936 = vunpack.c.l.b16 %v2875
      %v2937 = vunpack.c.l.b16 %v2878
      %v2938 = vunpack.c.l.b16 %v2882
      %v2939 = vunpack.c.l.b16 %v2885
      %v2940 = vunpack.c.l.b16 %v2889
      %v2941 = vunpack.c.l.b16 %v2892
      %v2942 = vunpack.c.l.b16 %v2896
      %v2943 = vunpack.c.l.b16 %v2899
      %v2944 = vunpack.c.l.b16 %v2903
      %v2945 = vunpack.c.l.b16 %v2906
      %v2946 = vunpack.c.l.b16 %v2910
      %v2947 = vunpack.c.l.b16 %v2913
      %v2948 = vpack.c.b16 %v2917, %v2916
      %v2949 = vpack.c.b16 %v2919, %v2918
      %v2950 = vpack.c.b16 %v2921, %v2920
      %v2951 = vpack.c.b16 %v2923, %v2922
      %v2952 = vpack.c.b16 %v2925, %v2924
      %v2953 = vpack.c.b16 %v2927, %v2926
      %v2954 = vpack.c.b16 %v2929, %v2928
      %v2955 = vpack.c.b16 %v2931, %v2930
      %v2956 = vpack.c.b16 %v2933, %v2932
      %v2957 = vpack.c.b16 %v2935, %v2934
      %v2958 = vpack.c.b16 %v2937, %v2936
      %v2959 = vpack.c.b16 %v2939, %v2938
      %v2960 = vpack.c.b16 %v2941, %v2940
      %v2961 = vpack.c.b16 %v2943, %v2942
      %v2962 = vpack.c.b16 %v2945, %v2944
      %v2963 = vpack.c.b16 %v2947, %v2946
      %v2965 = vsel %vm799, %v2948, 0
      %v2968 = vsel %vm799, %v2949, 0
      %v2971 = vsel %vm799, %v2950, 0
      %v2974 = vsel %vm799, %v2951, 0
      %v2977 = vsel %vm799, %v2952, 0
      %v2980 = vsel %vm799, %v2953, 0
      %v2983 = vsel %vm799, %v2954, 0
      %v2986 = vsel %vm799, %v2955, 0
      %v2989 = vsel %vm799, %v2956, 0
      %v2992 = vsel %vm799, %v2957, 0
      %v2995 = vsel %vm799, %v2958, 0
      %v2998 = vsel %vm799, %v2959, 0
      %v3001 = vsel %vm799, %v2960, 0
      %v3004 = vsel %vm799, %v2961, 0
      %v3007 = vsel %vm799, %v2962, 0
      %v3010 = vsel %vm799, %v2963, 0
      %v3013 = vsel %vm848, %v2915, 0
      %3015 = vmatprep.subr.bf16.mxu0 0
      %3016 = vmatpush1.bf16.msra.mxu0 %v3013
      %3017 = vmatprep.subr.bf16.mxu0 0
      %3018 = vmatpush1.bf16.msra.mxu0 0
      %3019 = vmatprep.subr.bf16.mxu0 0
      %3020 = vmatpush1.bf16.msra.mxu0 0
      %3021 = vmatprep.subr.bf16.mxu0 0
      %3022 = vmatpush1.bf16.msra.mxu0 0
      %3023 = vmatprep.subr.bf16.mxu0 0
      %3024 = vmatpush1.bf16.msra.mxu0 0
      %3025 = vmatprep.subr.bf16.mxu0 0
      %3026 = vmatpush1.bf16.msra.mxu0 0
      %3027 = vmatprep.subr.bf16.mxu0 0
      %3028 = vmatpush1.bf16.msra.mxu0 0
      %3029 = vmatprep.subr.bf16.mxu0 0
      %3030 = vmatpush1.bf16.msra.mxu0 0
      %3031 = vmatprep.subr.bf16.mxu0 0
      %3032 = vmatpush1.bf16.msra.mxu0 0
      %3033 = vmatprep.subr.bf16.mxu0 0
      %3034 = vmatpush1.bf16.msra.mxu0 0
      %3035 = vmatprep.subr.bf16.mxu0 0
      %3036 = vmatpush1.bf16.msra.mxu0 0
      %3037 = vmatprep.subr.bf16.mxu0 0
      %3038 = vmatpush1.bf16.msra.mxu0 0
      %3039 = vmatprep.subr.bf16.mxu0 0
      %3040 = vmatpush1.bf16.msra.mxu0 0
      %3041 = vmatprep.subr.bf16.mxu0 0
      %3042 = vmatpush1.bf16.msra.mxu0 0
      %3043 = vmatprep.subr.bf16.mxu0 0
      %3044 = vmatpush1.bf16.msra.mxu0 0
      %3045 = vmatprep.subr.bf16.mxu0 0
      %3046 = vmatpush1.bf16.msra.mxu0 0
      %3047 = vmatprep.mubr.bf16.mxu0 0
      %3048 = vmatmul.mubr.bf16.gmra.mrb[0].mxu0 %v2965
      %v3049 = vpop.f32.mrb[0].mxu0
      %v3050 = vadd.f32 0.0, %v3049
      %v3051 = vpop.f32.mrb[0].mxu0
      %v3052 = vpop.f32.mrb[0].mxu0
      %v3053 = vadd.f32 0.0, %v3052
      %v3054 = vpop.f32.mrb[0].mxu0
      %3055 = vmatprep.mubr.bf16.mxu0 0
      %3056 = vmatmul.mubr.bf16.gmra.mrb[0].mxu0 %v2968
      %v3057 = vpop.f32.mrb[0].mxu0
      %v3058 = vadd.f32 0.0, %v3057
      %v3059 = vpop.f32.mrb[0].mxu0
      %v3060 = vpop.f32.mrb[0].mxu0
      %v3061 = vadd.f32 0.0, %v3060
      %v3062 = vpop.f32.mrb[0].mxu0
      %3063 = vmatprep.mubr.bf16.mxu0 0
      %3064 = vmatmul.mubr.bf16.gmra.mrb[0].mxu0 %v2971
      %v3065 = vpop.f32.mrb[0].mxu0
      %v3066 = vadd.f32 0.0, %v3065
      %v3067 = vpop.f32.mrb[0].mxu0
      %v3068 = vpop.f32.mrb[0].mxu0
      %v3069 = vadd.f32 0.0, %v3068
      %v3070 = vpop.f32.mrb[0].mxu0
      %3071 = vmatprep.mubr.bf16.mxu0 0
      %3072 = vmatmul.mubr.bf16.gmra.mrb[0].mxu0 %v2974
      %v3073 = vpop.f32.mrb[0].mxu0
      %v3074 = vadd.f32 0.0, %v3073
      %v3075 = vpop.f32.mrb[0].mxu0
      %v3076 = vpop.f32.mrb[0].mxu0
      %v3077 = vadd.f32 0.0, %v3076
      %v3078 = vpop.f32.mrb[0].mxu0
      %3079 = vmatprep.mubr.bf16.mxu0 0
      %3080 = vmatmul.mubr.bf16.gmra.mrb[0].mxu0 %v2977
      %v3081 = vpop.f32.mrb[0].mxu0
      %v3082 = vadd.f32 0.0, %v3081
      %v3083 = vpop.f32.mrb[0].mxu0
      %v3084 = vpop.f32.mrb[0].mxu0
      %v3085 = vadd.f32 0.0, %v3084
      %v3086 = vpop.f32.mrb[0].mxu0
      %3087 = vmatprep.mubr.bf16.mxu0 0
      %3088 = vmatmul.mubr.bf16.gmra.mrb[0].mxu0 %v2980
      %v3089 = vpop.f32.mrb[0].mxu0
      %v3090 = vadd.f32 0.0, %v3089
      %v3091 = vpop.f32.mrb[0].mxu0
      %v3092 = vpop.f32.mrb[0].mxu0
      %v3093 = vadd.f32 0.0, %v3092
      %v3094 = vpop.f32.mrb[0].mxu0
      %3095 = vmatprep.mubr.bf16.mxu0 0
      %3096 = vmatmul.mubr.bf16.gmra.mrb[0].mxu0 %v2983
      %v3097 = vpop.f32.mrb[0].mxu0
      %v3098 = vadd.f32 0.0, %v3097
      %v3099 = vpop.f32.mrb[0].mxu0
      %v3100 = vpop.f32.mrb[0].mxu0
      %v3101 = vadd.f32 0.0, %v3100
      %v3102 = vpop.f32.mrb[0].mxu0
      %3103 = vmatprep.mubr.bf16.mxu0 0
      %3104 = vmatmul.mubr.bf16.gmra.mrb[0].mxu0 %v2986
      %v3105 = vpop.f32.mrb[0].mxu0
      %v3106 = vadd.f32 0.0, %v3105
      %v3107 = vpop.f32.mrb[0].mxu0
      %v3108 = vpop.f32.mrb[0].mxu0
      %v3109 = vadd.f32 0.0, %v3108
      %v3110 = vpop.f32.mrb[0].mxu0
      %3111 = vmatprep.mubr.bf16.mxu0 0
      %3112 = vmatmul.mubr.bf16.gmra.mrb[0].mxu0 %v2989
      %v3113 = vpop.f32.mrb[0].mxu0
      %v3114 = vadd.f32 0.0, %v3113
      %v3115 = vpop.f32.mrb[0].mxu0
      %v3116 = vpop.f32.mrb[0].mxu0
      %v3117 = vadd.f32 0.0, %v3116
      %v3118 = vpop.f32.mrb[0].mxu0
      %3119 = vmatprep.mubr.bf16.mxu0 0
      %3120 = vmatmul.mubr.bf16.gmra.mrb[0].mxu0 %v2992
      %v3121 = vpop.f32.mrb[0].mxu0
      %v3122 = vadd.f32 0.0, %v3121
      %v3123 = vpop.f32.mrb[0].mxu0
      %v3124 = vpop.f32.mrb[0].mxu0
      %v3125 = vadd.f32 0.0, %v3124
      %v3126 = vpop.f32.mrb[0].mxu0
      %3127 = vmatprep.mubr.bf16.mxu0 0
      %3128 = vmatmul.mubr.bf16.gmra.mrb[0].mxu0 %v2995
      %v3129 = vpop.f32.mrb[0].mxu0
      %v3130 = vadd.f32 0.0, %v3129
      %v3131 = vpop.f32.mrb[0].mxu0
      %v3132 = vpop.f32.mrb[0].mxu0
      %v3133 = vadd.f32 0.0, %v3132
      %v3134 = vpop.f32.mrb[0].mxu0
      %3135 = vmatprep.mubr.bf16.mxu0 0
      %3136 = vmatmul.mubr.bf16.gmra.mrb[0].mxu0 %v2998
      %v3137 = vpop.f32.mrb[0].mxu0
      %v3138 = vadd.f32 0.0, %v3137
      %v3139 = vpop.f32.mrb[0].mxu0
      %v3140 = vpop.f32.mrb[0].mxu0
      %v3141 = vadd.f32 0.0, %v3140
      %v3142 = vpop.f32.mrb[0].mxu0
      %3143 = vmatprep.mubr.bf16.mxu0 0
      %3144 = vmatmul.mubr.bf16.gmra.mrb[0].mxu0 %v3001
      %v3145 = vpop.f32.mrb[0].mxu0
      %v3146 = vadd.f32 0.0, %v3145
      %v3147 = vpop.f32.mrb[0].mxu0
      %v3148 = vpop.f32.mrb[0].mxu0
      %v3149 = vadd.f32 0.0, %v3148
      %v3150 = vpop.f32.mrb[0].mxu0
      %3151 = vmatprep.mubr.bf16.mxu0 0
      %3152 = vmatmul.mubr.bf16.gmra.mrb[0].mxu0 %v3004
      %v3153 = vpop.f32.mrb[0].mxu0
      %v3154 = vadd.f32 0.0, %v3153
      %v3155 = vpop.f32.mrb[0].mxu0
      %v3156 = vpop.f32.mrb[0].mxu0
      %v3157 = vadd.f32 0.0, %v3156
      %v3158 = vpop.f32.mrb[0].mxu0
      %3159 = vmatprep.mubr.bf16.mxu0 0
      %3160 = vmatmul.mubr.bf16.gmra.mrb[0].mxu0 %v3007
      %v3161 = vpop.f32.mrb[0].mxu0
      %v3162 = vadd.f32 0.0, %v3161
      %v3163 = vpop.f32.mrb[0].mxu0
      %v3164 = vpop.f32.mrb[0].mxu0
      %v3165 = vadd.f32 0.0, %v3164
      %v3166 = vpop.f32.mrb[0].mxu0
      %3167 = vmatprep.mubr.bf16.mxu0 0
      %3168 = vmatmul.mubr.bf16.gmra.mrb[0].mxu0 %v3010
      %v3169 = vpop.f32.mrb[0].mxu0
      %v3170 = vadd.f32 0.0, %v3169
      %v3171 = vpop.f32.mrb[0].mxu0
      %v3172 = vpop.f32.mrb[0].mxu0
      %v3173 = vadd.f32 0.0, %v3172
      %v3174 = vpop.f32.mrb[0].mxu0
      %3175 = vdwg.mxu0
      %v3176 = vadd.f32 %v2754, %v3050
      %v3177 = vadd.f32 %v2755, %v3053
      %v3178 = vadd.f32 %v2756, %v3058
      %v3179 = vadd.f32 %v2757, %v3061
      %v3180 = vadd.f32 %v2758, %v3066
      %v3181 = vadd.f32 %v2759, %v3069
      %v3182 = vadd.f32 %v2760, %v3074
      %v3183 = vadd.f32 %v2761, %v3077
      %v3184 = vadd.f32 %v2762, %v3082
      %v3185 = vadd.f32 %v2763, %v3085
      %v3186 = vadd.f32 %v2764, %v3090
      %v3187 = vadd.f32 %v2765, %v3093
      %v3188 = vadd.f32 %v2766, %v3098
      %v3189 = vadd.f32 %v2767, %v3101
      %v3190 = vadd.f32 %v2768, %v3106
      %v3191 = vadd.f32 %v2769, %v3109
      %v3192 = vadd.f32 %v2770, %v3114
      %v3193 = vadd.f32 %v2771, %v3117
      %v3194 = vadd.f32 %v2772, %v3122
      %v3195 = vadd.f32 %v2773, %v3125
      %v3196 = vadd.f32 %v2774, %v3130
      %v3197 = vadd.f32 %v2775, %v3133
      %v3198 = vadd.f32 %v2776, %v3138
      %v3199 = vadd.f32 %v2777, %v3141
      %v3200 = vadd.f32 %v2778, %v3146
      %v3201 = vadd.f32 %v2779, %v3149
      %v3202 = vadd.f32 %v2780, %v3154
      %v3203 = vadd.f32 %v2781, %v3157
      %v3204 = vadd.f32 %v2782, %v3162
      %v3205 = vadd.f32 %v2783, %v3165
      %v3206 = vadd.f32 %v2784, %v3170
      %v3207 = vadd.f32 %v2785, %v3173
      %s3208 = sadd.s32 %s309, 2
      %s3209 = smul.u32 %s3208, 3
      %s3210 = smul.addr %s3209, 4
      %s3211 = scalar_lea.vmem %s269, %s3210
      %v3212 = vld [vmem:[%s3211] sm:$0xf]
      %v3213 = vld [vmem:[%s3211 + $0x4] sm:$0xf]
      %v3214 = vld [vmem:[%s3211 + $0x8] sm:$0x1]
      %v3215 = vld [vmem:[%s3211 + $0xc] sm:$0xf]
      %v3216 = vld [vmem:[%s3211 + $0x10] sm:$0xf]
      %v3217 = vld [vmem:[%s3211 + $0x14] sm:$0x1]
      %v3218 = vld [vmem:[%s3211 + $0x18] sm:$0xf]
      %v3219 = vld [vmem:[%s3211 + $0x1c] sm:$0xf]
      %v3220 = vld [vmem:[%s3211 + $0x20] sm:$0x1]
      %v3221 = vld [vmem:[%s3211 + $0x24] sm:$0xf]
      %v3222 = vld [vmem:[%s3211 + $0x28] sm:$0xf]
      %v3223 = vld [vmem:[%s3211 + $0x2c] sm:$0x1]
      %v3224 = vld [vmem:[%s3211 + $0x30] sm:$0xf]
      %v3225 = vld [vmem:[%s3211 + $0x34] sm:$0xf]
      %v3226 = vld [vmem:[%s3211 + $0x38] sm:$0x1]
      %v3227 = vld [vmem:[%s3211 + $0x3c] sm:$0xf]
      %v3228 = vld [vmem:[%s3211 + $0x40] sm:$0xf]
      %v3229 = vld [vmem:[%s3211 + $0x44] sm:$0x1]
      %v3230 = vld [vmem:[%s3211 + $0x48] sm:$0xf]
      %v3231 = vld [vmem:[%s3211 + $0x4c] sm:$0xf]
      %v3232 = vld [vmem:[%s3211 + $0x50] sm:$0x1]
      %v3233 = vld [vmem:[%s3211 + $0x54] sm:$0xf]
      %v3234 = vld [vmem:[%s3211 + $0x58] sm:$0xf]
      %v3235 = vld [vmem:[%s3211 + $0x5c] sm:$0x1]
      %v3236 = vld [vmem:[%s3211 + $0x60] sm:$0xf]
      %v3237 = vld [vmem:[%s3211 + $0x64] sm:$0xf]
      %v3238 = vld [vmem:[%s3211 + $0x68] sm:$0x1]
      %v3239 = vld [vmem:[%s3211 + $0x6c] sm:$0xf]
      %v3240 = vld [vmem:[%s3211 + $0x70] sm:$0xf]
      %v3241 = vld [vmem:[%s3211 + $0x74] sm:$0x1]
      %v3242 = vld [vmem:[%s3211 + $0x78] sm:$0xf]
      %v3243 = vld [vmem:[%s3211 + $0x7c] sm:$0xf]
      %v3244 = vld [vmem:[%s3211 + $0x80] sm:$0x1]
      %v3245 = vld [vmem:[%s3211 + $0x84] sm:$0xf]
      %v3246 = vld [vmem:[%s3211 + $0x88] sm:$0xf]
      %v3247 = vld [vmem:[%s3211 + $0x8c] sm:$0x1]
      %v3248 = vld [vmem:[%s3211 + $0x90] sm:$0xf]
      %v3249 = vld [vmem:[%s3211 + $0x94] sm:$0xf]
      %v3250 = vld [vmem:[%s3211 + $0x98] sm:$0x1]
      %v3251 = vld [vmem:[%s3211 + $0x9c] sm:$0xf]
      %v3252 = vld [vmem:[%s3211 + $0xa0] sm:$0xf]
      %v3253 = vld [vmem:[%s3211 + $0xa4] sm:$0x1]
      %v3254 = vld [vmem:[%s3211 + $0xa8] sm:$0xf]
      %v3255 = vld [vmem:[%s3211 + $0xac] sm:$0xf]
      %v3256 = vld [vmem:[%s3211 + $0xb0] sm:$0x1]
      %v3257 = vld [vmem:[%s3211 + $0xb4] sm:$0xf]
      %v3258 = vld [vmem:[%s3211 + $0xb8] sm:$0xf]
      %v3259 = vld [vmem:[%s3211 + $0xbc] sm:$0x1]
      %s3260 = scalar_lea.vmem %s273, 12
      %v3261 = vld [vmem:[%s3260] sm:$0x3]
      %v3294 = vunpack.c.l.b16 %v3212
      %v3295 = vunpack.c.l.b16 %v3213
      %v3296 = vunpack.c.l.b16 %v3215
      %v3297 = vunpack.c.l.b16 %v3216
      %v3298 = vunpack.c.l.b16 %v3218
      %v3299 = vunpack.c.l.b16 %v3219
      %v3300 = vunpack.c.l.b16 %v3221
      %v3301 = vunpack.c.l.b16 %v3222
      %v3302 = vunpack.c.l.b16 %v3224
      %v3303 = vunpack.c.l.b16 %v3225
      %v3304 = vunpack.c.l.b16 %v3227
      %v3305 = vunpack.c.l.b16 %v3228
      %v3306 = vunpack.c.l.b16 %v3230
      %v3307 = vunpack.c.l.b16 %v3231
      %v3308 = vunpack.c.l.b16 %v3233
      %v3309 = vunpack.c.l.b16 %v3234
      %v3310 = vunpack.c.l.b16 %v3236
      %v3311 = vunpack.c.l.b16 %v3237
      %v3312 = vunpack.c.l.b16 %v3239
      %v3313 = vunpack.c.l.b16 %v3240
      %v3314 = vunpack.c.l.b16 %v3242
      %v3315 = vunpack.c.l.b16 %v3243
      %v3316 = vunpack.c.l.b16 %v3245
      %v3317 = vunpack.c.l.b16 %v3246
      %v3318 = vunpack.c.l.b16 %v3248
      %v3319 = vunpack.c.l.b16 %v3249
      %v3320 = vunpack.c.l.b16 %v3251
      %v3321 = vunpack.c.l.b16 %v3252
      %v3322 = vunpack.c.l.b16 %v3254
      %v3323 = vunpack.c.l.b16 %v3255
      %v3324 = vunpack.c.l.b16 %v3257
      %v3325 = vunpack.c.l.b16 %v3258
      %v3326 = vpack.c.b16 %v3295, %v3294
      %v3327 = vpack.c.b16 %v3297, %v3296
      %v3328 = vpack.c.b16 %v3299, %v3298
      %v3329 = vpack.c.b16 %v3301, %v3300
      %v3330 = vpack.c.b16 %v3303, %v3302
      %v3331 = vpack.c.b16 %v3305, %v3304
      %v3332 = vpack.c.b16 %v3307, %v3306
      %v3333 = vpack.c.b16 %v3309, %v3308
      %v3334 = vpack.c.b16 %v3311, %v3310
      %v3335 = vpack.c.b16 %v3313, %v3312
      %v3336 = vpack.c.b16 %v3315, %v3314
      %v3337 = vpack.c.b16 %v3317, %v3316
      %v3338 = vpack.c.b16 %v3319, %v3318
      %v3339 = vpack.c.b16 %v3321, %v3320
      %v3340 = vpack.c.b16 %v3323, %v3322
      %v3341 = vpack.c.b16 %v3325, %v3324
      %v3343 = vsel %vm799, %v3326, 0
      %v3346 = vsel %vm799, %v3327, 0
      %v3349 = vsel %vm799, %v3328, 0
      %v3352 = vsel %vm799, %v3329, 0
      %v3355 = vsel %vm799, %v3330, 0
      %v3358 = vsel %vm799, %v3331, 0
      %v3361 = vsel %vm799, %v3332, 0
      %v3364 = vsel %vm799, %v3333, 0
      %v3367 = vsel %vm799, %v3334, 0
      %v3370 = vsel %vm799, %v3335, 0
      %v3373 = vsel %vm799, %v3336, 0
      %v3376 = vsel %vm799, %v3337, 0
      %v3379 = vsel %vm799, %v3338, 0
      %v3382 = vsel %vm799, %v3339, 0
      %v3385 = vsel %vm799, %v3340, 0
      %v3388 = vsel %vm799, %v3341, 0
      %v3391 = vsel %vm848, %v3261, 0
      %3393 = vmatprep.subr.bf16.mxu0 0
      %3394 = vmatpush1.bf16.msra.mxu0 %v3391
      %3395 = vmatprep.subr.bf16.mxu0 0
      %3396 = vmatpush1.bf16.msra.mxu0 0
      %3397 = vmatprep.subr.bf16.mxu0 0
      %3398 = vmatpush1.bf16.msra.mxu0 0
      %3399 = vmatprep.subr.bf16.mxu0 0
      %3400 = vmatpush1.bf16.msra.mxu0 0
      %3401 = vmatprep.subr.bf16.mxu0 0
      %3402 = vmatpush1.bf16.msra.mxu0 0
      %3403 = vmatprep.subr.bf16.mxu0 0
      %3404 = vmatpush1.bf16.msra.mxu0 0
      %3405 = vmatprep.subr.bf16.mxu0 0
      %3406 = vmatpush1.bf16.msra.mxu0 0
      %3407 = vmatprep.subr.bf16.mxu0 0
      %3408 = vmatpush1.bf16.msra.mxu0 0
      %3409 = vmatprep.subr.bf16.mxu0 0
      %3410 = vmatpush1.bf16.msra.mxu0 0
      %3411 = vmatprep.subr.bf16.mxu0 0
      %3412 = vmatpush1.bf16.msra.mxu0 0
      %3413 = vmatprep.subr.bf16.mxu0 0
      %3414 = vmatpush1.bf16.msra.mxu0 0
      %3415 = vmatprep.subr.bf16.mxu0 0
      %3416 = vmatpush1.bf16.msra.mxu0 0
      %3417 = vmatprep.subr.bf16.mxu0 0
      %3418 = vmatpush1.bf16.msra.mxu0 0
      %3419 = vmatprep.subr.bf16.mxu0 0
      %3420 = vmatpush1.bf16.msra.mxu0 0
      %3421 = vmatprep.subr.bf16.mxu0 0
      %3422 = vmatpush1.bf16.msra.mxu0 0
      %3423 = vmatprep.subr.bf16.mxu0 0
      %3424 = vmatpush1.bf16.msra.mxu0 0
      %3425 = vmatprep.mubr.bf16.mxu0 0
      %3426 = vmatmul.mubr.bf16.gmra.mrb[0].mxu0 %v3343
      %v3427 = vpop.f32.mrb[0].mxu0
      %v3428 = vadd.f32 0.0, %v3427
      %v3429 = vpop.f32.mrb[0].mxu0
      %v3430 = vpop.f32.mrb[0].mxu0
      %v3431 = vadd.f32 0.0, %v3430
      %v3432 = vpop.f32.mrb[0].mxu0
      %3433 = vmatprep.mubr.bf16.mxu0 0
      %3434 = vmatmul.mubr.bf16.gmra.mrb[0].mxu0 %v3346
      %v3435 = vpop.f32.mrb[0].mxu0
      %v3436 = vadd.f32 0.0, %v3435
      %v3437 = vpop.f32.mrb[0].mxu0
      %v3438 = vpop.f32.mrb[0].mxu0
      %v3439 = vadd.f32 0.0, %v3438
      %v3440 = vpop.f32.mrb[0].mxu0
      %3441 = vmatprep.mubr.bf16.mxu0 0
      %3442 = vmatmul.mubr.bf16.gmra.mrb[0].mxu0 %v3349
      %v3443 = vpop.f32.mrb[0].mxu0
      %v3444 = vadd.f32 0.0, %v3443
      %v3445 = vpop.f32.mrb[0].mxu0
      %v3446 = vpop.f32.mrb[0].mxu0
      %v3447 = vadd.f32 0.0, %v3446
      %v3448 = vpop.f32.mrb[0].mxu0
      %3449 = vmatprep.mubr.bf16.mxu0 0
      %3450 = vmatmul.mubr.bf16.gmra.mrb[0].mxu0 %v3352
      %v3451 = vpop.f32.mrb[0].mxu0
      %v3452 = vadd.f32 0.0, %v3451
      %v3453 = vpop.f32.mrb[0].mxu0
      %v3454 = vpop.f32.mrb[0].mxu0
      %v3455 = vadd.f32 0.0, %v3454
      %v3456 = vpop.f32.mrb[0].mxu0
      %3457 = vmatprep.mubr.bf16.mxu0 0
      %3458 = vmatmul.mubr.bf16.gmra.mrb[0].mxu0 %v3355
      %v3459 = vpop.f32.mrb[0].mxu0
      %v3460 = vadd.f32 0.0, %v3459
      %v3461 = vpop.f32.mrb[0].mxu0
      %v3462 = vpop.f32.mrb[0].mxu0
      %v3463 = vadd.f32 0.0, %v3462
      %v3464 = vpop.f32.mrb[0].mxu0
      %3465 = vmatprep.mubr.bf16.mxu0 0
      %3466 = vmatmul.mubr.bf16.gmra.mrb[0].mxu0 %v3358
      %v3467 = vpop.f32.mrb[0].mxu0
      %v3468 = vadd.f32 0.0, %v3467
      %v3469 = vpop.f32.mrb[0].mxu0
      %v3470 = vpop.f32.mrb[0].mxu0
      %v3471 = vadd.f32 0.0, %v3470
      %v3472 = vpop.f32.mrb[0].mxu0
      %3473 = vmatprep.mubr.bf16.mxu0 0
      %3474 = vmatmul.mubr.bf16.gmra.mrb[0].mxu0 %v3361
      %v3475 = vpop.f32.mrb[0].mxu0
      %v3476 = vadd.f32 0.0, %v3475
      %v3477 = vpop.f32.mrb[0].mxu0
      %v3478 = vpop.f32.mrb[0].mxu0
      %v3479 = vadd.f32 0.0, %v3478
      %v3480 = vpop.f32.mrb[0].mxu0
      %3481 = vmatprep.mubr.bf16.mxu0 0
      %3482 = vmatmul.mubr.bf16.gmra.mrb[0].mxu0 %v3364
      %v3483 = vpop.f32.mrb[0].mxu0
      %v3484 = vadd.f32 0.0, %v3483
      %v3485 = vpop.f32.mrb[0].mxu0
      %v3486 = vpop.f32.mrb[0].mxu0
      %v3487 = vadd.f32 0.0, %v3486
      %v3488 = vpop.f32.mrb[0].mxu0
      %3489 = vmatprep.mubr.bf16.mxu0 0
      %3490 = vmatmul.mubr.bf16.gmra.mrb[0].mxu0 %v3367
      %v3491 = vpop.f32.mrb[0].mxu0
      %v3492 = vadd.f32 0.0, %v3491
      %v3493 = vpop.f32.mrb[0].mxu0
      %v3494 = vpop.f32.mrb[0].mxu0
      %v3495 = vadd.f32 0.0, %v3494
      %v3496 = vpop.f32.mrb[0].mxu0
      %3497 = vmatprep.mubr.bf16.mxu0 0
      %3498 = vmatmul.mubr.bf16.gmra.mrb[0].mxu0 %v3370
      %v3499 = vpop.f32.mrb[0].mxu0
      %v3500 = vadd.f32 0.0, %v3499
      %v3501 = vpop.f32.mrb[0].mxu0
      %v3502 = vpop.f32.mrb[0].mxu0
      %v3503 = vadd.f32 0.0, %v3502
      %v3504 = vpop.f32.mrb[0].mxu0
      %3505 = vmatprep.mubr.bf16.mxu0 0
      %3506 = vmatmul.mubr.bf16.gmra.mrb[0].mxu0 %v3373
      %v3507 = vpop.f32.mrb[0].mxu0
      %v3508 = vadd.f32 0.0, %v3507
      %v3509 = vpop.f32.mrb[0].mxu0
      %v3510 = vpop.f32.mrb[0].mxu0
      %v3511 = vadd.f32 0.0, %v3510
      %v3512 = vpop.f32.mrb[0].mxu0
      %3513 = vmatprep.mubr.bf16.mxu0 0
      %3514 = vmatmul.mubr.bf16.gmra.mrb[0].mxu0 %v3376
      %v3515 = vpop.f32.mrb[0].mxu0
      %v3516 = vadd.f32 0.0, %v3515
      %v3517 = vpop.f32.mrb[0].mxu0
      %v3518 = vpop.f32.mrb[0].mxu0
      %v3519 = vadd.f32 0.0, %v3518
      %v3520 = vpop.f32.mrb[0].mxu0
      %3521 = vmatprep.mubr.bf16.mxu0 0
      %3522 = vmatmul.mubr.bf16.gmra.mrb[0].mxu0 %v3379
      %v3523 = vpop.f32.mrb[0].mxu0
      %v3524 = vadd.f32 0.0, %v3523
      %v3525 = vpop.f32.mrb[0].mxu0
      %v3526 = vpop.f32.mrb[0].mxu0
      %v3527 = vadd.f32 0.0, %v3526
      %v3528 = vpop.f32.mrb[0].mxu0
      %3529 = vmatprep.mubr.bf16.mxu0 0
      %3530 = vmatmul.mubr.bf16.gmra.mrb[0].mxu0 %v3382
      %v3531 = vpop.f32.mrb[0].mxu0
      %v3532 = vadd.f32 0.0, %v3531
      %v3533 = vpop.f32.mrb[0].mxu0
      %v3534 = vpop.f32.mrb[0].mxu0
      %v3535 = vadd.f32 0.0, %v3534
      %v3536 = vpop.f32.mrb[0].mxu0
      %3537 = vmatprep.mubr.bf16.mxu0 0
      %3538 = vmatmul.mubr.bf16.gmra.mrb[0].mxu0 %v3385
      %v3539 = vpop.f32.mrb[0].mxu0
      %v3540 = vadd.f32 0.0, %v3539
      %v3541 = vpop.f32.mrb[0].mxu0
      %v3542 = vpop.f32.mrb[0].mxu0
      %v3543 = vadd.f32 0.0, %v3542
      %v3544 = vpop.f32.mrb[0].mxu0
      %3545 = vmatprep.mubr.bf16.mxu0 0
      %3546 = vmatmul.mubr.bf16.gmra.mrb[0].mxu0 %v3388
      %v3547 = vpop.f32.mrb[0].mxu0
      %v3548 = vadd.f32 0.0, %v3547
      %v3549 = vpop.f32.mrb[0].mxu0
      %v3550 = vpop.f32.mrb[0].mxu0
      %v3551 = vadd.f32 0.0, %v3550
      %v3552 = vpop.f32.mrb[0].mxu0
      %3553 = vdwg.mxu0
      %v3554 = vadd.f32 %v3176, %v3428
      %v3555 = vadd.f32 %v3177, %v3431
      %v3556 = vadd.f32 %v3178, %v3436
      %v3557 = vadd.f32 %v3179, %v3439
      %v3558 = vadd.f32 %v3180, %v3444
      %v3559 = vadd.f32 %v3181, %v3447
      %v3560 = vadd.f32 %v3182, %v3452
      %v3561 = vadd.f32 %v3183, %v3455
      %v3562 = vadd.f32 %v3184, %v3460
      %v3563 = vadd.f32 %v3185, %v3463
      %v3564 = vadd.f32 %v3186, %v3468
      %v3565 = vadd.f32 %v3187, %v3471
      %v3566 = vadd.f32 %v3188, %v3476
      %v3567 = vadd.f32 %v3189, %v3479
      %v3568 = vadd.f32 %v3190, %v3484
      %v3569 = vadd.f32 %v3191, %v3487
      %v3570 = vadd.f32 %v3192, %v3492
      %v3571 = vadd.f32 %v3193, %v3495
      %v3572 = vadd.f32 %v3194, %v3500
      %v3573 = vadd.f32 %v3195, %v3503
      %v3574 = vadd.f32 %v3196, %v3508
      %v3575 = vadd.f32 %v3197, %v3511
      %v3576 = vadd.f32 %v3198, %v3516
      %v3577 = vadd.f32 %v3199, %v3519
      %v3578 = vadd.f32 %v3200, %v3524
      %v3579 = vadd.f32 %v3201, %v3527
      %v3580 = vadd.f32 %v3202, %v3532
      %v3581 = vadd.f32 %v3203, %v3535
      %v3582 = vadd.f32 %v3204, %v3540
      %v3583 = vadd.f32 %v3205, %v3543
      %v3584 = vadd.f32 %v3206, %v3548
      %v3585 = vadd.f32 %v3207, %v3551
      %v3587 = vshrl.u32 %v3212, 16
      %v3589 = vrot.slane %v3587, 4
      %v3590 = vshll.u32 %v3212, 16
      %v3592 = vrot.slane %v3590, 5
      %v3593 = vor.u32 %v3589, %v3592
      %v3594 = vrot.slane %v3593, 4
      %v3596 = vshll.u32 %v3213, 16
      %v3598 = vrot.slane %v3596, 5
      %v3599 = vsel %vm364, %v3594, %v3598
      %v3600 = vshrl.u32 %v3213, 16
      %v3602 = vrot.slane %v3600, 4
      %v3603 = vor.u32 %v3602, %v3598
      %v3604 = vrot.slane %v3603, 4
      %v3606 = vshll.u32 %v3214, 16
      %v3608 = vrot.slane %v3606, 5
      %v3609 = vsel %vm364, %v3604, %v3608
      %v3611 = vshrl.u32 %v3215, 16
      %v3613 = vrot.slane %v3611, 4
      %v3614 = vshll.u32 %v3215, 16
      %v3616 = vrot.slane %v3614, 5
      %v3617 = vor.u32 %v3613, %v3616
      %v3618 = vrot.slane %v3617, 4
      %v3620 = vshll.u32 %v3216, 16
      %v3622 = vrot.slane %v3620, 5
      %v3623 = vsel %vm364, %v3618, %v3622
      %v3624 = vshrl.u32 %v3216, 16
      %v3626 = vrot.slane %v3624, 4
      %v3627 = vor.u32 %v3626, %v3622
      %v3628 = vrot.slane %v3627, 4
      %v3630 = vshll.u32 %v3217, 16
      %v3632 = vrot.slane %v3630, 5
      %v3633 = vsel %vm364, %v3628, %v3632
      %v3635 = vshrl.u32 %v3218, 16
      %v3637 = vrot.slane %v3635, 4
      %v3638 = vshll.u32 %v3218, 16
      %v3640 = vrot.slane %v3638, 5
      %v3641 = vor.u32 %v3637, %v3640
      %v3642 = vrot.slane %v3641, 4
      %v3644 = vshll.u32 %v3219, 16
      %v3646 = vrot.slane %v3644, 5
      %v3647 = vsel %vm364, %v3642, %v3646
      %v3648 = vshrl.u32 %v3219, 16
      %v3650 = vrot.slane %v3648, 4
      %v3651 = vor.u32 %v3650, %v3646
      %v3652 = vrot.slane %v3651, 4
      %v3654 = vshll.u32 %v3220, 16
      %v3656 = vrot.slane %v3654, 5
      %v3657 = vsel %vm364, %v3652, %v3656
      %v3659 = vshrl.u32 %v3221, 16
      %v3661 = vrot.slane %v3659, 4
      %v3662 = vshll.u32 %v3221, 16
      %v3664 = vrot.slane %v3662, 5
      %v3665 = vor.u32 %v3661, %v3664
      %v3666 = vrot.slane %v3665, 4
      %v3668 = vshll.u32 %v3222, 16
      %v3670 = vrot.slane %v3668, 5
      %v3671 = vsel %vm364, %v3666, %v3670
      %v3672 = vshrl.u32 %v3222, 16
      %v3674 = vrot.slane %v3672, 4
      %v3675 = vor.u32 %v3674, %v3670
      %v3676 = vrot.slane %v3675, 4
      %v3678 = vshll.u32 %v3223, 16
      %v3680 = vrot.slane %v3678, 5
      %v3681 = vsel %vm364, %v3676, %v3680
      %v3683 = vshrl.u32 %v3224, 16
      %v3685 = vrot.slane %v3683, 4
      %v3686 = vshll.u32 %v3224, 16
      %v3688 = vrot.slane %v3686, 5
      %v3689 = vor.u32 %v3685, %v3688
      %v3690 = vrot.slane %v3689, 4
      %v3692 = vshll.u32 %v3225, 16
      %v3694 = vrot.slane %v3692, 5
      %v3695 = vsel %vm364, %v3690, %v3694
      %v3696 = vshrl.u32 %v3225, 16
      %v3698 = vrot.slane %v3696, 4
      %v3699 = vor.u32 %v3698, %v3694
      %v3700 = vrot.slane %v3699, 4
      %v3702 = vshll.u32 %v3226, 16
      %v3704 = vrot.slane %v3702, 5
      %v3705 = vsel %vm364, %v3700, %v3704
      %v3707 = vshrl.u32 %v3227, 16
      %v3709 = vrot.slane %v3707, 4
      %v3710 = vshll.u32 %v3227, 16
      %v3712 = vrot.slane %v3710, 5
      %v3713 = vor.u32 %v3709, %v3712
      %v3714 = vrot.slane %v3713, 4
      %v3716 = vshll.u32 %v3228, 16
      %v3718 = vrot.slane %v3716, 5
      %v3719 = vsel %vm364, %v3714, %v3718
      %v3720 = vshrl.u32 %v3228, 16
      %v3722 = vrot.slane %v3720, 4
      %v3723 = vor.u32 %v3722, %v3718
      %v3724 = vrot.slane %v3723, 4
      %v3726 = vshll.u32 %v3229, 16
      %v3728 = vrot.slane %v3726, 5
      %v3729 = vsel %vm364, %v3724, %v3728
      %v3731 = vshrl.u32 %v3230, 16
      %v3733 = vrot.slane %v3731, 4
      %v3734 = vshll.u32 %v3230, 16
      %v3736 = vrot.slane %v3734, 5
      %v3737 = vor.u32 %v3733, %v3736
      %v3738 = vrot.slane %v3737, 4
      %v3740 = vshll.u32 %v3231, 16
      %v3742 = vrot.slane %v3740, 5
      %v3743 = vsel %vm364, %v3738, %v3742
      %v3744 = vshrl.u32 %v3231, 16
      %v3746 = vrot.slane %v3744, 4
      %v3747 = vor.u32 %v3746, %v3742
      %v3748 = vrot.slane %v3747, 4
      %v3750 = vshll.u32 %v3232, 16
      %v3752 = vrot.slane %v3750, 5
      %v3753 = vsel %vm364, %v3748, %v3752
      %v3755 = vshrl.u32 %v3233, 16
      %v3757 = vrot.slane %v3755, 4
      %v3758 = vshll.u32 %v3233, 16
      %v3760 = vrot.slane %v3758, 5
      %v3761 = vor.u32 %v3757, %v3760
      %v3762 = vrot.slane %v3761, 4
      %v3764 = vshll.u32 %v3234, 16
      %v3766 = vrot.slane %v3764, 5
      %v3767 = vsel %vm364, %v3762, %v3766
      %v3768 = vshrl.u32 %v3234, 16
      %v3770 = vrot.slane %v3768, 4
      %v3771 = vor.u32 %v3770, %v3766
      %v3772 = vrot.slane %v3771, 4
      %v3774 = vshll.u32 %v3235, 16
      %v3776 = vrot.slane %v3774, 5
      %v3777 = vsel %vm364, %v3772, %v3776
      %v3779 = vshrl.u32 %v3236, 16
      %v3781 = vrot.slane %v3779, 4
      %v3782 = vshll.u32 %v3236, 16
      %v3784 = vrot.slane %v3782, 5
      %v3785 = vor.u32 %v3781, %v3784
      %v3786 = vrot.slane %v3785, 4
      %v3788 = vshll.u32 %v3237, 16
      %v3790 = vrot.slane %v3788, 5
      %v3791 = vsel %vm364, %v3786, %v3790
      %v3792 = vshrl.u32 %v3237, 16
      %v3794 = vrot.slane %v3792, 4
      %v3795 = vor.u32 %v3794, %v3790
      %v3796 = vrot.slane %v3795, 4
      %v3798 = vshll.u32 %v3238, 16
      %v3800 = vrot.slane %v3798, 5
      %v3801 = vsel %vm364, %v3796, %v3800
      %v3803 = vshrl.u32 %v3239, 16
      %v3805 = vrot.slane %v3803, 4
      %v3806 = vshll.u32 %v3239, 16
      %v3808 = vrot.slane %v3806, 5
      %v3809 = vor.u32 %v3805, %v3808
      %v3810 = vrot.slane %v3809, 4
      %v3812 = vshll.u32 %v3240, 16
      %v3814 = vrot.slane %v3812, 5
      %v3815 = vsel %vm364, %v3810, %v3814
      %v3816 = vshrl.u32 %v3240, 16
      %v3818 = vrot.slane %v3816, 4
      %v3819 = vor.u32 %v3818, %v3814
      %v3820 = vrot.slane %v3819, 4
      %v3822 = vshll.u32 %v3241, 16
      %v3824 = vrot.slane %v3822, 5
      %v3825 = vsel %vm364, %v3820, %v3824
      %v3827 = vshrl.u32 %v3242, 16
      %v3829 = vrot.slane %v3827, 4
      %v3830 = vshll.u32 %v3242, 16
      %v3832 = vrot.slane %v3830, 5
      %v3833 = vor.u32 %v3829, %v3832
      %v3834 = vrot.slane %v3833, 4
      %v3836 = vshll.u32 %v3243, 16
      %v3838 = vrot.slane %v3836, 5
      %v3839 = vsel %vm364, %v3834, %v3838
      %v3840 = vshrl.u32 %v3243, 16
      %v3842 = vrot.slane %v3840, 4
      %v3843 = vor.u32 %v3842, %v3838
      %v3844 = vrot.slane %v3843, 4
      %v3846 = vshll.u32 %v3244, 16
      %v3848 = vrot.slane %v3846, 5
      %v3849 = vsel %vm364, %v3844, %v3848
      %v3851 = vshrl.u32 %v3245, 16
      %v3853 = vrot.slane %v3851, 4
      %v3854 = vshll.u32 %v3245, 16
      %v3856 = vrot.slane %v3854, 5
      %v3857 = vor.u32 %v3853, %v3856
      %v3858 = vrot.slane %v3857, 4
      %v3860 = vshll.u32 %v3246, 16
      %v3862 = vrot.slane %v3860, 5
      %v3863 = vsel %vm364, %v3858, %v3862
      %v3864 = vshrl.u32 %v3246, 16
      %v3866 = vrot.slane %v3864, 4
      %v3867 = vor.u32 %v3866, %v3862
      %v3868 = vrot.slane %v3867, 4
      %v3870 = vshll.u32 %v3247, 16
      %v3872 = vrot.slane %v3870, 5
      %v3873 = vsel %vm364, %v3868, %v3872
      %v3875 = vshrl.u32 %v3248, 16
      %v3877 = vrot.slane %v3875, 4
      %v3878 = vshll.u32 %v3248, 16
      %v3880 = vrot.slane %v3878, 5
      %v3881 = vor.u32 %v3877, %v3880
      %v3882 = vrot.slane %v3881, 4
      %v3884 = vshll.u32 %v3249, 16
      %v3886 = vrot.slane %v3884, 5
      %v3887 = vsel %vm364, %v3882, %v3886
      %v3888 = vshrl.u32 %v3249, 16
      %v3890 = vrot.slane %v3888, 4
      %v3891 = vor.u32 %v3890, %v3886
      %v3892 = vrot.slane %v3891, 4
      %v3894 = vshll.u32 %v3250, 16
      %v3896 = vrot.slane %v3894, 5
      %v3897 = vsel %vm364, %v3892, %v3896
      %v3899 = vshrl.u32 %v3251, 16
      %v3901 = vrot.slane %v3899, 4
      %v3902 = vshll.u32 %v3251, 16
      %v3904 = vrot.slane %v3902, 5
      %v3905 = vor.u32 %v3901, %v3904
      %v3906 = vrot.slane %v3905, 4
      %v3908 = vshll.u32 %v3252, 16
      %v3910 = vrot.slane %v3908, 5
      %v3911 = vsel %vm364, %v3906, %v3910
      %v3912 = vshrl.u32 %v3252, 16
      %v3914 = vrot.slane %v3912, 4
      %v3915 = vor.u32 %v3914, %v3910
      %v3916 = vrot.slane %v3915, 4
      %v3918 = vshll.u32 %v3253, 16
      %v3920 = vrot.slane %v3918, 5
      %v3921 = vsel %vm364, %v3916, %v3920
      %v3923 = vshrl.u32 %v3254, 16
      %v3925 = vrot.slane %v3923, 4
      %v3926 = vshll.u32 %v3254, 16
      %v3928 = vrot.slane %v3926, 5
      %v3929 = vor.u32 %v3925, %v3928
      %v3930 = vrot.slane %v3929, 4
      %v3932 = vshll.u32 %v3255, 16
      %v3934 = vrot.slane %v3932, 5
      %v3935 = vsel %vm364, %v3930, %v3934
      %v3936 = vshrl.u32 %v3255, 16
      %v3938 = vrot.slane %v3936, 4
      %v3939 = vor.u32 %v3938, %v3934
      %v3940 = vrot.slane %v3939, 4
      %v3942 = vshll.u32 %v3256, 16
      %v3944 = vrot.slane %v3942, 5
      %v3945 = vsel %vm364, %v3940, %v3944
      %v3947 = vshrl.u32 %v3257, 16
      %v3949 = vrot.slane %v3947, 4
      %v3950 = vshll.u32 %v3257, 16
      %v3952 = vrot.slane %v3950, 5
      %v3953 = vor.u32 %v3949, %v3952
      %v3954 = vrot.slane %v3953, 4
      %v3956 = vshll.u32 %v3258, 16
      %v3958 = vrot.slane %v3956, 5
      %v3959 = vsel %vm364, %v3954, %v3958
      %v3960 = vshrl.u32 %v3258, 16
      %v3962 = vrot.slane %v3960, 4
      %v3963 = vor.u32 %v3962, %v3958
      %v3964 = vrot.slane %v3963, 4
      %v3966 = vshll.u32 %v3259, 16
      %v3968 = vrot.slane %v3966, 5
      %v3969 = vsel %vm364, %v3964, %v3968
      %s3970 = scalar_lea.vmem %s273, 14
      %v3971 = vld [vmem:[%s3970] sm:$0x3]
      %v3972 = vunpack.c.l.b16 %v3599
      %v3973 = vunpack.c.l.b16 %v3609
      %v3974 = vunpack.c.l.b16 %v3623
      %v3975 = vunpack.c.l.b16 %v3633
      %v3976 = vunpack.c.l.b16 %v3647
      %v3977 = vunpack.c.l.b16 %v3657
      %v3978 = vunpack.c.l.b16 %v3671
      %v3979 = vunpack.c.l.b16 %v3681
      %v3980 = vunpack.c.l.b16 %v3695
      %v3981 = vunpack.c.l.b16 %v3705
      %v3982 = vunpack.c.l.b16 %v3719
      %v3983 = vunpack.c.l.b16 %v3729
      %v3984 = vunpack.c.l.b16 %v3743
      %v3985 = vunpack.c.l.b16 %v3753
      %v3986 = vunpack.c.l.b16 %v3767
      %v3987 = vunpack.c.l.b16 %v3777
      %v3988 = vunpack.c.l.b16 %v3791
      %v3989 = vunpack.c.l.b16 %v3801
      %v3990 = vunpack.c.l.b16 %v3815
      %v3991 = vunpack.c.l.b16 %v3825
      %v3992 = vunpack.c.l.b16 %v3839
      %v3993 = vunpack.c.l.b16 %v3849
      %v3994 = vunpack.c.l.b16 %v3863
      %v3995 = vunpack.c.l.b16 %v3873
      %v3996 = vunpack.c.l.b16 %v3887
      %v3997 = vunpack.c.l.b16 %v3897
      %v3998 = vunpack.c.l.b16 %v3911
      %v3999 = vunpack.c.l.b16 %v3921
      %v4000 = vunpack.c.l.b16 %v3935
      %v4001 = vunpack.c.l.b16 %v3945
      %v4002 = vunpack.c.l.b16 %v3959
      %v4003 = vunpack.c.l.b16 %v3969
      %v4004 = vpack.c.b16 %v3973, %v3972
      %v4005 = vpack.c.b16 %v3975, %v3974
      %v4006 = vpack.c.b16 %v3977, %v3976
      %v4007 = vpack.c.b16 %v3979, %v3978
      %v4008 = vpack.c.b16 %v3981, %v3980
      %v4009 = vpack.c.b16 %v3983, %v3982
      %v4010 = vpack.c.b16 %v3985, %v3984
      %v4011 = vpack.c.b16 %v3987, %v3986
      %v4012 = vpack.c.b16 %v3989, %v3988
      %v4013 = vpack.c.b16 %v3991, %v3990
      %v4014 = vpack.c.b16 %v3993, %v3992
      %v4015 = vpack.c.b16 %v3995, %v3994
      %v4016 = vpack.c.b16 %v3997, %v3996
      %v4017 = vpack.c.b16 %v3999, %v3998
      %v4018 = vpack.c.b16 %v4001, %v4000
      %v4019 = vpack.c.b16 %v4003, %v4002
      %v4021 = vsel %vm799, %v4004, 0
      %v4024 = vsel %vm799, %v4005, 0
      %v4027 = vsel %vm799, %v4006, 0
      %v4030 = vsel %vm799, %v4007, 0
      %v4033 = vsel %vm799, %v4008, 0
      %v4036 = vsel %vm799, %v4009, 0
      %v4039 = vsel %vm799, %v4010, 0
      %v4042 = vsel %vm799, %v4011, 0
      %v4045 = vsel %vm799, %v4012, 0
      %v4048 = vsel %vm799, %v4013, 0
      %v4051 = vsel %vm799, %v4014, 0
      %v4054 = vsel %vm799, %v4015, 0
      %v4057 = vsel %vm799, %v4016, 0
      %v4060 = vsel %vm799, %v4017, 0
      %v4063 = vsel %vm799, %v4018, 0
      %v4066 = vsel %vm799, %v4019, 0
      %v4069 = vsel %vm848, %v3971, 0
      %4071 = vmatprep.subr.bf16.mxu0 0
      %4072 = vmatpush1.bf16.msra.mxu0 %v4069
      %4073 = vmatprep.subr.bf16.mxu0 0
      %4074 = vmatpush1.bf16.msra.mxu0 0
      %4075 = vmatprep.subr.bf16.mxu0 0
      %4076 = vmatpush1.bf16.msra.mxu0 0
      %4077 = vmatprep.subr.bf16.mxu0 0
      %4078 = vmatpush1.bf16.msra.mxu0 0
      %4079 = vmatprep.subr.bf16.mxu0 0
      %4080 = vmatpush1.bf16.msra.mxu0 0
      %4081 = vmatprep.subr.bf16.mxu0 0
      %4082 = vmatpush1.bf16.msra.mxu0 0
      %4083 = vmatprep.subr.bf16.mxu0 0
      %4084 = vmatpush1.bf16.msra.mxu0 0
      %4085 = vmatprep.subr.bf16.mxu0 0
      %4086 = vmatpush1.bf16.msra.mxu0 0
      %4087 = vmatprep.subr.bf16.mxu0 0
      %4088 = vmatpush1.bf16.msra.mxu0 0
      %4089 = vmatprep.subr.bf16.mxu0 0
      %4090 = vmatpush1.bf16.msra.mxu0 0
      %4091 = vmatprep.subr.bf16.mxu0 0
      %4092 = vmatpush1.bf16.msra.mxu0 0
      %4093 = vmatprep.subr.bf16.mxu0 0
      %4094 = vmatpush1.bf16.msra.mxu0 0
      %4095 = vmatprep.subr.bf16.mxu0 0
      %4096 = vmatpush1.bf16.msra.mxu0 0
      %4097 = vmatprep.subr.bf16.mxu0 0
      %4098 = vmatpush1.bf16.msra.mxu0 0
      %4099 = vmatprep.subr.bf16.mxu0 0
      %4100 = vmatpush1.bf16.msra.mxu0 0
      %4101 = vmatprep.subr.bf16.mxu0 0
      %4102 = vmatpush1.bf16.msra.mxu0 0
      %4103 = vmatprep.mubr.bf16.mxu0 0
      %4104 = vmatmul.mubr.bf16.gmra.mrb[0].mxu0 %v4021
      %v4105 = vpop.f32.mrb[0].mxu0
      %v4106 = vadd.f32 0.0, %v4105
      %v4107 = vpop.f32.mrb[0].mxu0
      %v4108 = vpop.f32.mrb[0].mxu0
      %v4109 = vadd.f32 0.0, %v4108
      %v4110 = vpop.f32.mrb[0].mxu0
      %4111 = vmatprep.mubr.bf16.mxu0 0
      %4112 = vmatmul.mubr.bf16.gmra.mrb[0].mxu0 %v4024
      %v4113 = vpop.f32.mrb[0].mxu0
      %v4114 = vadd.f32 0.0, %v4113
      %v4115 = vpop.f32.mrb[0].mxu0
      %v4116 = vpop.f32.mrb[0].mxu0
      %v4117 = vadd.f32 0.0, %v4116
      %v4118 = vpop.f32.mrb[0].mxu0
      %4119 = vmatprep.mubr.bf16.mxu0 0
      %4120 = vmatmul.mubr.bf16.gmra.mrb[0].mxu0 %v4027
      %v4121 = vpop.f32.mrb[0].mxu0
      %v4122 = vadd.f32 0.0, %v4121
      %v4123 = vpop.f32.mrb[0].mxu0
      %v4124 = vpop.f32.mrb[0].mxu0
      %v4125 = vadd.f32 0.0, %v4124
      %v4126 = vpop.f32.mrb[0].mxu0
      %4127 = vmatprep.mubr.bf16.mxu0 0
      %4128 = vmatmul.mubr.bf16.gmra.mrb[0].mxu0 %v4030
      %v4129 = vpop.f32.mrb[0].mxu0
      %v4130 = vadd.f32 0.0, %v4129
      %v4131 = vpop.f32.mrb[0].mxu0
      %v4132 = vpop.f32.mrb[0].mxu0
      %v4133 = vadd.f32 0.0, %v4132
      %v4134 = vpop.f32.mrb[0].mxu0
      %4135 = vmatprep.mubr.bf16.mxu0 0
      %4136 = vmatmul.mubr.bf16.gmra.mrb[0].mxu0 %v4033
      %v4137 = vpop.f32.mrb[0].mxu0
      %v4138 = vadd.f32 0.0, %v4137
      %v4139 = vpop.f32.mrb[0].mxu0
      %v4140 = vpop.f32.mrb[0].mxu0
      %v4141 = vadd.f32 0.0, %v4140
      %v4142 = vpop.f32.mrb[0].mxu0
      %4143 = vmatprep.mubr.bf16.mxu0 0
      %4144 = vmatmul.mubr.bf16.gmra.mrb[0].mxu0 %v4036
      %v4145 = vpop.f32.mrb[0].mxu0
      %v4146 = vadd.f32 0.0, %v4145
      %v4147 = vpop.f32.mrb[0].mxu0
      %v4148 = vpop.f32.mrb[0].mxu0
      %v4149 = vadd.f32 0.0, %v4148
      %v4150 = vpop.f32.mrb[0].mxu0
      %4151 = vmatprep.mubr.bf16.mxu0 0
      %4152 = vmatmul.mubr.bf16.gmra.mrb[0].mxu0 %v4039
      %v4153 = vpop.f32.mrb[0].mxu0
      %v4154 = vadd.f32 0.0, %v4153
      %v4155 = vpop.f32.mrb[0].mxu0
      %v4156 = vpop.f32.mrb[0].mxu0
      %v4157 = vadd.f32 0.0, %v4156
      %v4158 = vpop.f32.mrb[0].mxu0
      %4159 = vmatprep.mubr.bf16.mxu0 0
      %4160 = vmatmul.mubr.bf16.gmra.mrb[0].mxu0 %v4042
      %v4161 = vpop.f32.mrb[0].mxu0
      %v4162 = vadd.f32 0.0, %v4161
      %v4163 = vpop.f32.mrb[0].mxu0
      %v4164 = vpop.f32.mrb[0].mxu0
      %v4165 = vadd.f32 0.0, %v4164
      %v4166 = vpop.f32.mrb[0].mxu0
      %4167 = vmatprep.mubr.bf16.mxu0 0
      %4168 = vmatmul.mubr.bf16.gmra.mrb[0].mxu0 %v4045
      %v4169 = vpop.f32.mrb[0].mxu0
      %v4170 = vadd.f32 0.0, %v4169
      %v4171 = vpop.f32.mrb[0].mxu0
      %v4172 = vpop.f32.mrb[0].mxu0
      %v4173 = vadd.f32 0.0, %v4172
      %v4174 = vpop.f32.mrb[0].mxu0
      %4175 = vmatprep.mubr.bf16.mxu0 0
      %4176 = vmatmul.mubr.bf16.gmra.mrb[0].mxu0 %v4048
      %v4177 = vpop.f32.mrb[0].mxu0
      %v4178 = vadd.f32 0.0, %v4177
      %v4179 = vpop.f32.mrb[0].mxu0
      %v4180 = vpop.f32.mrb[0].mxu0
      %v4181 = vadd.f32 0.0, %v4180
      %v4182 = vpop.f32.mrb[0].mxu0
      %4183 = vmatprep.mubr.bf16.mxu0 0
      %4184 = vmatmul.mubr.bf16.gmra.mrb[0].mxu0 %v4051
      %v4185 = vpop.f32.mrb[0].mxu0
      %v4186 = vadd.f32 0.0, %v4185
      %v4187 = vpop.f32.mrb[0].mxu0
      %v4188 = vpop.f32.mrb[0].mxu0
      %v4189 = vadd.f32 0.0, %v4188
      %v4190 = vpop.f32.mrb[0].mxu0
      %4191 = vmatprep.mubr.bf16.mxu0 0
      %4192 = vmatmul.mubr.bf16.gmra.mrb[0].mxu0 %v4054
      %v4193 = vpop.f32.mrb[0].mxu0
      %v4194 = vadd.f32 0.0, %v4193
      %v4195 = vpop.f32.mrb[0].mxu0
      %v4196 = vpop.f32.mrb[0].mxu0
      %v4197 = vadd.f32 0.0, %v4196
      %v4198 = vpop.f32.mrb[0].mxu0
      %4199 = vmatprep.mubr.bf16.mxu0 0
      %4200 = vmatmul.mubr.bf16.gmra.mrb[0].mxu0 %v4057
      %v4201 = vpop.f32.mrb[0].mxu0
      %v4202 = vadd.f32 0.0, %v4201
      %v4203 = vpop.f32.mrb[0].mxu0
      %v4204 = vpop.f32.mrb[0].mxu0
      %v4205 = vadd.f32 0.0, %v4204
      %v4206 = vpop.f32.mrb[0].mxu0
      %4207 = vmatprep.mubr.bf16.mxu0 0
      %4208 = vmatmul.mubr.bf16.gmra.mrb[0].mxu0 %v4060
      %v4209 = vpop.f32.mrb[0].mxu0
      %v4210 = vadd.f32 0.0, %v4209
      %v4211 = vpop.f32.mrb[0].mxu0
      %v4212 = vpop.f32.mrb[0].mxu0
      %v4213 = vadd.f32 0.0, %v4212
      %v4214 = vpop.f32.mrb[0].mxu0
      %4215 = vmatprep.mubr.bf16.mxu0 0
      %4216 = vmatmul.mubr.bf16.gmra.mrb[0].mxu0 %v4063
      %v4217 = vpop.f32.mrb[0].mxu0
      %v4218 = vadd.f32 0.0, %v4217
      %v4219 = vpop.f32.mrb[0].mxu0
      %v4220 = vpop.f32.mrb[0].mxu0
      %v4221 = vadd.f32 0.0, %v4220
      %v4222 = vpop.f32.mrb[0].mxu0
      %4223 = vmatprep.mubr.bf16.mxu0 0
      %4224 = vmatmul.mubr.bf16.gmra.mrb[0].mxu0 %v4066
      %v4225 = vpop.f32.mrb[0].mxu0
      %v4226 = vadd.f32 0.0, %v4225
      %v4227 = vpop.f32.mrb[0].mxu0
      %v4228 = vpop.f32.mrb[0].mxu0
      %v4229 = vadd.f32 0.0, %v4228
      %v4230 = vpop.f32.mrb[0].mxu0
      %4231 = vdwg.mxu0
      %v4232 = vadd.f32 %v3554, %v4106
      %v4233 = vadd.f32 %v3555, %v4109
      %v4234 = vadd.f32 %v3556, %v4114
      %v4235 = vadd.f32 %v3557, %v4117
      %v4236 = vadd.f32 %v3558, %v4122
      %v4237 = vadd.f32 %v3559, %v4125
      %v4238 = vadd.f32 %v3560, %v4130
      %v4239 = vadd.f32 %v3561, %v4133
      %v4240 = vadd.f32 %v3562, %v4138
      %v4241 = vadd.f32 %v3563, %v4141
      %v4242 = vadd.f32 %v3564, %v4146
      %v4243 = vadd.f32 %v3565, %v4149
      %v4244 = vadd.f32 %v3566, %v4154
      %v4245 = vadd.f32 %v3567, %v4157
      %v4246 = vadd.f32 %v3568, %v4162
      %v4247 = vadd.f32 %v3569, %v4165
      %v4248 = vadd.f32 %v3570, %v4170
      %v4249 = vadd.f32 %v3571, %v4173
      %v4250 = vadd.f32 %v3572, %v4178
      %v4251 = vadd.f32 %v3573, %v4181
      %v4252 = vadd.f32 %v3574, %v4186
      %v4253 = vadd.f32 %v3575, %v4189
      %v4254 = vadd.f32 %v3576, %v4194
      %v4255 = vadd.f32 %v3577, %v4197
      %v4256 = vadd.f32 %v3578, %v4202
      %v4257 = vadd.f32 %v3579, %v4205
      %v4258 = vadd.f32 %v3580, %v4210
      %v4259 = vadd.f32 %v3581, %v4213
      %v4260 = vadd.f32 %v3582, %v4218
      %v4261 = vadd.f32 %v3583, %v4221
      %v4262 = vadd.f32 %v3584, %v4226
      %v4263 = vadd.f32 %v3585, %v4229
      %v4280 = vrot.slane %v3212, 5
      %v4281 = vrot.slane %v4280, 4
      %v4282 = vrot.slane %v3213, 5
      %v4283 = vsel %vm1323, %v4281, %v4282
      %v4284 = vrot.slane %v4282, 4
      %v4285 = vrot.slane %v3214, 5
      %v4286 = vsel %vm1323, %v4284, %v4285
      %v4287 = vrot.slane %v3215, 5
      %v4288 = vrot.slane %v4287, 4
      %v4289 = vrot.slane %v3216, 5
      %v4290 = vsel %vm1323, %v4288, %v4289
      %v4291 = vrot.slane %v4289, 4
      %v4292 = vrot.slane %v3217, 5
      %v4293 = vsel %vm1323, %v4291, %v4292
      %v4294 = vrot.slane %v3218, 5
      %v4295 = vrot.slane %v4294, 4
      %v4296 = vrot.slane %v3219, 5
      %v4297 = vsel %vm1323, %v4295, %v4296
      %v4298 = vrot.slane %v4296, 4
      %v4299 = vrot.slane %v3220, 5
      %v4300 = vsel %vm1323, %v4298, %v4299
      %v4301 = vrot.slane %v3221, 5
      %v4302 = vrot.slane %v4301, 4
      %v4303 = vrot.slane %v3222, 5
      %v4304 = vsel %vm1323, %v4302, %v4303
      %v4305 = vrot.slane %v4303, 4
      %v4306 = vrot.slane %v3223, 5
      %v4307 = vsel %vm1323, %v4305, %v4306
      %v4308 = vrot.slane %v3224, 5
      %v4309 = vrot.slane %v4308, 4
      %v4310 = vrot.slane %v3225, 5
      %v4311 = vsel %vm1323, %v4309, %v4310
      %v4312 = vrot.slane %v4310, 4
      %v4313 = vrot.slane %v3226, 5
      %v4314 = vsel %vm1323, %v4312, %v4313
      %v4315 = vrot.slane %v3227, 5
      %v4316 = vrot.slane %v4315, 4
      %v4317 = vrot.slane %v3228, 5
      %v4318 = vsel %vm1323, %v4316, %v4317
      %v4319 = vrot.slane %v4317, 4
      %v4320 = vrot.slane %v3229, 5
      %v4321 = vsel %vm1323, %v4319, %v4320
      %v4322 = vrot.slane %v3230, 5
      %v4323 = vrot.slane %v4322, 4
      %v4324 = vrot.slane %v3231, 5
      %v4325 = vsel %vm1323, %v4323, %v4324
      %v4326 = vrot.slane %v4324, 4
      %v4327 = vrot.slane %v3232, 5
      %v4328 = vsel %vm1323, %v4326, %v4327
      %v4329 = vrot.slane %v3233, 5
      %v4330 = vrot.slane %v4329, 4
      %v4331 = vrot.slane %v3234, 5
      %v4332 = vsel %vm1323, %v4330, %v4331
      %v4333 = vrot.slane %v4331, 4
      %v4334 = vrot.slane %v3235, 5
      %v4335 = vsel %vm1323, %v4333, %v4334
      %v4336 = vrot.slane %v3236, 5
      %v4337 = vrot.slane %v4336, 4
      %v4338 = vrot.slane %v3237, 5
      %v4339 = vsel %vm1323, %v4337, %v4338
      %v4340 = vrot.slane %v4338, 4
      %v4341 = vrot.slane %v3238, 5
      %v4342 = vsel %vm1323, %v4340, %v4341
      %v4343 = vrot.slane %v3239, 5
      %v4344 = vrot.slane %v4343, 4
      %v4345 = vrot.slane %v3240, 5
      %v4346 = vsel %vm1323, %v4344, %v4345
      %v4347 = vrot.slane %v4345, 4
      %v4348 = vrot.slane %v3241, 5
      %v4349 = vsel %vm1323, %v4347, %v4348
      %v4350 = vrot.slane %v3242, 5
      %v4351 = vrot.slane %v4350, 4
      %v4352 = vrot.slane %v3243, 5
      %v4353 = vsel %vm1323, %v4351, %v4352
      %v4354 = vrot.slane %v4352, 4
      %v4355 = vrot.slane %v3244, 5
      %v4356 = vsel %vm1323, %v4354, %v4355
      %v4357 = vrot.slane %v3245, 5
      %v4358 = vrot.slane %v4357, 4
      %v4359 = vrot.slane %v3246, 5
      %v4360 = vsel %vm1323, %v4358, %v4359
      %v4361 = vrot.slane %v4359, 4
      %v4362 = vrot.slane %v3247, 5
      %v4363 = vsel %vm1323, %v4361, %v4362
      %v4364 = vrot.slane %v3248, 5
      %v4365 = vrot.slane %v4364, 4
      %v4366 = vrot.slane %v3249, 5
      %v4367 = vsel %vm1323, %v4365, %v4366
      %v4368 = vrot.slane %v4366, 4
      %v4369 = vrot.slane %v3250, 5
      %v4370 = vsel %vm1323, %v4368, %v4369
      %v4371 = vrot.slane %v3251, 5
      %v4372 = vrot.slane %v4371, 4
      %v4373 = vrot.slane %v3252, 5
      %v4374 = vsel %vm1323, %v4372, %v4373
      %v4375 = vrot.slane %v4373, 4
      %v4376 = vrot.slane %v3253, 5
      %v4377 = vsel %vm1323, %v4375, %v4376
      %v4378 = vrot.slane %v3254, 5
      %v4379 = vrot.slane %v4378, 4
      %v4380 = vrot.slane %v3255, 5
      %v4381 = vsel %vm1323, %v4379, %v4380
      %v4382 = vrot.slane %v4380, 4
      %v4383 = vrot.slane %v3256, 5
      %v4384 = vsel %vm1323, %v4382, %v4383
      %v4385 = vrot.slane %v3257, 5
      %v4386 = vrot.slane %v4385, 4
      %v4387 = vrot.slane %v3258, 5
      %v4388 = vsel %vm1323, %v4386, %v4387
      %v4389 = vrot.slane %v4387, 4
      %v4390 = vrot.slane %v3259, 5
      %v4391 = vsel %vm1323, %v4389, %v4390
      %s4392 = scalar_lea.vmem %s273, 16
      %v4393 = vld [vmem:[%s4392] sm:$0x3]
      %v4394 = vunpack.c.l.b16 %v4283
      %v4395 = vunpack.c.l.b16 %v4286
      %v4396 = vunpack.c.l.b16 %v4290
      %v4397 = vunpack.c.l.b16 %v4293
      %v4398 = vunpack.c.l.b16 %v4297
      %v4399 = vunpack.c.l.b16 %v4300
      %v4400 = vunpack.c.l.b16 %v4304
      %v4401 = vunpack.c.l.b16 %v4307
      %v4402 = vunpack.c.l.b16 %v4311
      %v4403 = vunpack.c.l.b16 %v4314
      %v4404 = vunpack.c.l.b16 %v4318
      %v4405 = vunpack.c.l.b16 %v4321
      %v4406 = vunpack.c.l.b16 %v4325
      %v4407 = vunpack.c.l.b16 %v4328
      %v4408 = vunpack.c.l.b16 %v4332
      %v4409 = vunpack.c.l.b16 %v4335
      %v4410 = vunpack.c.l.b16 %v4339
      %v4411 = vunpack.c.l.b16 %v4342
      %v4412 = vunpack.c.l.b16 %v4346
      %v4413 = vunpack.c.l.b16 %v4349
      %v4414 = vunpack.c.l.b16 %v4353
      %v4415 = vunpack.c.l.b16 %v4356
      %v4416 = vunpack.c.l.b16 %v4360
      %v4417 = vunpack.c.l.b16 %v4363
      %v4418 = vunpack.c.l.b16 %v4367
      %v4419 = vunpack.c.l.b16 %v4370
      %v4420 = vunpack.c.l.b16 %v4374
      %v4421 = vunpack.c.l.b16 %v4377
      %v4422 = vunpack.c.l.b16 %v4381
      %v4423 = vunpack.c.l.b16 %v4384
      %v4424 = vunpack.c.l.b16 %v4388
      %v4425 = vunpack.c.l.b16 %v4391
      %v4426 = vpack.c.b16 %v4395, %v4394
      %v4427 = vpack.c.b16 %v4397, %v4396
      %v4428 = vpack.c.b16 %v4399, %v4398
      %v4429 = vpack.c.b16 %v4401, %v4400
      %v4430 = vpack.c.b16 %v4403, %v4402
      %v4431 = vpack.c.b16 %v4405, %v4404
      %v4432 = vpack.c.b16 %v4407, %v4406
      %v4433 = vpack.c.b16 %v4409, %v4408
      %v4434 = vpack.c.b16 %v4411, %v4410
      %v4435 = vpack.c.b16 %v4413, %v4412
      %v4436 = vpack.c.b16 %v4415, %v4414
      %v4437 = vpack.c.b16 %v4417, %v4416
      %v4438 = vpack.c.b16 %v4419, %v4418
      %v4439 = vpack.c.b16 %v4421, %v4420
      %v4440 = vpack.c.b16 %v4423, %v4422
      %v4441 = vpack.c.b16 %v4425, %v4424
      %v4443 = vsel %vm799, %v4426, 0
      %v4446 = vsel %vm799, %v4427, 0
      %v4449 = vsel %vm799, %v4428, 0
      %v4452 = vsel %vm799, %v4429, 0
      %v4455 = vsel %vm799, %v4430, 0
      %v4458 = vsel %vm799, %v4431, 0
      %v4461 = vsel %vm799, %v4432, 0
      %v4464 = vsel %vm799, %v4433, 0
      %v4467 = vsel %vm799, %v4434, 0
      %v4470 = vsel %vm799, %v4435, 0
      %v4473 = vsel %vm799, %v4436, 0
      %v4476 = vsel %vm799, %v4437, 0
      %v4479 = vsel %vm799, %v4438, 0
      %v4482 = vsel %vm799, %v4439, 0
      %v4485 = vsel %vm799, %v4440, 0
      %v4488 = vsel %vm799, %v4441, 0
      %v4491 = vsel %vm848, %v4393, 0
      %4493 = vmatprep.subr.bf16.mxu0 0
      %4494 = vmatpush1.bf16.msra.mxu0 %v4491
      %4495 = vmatprep.subr.bf16.mxu0 0
      %4496 = vmatpush1.bf16.msra.mxu0 0
      %4497 = vmatprep.subr.bf16.mxu0 0
      %4498 = vmatpush1.bf16.msra.mxu0 0
      %4499 = vmatprep.subr.bf16.mxu0 0
      %4500 = vmatpush1.bf16.msra.mxu0 0
      %4501 = vmatprep.subr.bf16.mxu0 0
      %4502 = vmatpush1.bf16.msra.mxu0 0
      %4503 = vmatprep.subr.bf16.mxu0 0
      %4504 = vmatpush1.bf16.msra.mxu0 0
      %4505 = vmatprep.subr.bf16.mxu0 0
      %4506 = vmatpush1.bf16.msra.mxu0 0
      %4507 = vmatprep.subr.bf16.mxu0 0
      %4508 = vmatpush1.bf16.msra.mxu0 0
      %4509 = vmatprep.subr.bf16.mxu0 0
      %4510 = vmatpush1.bf16.msra.mxu0 0
      %4511 = vmatprep.subr.bf16.mxu0 0
      %4512 = vmatpush1.bf16.msra.mxu0 0
      %4513 = vmatprep.subr.bf16.mxu0 0
      %4514 = vmatpush1.bf16.msra.mxu0 0
      %4515 = vmatprep.subr.bf16.mxu0 0
      %4516 = vmatpush1.bf16.msra.mxu0 0
      %4517 = vmatprep.subr.bf16.mxu0 0
      %4518 = vmatpush1.bf16.msra.mxu0 0
      %4519 = vmatprep.subr.bf16.mxu0 0
      %4520 = vmatpush1.bf16.msra.mxu0 0
      %4521 = vmatprep.subr.bf16.mxu0 0
      %4522 = vmatpush1.bf16.msra.mxu0 0
      %4523 = vmatprep.subr.bf16.mxu0 0
      %4524 = vmatpush1.bf16.msra.mxu0 0
      %4525 = vmatprep.mubr.bf16.mxu0 0
      %4526 = vmatmul.mubr.bf16.gmra.mrb[0].mxu0 %v4443
      %v4527 = vpop.f32.mrb[0].mxu0
      %v4528 = vadd.f32 0.0, %v4527
      %v4529 = vpop.f32.mrb[0].mxu0
      %v4530 = vpop.f32.mrb[0].mxu0
      %v4531 = vadd.f32 0.0, %v4530
      %v4532 = vpop.f32.mrb[0].mxu0
      %4533 = vmatprep.mubr.bf16.mxu0 0
      %4534 = vmatmul.mubr.bf16.gmra.mrb[0].mxu0 %v4446
      %v4535 = vpop.f32.mrb[0].mxu0
      %v4536 = vadd.f32 0.0, %v4535
      %v4537 = vpop.f32.mrb[0].mxu0
      %v4538 = vpop.f32.mrb[0].mxu0
      %v4539 = vadd.f32 0.0, %v4538
      %v4540 = vpop.f32.mrb[0].mxu0
      %4541 = vmatprep.mubr.bf16.mxu0 0
      %4542 = vmatmul.mubr.bf16.gmra.mrb[0].mxu0 %v4449
      %v4543 = vpop.f32.mrb[0].mxu0
      %v4544 = vadd.f32 0.0, %v4543
      %v4545 = vpop.f32.mrb[0].mxu0
      %v4546 = vpop.f32.mrb[0].mxu0
      %v4547 = vadd.f32 0.0, %v4546
      %v4548 = vpop.f32.mrb[0].mxu0
      %4549 = vmatprep.mubr.bf16.mxu0 0
      %4550 = vmatmul.mubr.bf16.gmra.mrb[0].mxu0 %v4452
      %v4551 = vpop.f32.mrb[0].mxu0
      %v4552 = vadd.f32 0.0, %v4551
      %v4553 = vpop.f32.mrb[0].mxu0
      %v4554 = vpop.f32.mrb[0].mxu0
      %v4555 = vadd.f32 0.0, %v4554
      %v4556 = vpop.f32.mrb[0].mxu0
      %4557 = vmatprep.mubr.bf16.mxu0 0
      %4558 = vmatmul.mubr.bf16.gmra.mrb[0].mxu0 %v4455
      %v4559 = vpop.f32.mrb[0].mxu0
      %v4560 = vadd.f32 0.0, %v4559
      %v4561 = vpop.f32.mrb[0].mxu0
      %v4562 = vpop.f32.mrb[0].mxu0
      %v4563 = vadd.f32 0.0, %v4562
      %v4564 = vpop.f32.mrb[0].mxu0
      %4565 = vmatprep.mubr.bf16.mxu0 0
      %4566 = vmatmul.mubr.bf16.gmra.mrb[0].mxu0 %v4458
      %v4567 = vpop.f32.mrb[0].mxu0
      %v4568 = vadd.f32 0.0, %v4567
      %v4569 = vpop.f32.mrb[0].mxu0
      %v4570 = vpop.f32.mrb[0].mxu0
      %v4571 = vadd.f32 0.0, %v4570
      %v4572 = vpop.f32.mrb[0].mxu0
      %4573 = vmatprep.mubr.bf16.mxu0 0
      %4574 = vmatmul.mubr.bf16.gmra.mrb[0].mxu0 %v4461
      %v4575 = vpop.f32.mrb[0].mxu0
      %v4576 = vadd.f32 0.0, %v4575
      %v4577 = vpop.f32.mrb[0].mxu0
      %v4578 = vpop.f32.mrb[0].mxu0
      %v4579 = vadd.f32 0.0, %v4578
      %v4580 = vpop.f32.mrb[0].mxu0
      %4581 = vmatprep.mubr.bf16.mxu0 0
      %4582 = vmatmul.mubr.bf16.gmra.mrb[0].mxu0 %v4464
      %v4583 = vpop.f32.mrb[0].mxu0
      %v4584 = vadd.f32 0.0, %v4583
      %v4585 = vpop.f32.mrb[0].mxu0
      %v4586 = vpop.f32.mrb[0].mxu0
      %v4587 = vadd.f32 0.0, %v4586
      %v4588 = vpop.f32.mrb[0].mxu0
      %4589 = vmatprep.mubr.bf16.mxu0 0
      %4590 = vmatmul.mubr.bf16.gmra.mrb[0].mxu0 %v4467
      %v4591 = vpop.f32.mrb[0].mxu0
      %v4592 = vadd.f32 0.0, %v4591
      %v4593 = vpop.f32.mrb[0].mxu0
      %v4594 = vpop.f32.mrb[0].mxu0
      %v4595 = vadd.f32 0.0, %v4594
      %v4596 = vpop.f32.mrb[0].mxu0
      %4597 = vmatprep.mubr.bf16.mxu0 0
      %4598 = vmatmul.mubr.bf16.gmra.mrb[0].mxu0 %v4470
      %v4599 = vpop.f32.mrb[0].mxu0
      %v4600 = vadd.f32 0.0, %v4599
      %v4601 = vpop.f32.mrb[0].mxu0
      %v4602 = vpop.f32.mrb[0].mxu0
      %v4603 = vadd.f32 0.0, %v4602
      %v4604 = vpop.f32.mrb[0].mxu0
      %4605 = vmatprep.mubr.bf16.mxu0 0
      %4606 = vmatmul.mubr.bf16.gmra.mrb[0].mxu0 %v4473
      %v4607 = vpop.f32.mrb[0].mxu0
      %v4608 = vadd.f32 0.0, %v4607
      %v4609 = vpop.f32.mrb[0].mxu0
      %v4610 = vpop.f32.mrb[0].mxu0
      %v4611 = vadd.f32 0.0, %v4610
      %v4612 = vpop.f32.mrb[0].mxu0
      %4613 = vmatprep.mubr.bf16.mxu0 0
      %4614 = vmatmul.mubr.bf16.gmra.mrb[0].mxu0 %v4476
      %v4615 = vpop.f32.mrb[0].mxu0
      %v4616 = vadd.f32 0.0, %v4615
      %v4617 = vpop.f32.mrb[0].mxu0
      %v4618 = vpop.f32.mrb[0].mxu0
      %v4619 = vadd.f32 0.0, %v4618
      %v4620 = vpop.f32.mrb[0].mxu0
      %4621 = vmatprep.mubr.bf16.mxu0 0
      %4622 = vmatmul.mubr.bf16.gmra.mrb[0].mxu0 %v4479
      %v4623 = vpop.f32.mrb[0].mxu0
      %v4624 = vadd.f32 0.0, %v4623
      %v4625 = vpop.f32.mrb[0].mxu0
      %v4626 = vpop.f32.mrb[0].mxu0
      %v4627 = vadd.f32 0.0, %v4626
      %v4628 = vpop.f32.mrb[0].mxu0
      %4629 = vmatprep.mubr.bf16.mxu0 0
      %4630 = vmatmul.mubr.bf16.gmra.mrb[0].mxu0 %v4482
      %v4631 = vpop.f32.mrb[0].mxu0
      %v4632 = vadd.f32 0.0, %v4631
      %v4633 = vpop.f32.mrb[0].mxu0
      %v4634 = vpop.f32.mrb[0].mxu0
      %v4635 = vadd.f32 0.0, %v4634
      %v4636 = vpop.f32.mrb[0].mxu0
      %4637 = vmatprep.mubr.bf16.mxu0 0
      %4638 = vmatmul.mubr.bf16.gmra.mrb[0].mxu0 %v4485
      %v4639 = vpop.f32.mrb[0].mxu0
      %v4640 = vadd.f32 0.0, %v4639
      %v4641 = vpop.f32.mrb[0].mxu0
      %v4642 = vpop.f32.mrb[0].mxu0
      %v4643 = vadd.f32 0.0, %v4642
      %v4644 = vpop.f32.mrb[0].mxu0
      %4645 = vmatprep.mubr.bf16.mxu0 0
      %4646 = vmatmul.mubr.bf16.gmra.mrb[0].mxu0 %v4488
      %v4647 = vpop.f32.mrb[0].mxu0
      %v4648 = vadd.f32 0.0, %v4647
      %v4649 = vpop.f32.mrb[0].mxu0
      %v4650 = vpop.f32.mrb[0].mxu0
      %v4651 = vadd.f32 0.0, %v4650
      %v4652 = vpop.f32.mrb[0].mxu0
      %4653 = vdwg.mxu0
      %v4654 = vadd.f32 %v4232, %v4528
      %v4655 = vadd.f32 %v4233, %v4531
      %v4656 = vadd.f32 %v4234, %v4536
      %v4657 = vadd.f32 %v4235, %v4539
      %v4658 = vadd.f32 %v4236, %v4544
      %v4659 = vadd.f32 %v4237, %v4547
      %v4660 = vadd.f32 %v4238, %v4552
      %v4661 = vadd.f32 %v4239, %v4555
      %v4662 = vadd.f32 %v4240, %v4560
      %v4663 = vadd.f32 %v4241, %v4563
      %v4664 = vadd.f32 %v4242, %v4568
      %v4665 = vadd.f32 %v4243, %v4571
      %v4666 = vadd.f32 %v4244, %v4576
      %v4667 = vadd.f32 %v4245, %v4579
      %v4668 = vadd.f32 %v4246, %v4584
      %v4669 = vadd.f32 %v4247, %v4587
      %v4670 = vadd.f32 %v4248, %v4592
      %v4671 = vadd.f32 %v4249, %v4595
      %v4672 = vadd.f32 %v4250, %v4600
      %v4673 = vadd.f32 %v4251, %v4603
      %v4674 = vadd.f32 %v4252, %v4608
      %v4675 = vadd.f32 %v4253, %v4611
      %v4676 = vadd.f32 %v4254, %v4616
      %v4677 = vadd.f32 %v4255, %v4619
      %v4678 = vadd.f32 %v4256, %v4624
      %v4679 = vadd.f32 %v4257, %v4627
      %v4680 = vadd.f32 %v4258, %v4632
      %v4681 = vadd.f32 %v4259, %v4635
      %v4682 = vadd.f32 %v4260, %v4640
      %v4683 = vadd.f32 %v4261, %v4643
      %v4684 = vadd.f32 %v4262, %v4648
      %v4685 = vadd.f32 %v4263, %v4651
      %vm4686 = vcmask 64512
      %4687 = vst.msk [vmem:[%s286] sm:$0xff] %vm4686, %v4654
      %4688 = vst.msk [vmem:[%s286 + $0x8] sm:$0xff] %vm4686, %v4655
      %4689 = vst.msk [vmem:[%s286 + $0x10] sm:$0xff] %vm4686, %v4656
      %4690 = vst.msk [vmem:[%s286 + $0x18] sm:$0xff] %vm4686, %v4657
      %4691 = vst.msk [vmem:[%s286 + $0x20] sm:$0xff] %vm4686, %v4658
      %4692 = vst.msk [vmem:[%s286 + $0x28] sm:$0xff] %vm4686, %v4659
      %4693 = vst.msk [vmem:[%s286 + $0x30] sm:$0xff] %vm4686, %v4660
      %4694 = vst.msk [vmem:[%s286 + $0x38] sm:$0xff] %vm4686, %v4661
      %4695 = vst.msk [vmem:[%s286 + $0x40] sm:$0xff] %vm4686, %v4662
      %4696 = vst.msk [vmem:[%s286 + $0x48] sm:$0xff] %vm4686, %v4663
      %4697 = vst.msk [vmem:[%s286 + $0x50] sm:$0xff] %vm4686, %v4664
      %4698 = vst.msk [vmem:[%s286 + $0x58] sm:$0xff] %vm4686, %v4665
      %4699 = vst.msk [vmem:[%s286 + $0x60] sm:$0xff] %vm4686, %v4666
      %4700 = vst.msk [vmem:[%s286 + $0x68] sm:$0xff] %vm4686, %v4667
      %4701 = vst.msk [vmem:[%s286 + $0x70] sm:$0xff] %vm4686, %v4668
      %4702 = vst.msk [vmem:[%s286 + $0x78] sm:$0xff] %vm4686, %v4669
      %4703 = vst.msk [vmem:[%s286 + $0x80] sm:$0xff] %vm4686, %v4670
      %4704 = vst.msk [vmem:[%s286 + $0x88] sm:$0xff] %vm4686, %v4671
      %4705 = vst.msk [vmem:[%s286 + $0x90] sm:$0xff] %vm4686, %v4672
      %4706 = vst.msk [vmem:[%s286 + $0x98] sm:$0xff] %vm4686, %v4673
      %4707 = vst.msk [vmem:[%s286 + $0xa0] sm:$0xff] %vm4686, %v4674
      %4708 = vst.msk [vmem:[%s286 + $0xa8] sm:$0xff] %vm4686, %v4675
      %4709 = vst.msk [vmem:[%s286 + $0xb0] sm:$0xff] %vm4686, %v4676
      %4710 = vst.msk [vmem:[%s286 + $0xb8] sm:$0xff] %vm4686, %v4677
      %4711 = vst.msk [vmem:[%s286 + $0xc0] sm:$0xff] %vm4686, %v4678
      %4712 = vst.msk [vmem:[%s286 + $0xc8] sm:$0xff] %vm4686, %v4679
      %4713 = vst.msk [vmem:[%s286 + $0xd0] sm:$0xff] %vm4686, %v4680
      %4714 = vst.msk [vmem:[%s286 + $0xd8] sm:$0xff] %vm4686, %v4681
      %4715 = vst.msk [vmem:[%s286 + $0xe0] sm:$0xff] %vm4686, %v4682
      %4716 = vst.msk [vmem:[%s286 + $0xe8] sm:$0xff] %vm4686, %v4683
      %4717 = vst.msk [vmem:[%s286 + $0xf0] sm:$0xff] %vm4686, %v4684
      %4718 = vst.msk [vmem:[%s286 + $0xf8] sm:$0xff] %vm4686, %v4685
      %v4719 = vsel %vm4686, %v4654, 0.0
      %v4720 = vsel %vm4686, %v4655, 0.0
      %v4721 = vadd.f32 %v4719, %v4720
      %v4722 = vsel %vm4686, %v4656, 0.0
      %v4723 = vadd.f32 %v4721, %v4722
      %v4724 = vsel %vm4686, %v4657, 0.0
      %v4725 = vadd.f32 %v4723, %v4724
      %v4726 = vsel %vm4686, %v4658, 0.0
      %v4727 = vadd.f32 %v4725, %v4726
      %v4728 = vsel %vm4686, %v4659, 0.0
      %v4729 = vadd.f32 %v4727, %v4728
      %v4730 = vsel %vm4686, %v4660, 0.0
      %v4731 = vadd.f32 %v4729, %v4730
      %v4732 = vsel %vm4686, %v4661, 0.0
      %v4733 = vadd.f32 %v4731, %v4732
      %v4734 = vsel %vm4686, %v4662, 0.0
      %v4735 = vadd.f32 %v4733, %v4734
      %v4736 = vsel %vm4686, %v4663, 0.0
      %v4737 = vadd.f32 %v4735, %v4736
      %v4738 = vsel %vm4686, %v4664, 0.0
      %v4739 = vadd.f32 %v4737, %v4738
      %v4740 = vsel %vm4686, %v4665, 0.0
      %v4741 = vadd.f32 %v4739, %v4740
      %v4742 = vsel %vm4686, %v4666, 0.0
      %v4743 = vadd.f32 %v4741, %v4742
      %v4744 = vsel %vm4686, %v4667, 0.0
      %v4745 = vadd.f32 %v4743, %v4744
      %v4746 = vsel %vm4686, %v4668, 0.0
      %v4747 = vadd.f32 %v4745, %v4746
      %v4748 = vsel %vm4686, %v4669, 0.0
      %v4749 = vadd.f32 %v4747, %v4748
      %v4750 = vsel %vm4686, %v4670, 0.0
      %v4751 = vadd.f32 %v4749, %v4750
      %v4752 = vsel %vm4686, %v4671, 0.0
      %v4753 = vadd.f32 %v4751, %v4752
      %v4754 = vsel %vm4686, %v4672, 0.0
      %v4755 = vadd.f32 %v4753, %v4754
      %v4756 = vsel %vm4686, %v4673, 0.0
      %v4757 = vadd.f32 %v4755, %v4756
      %v4758 = vsel %vm4686, %v4674, 0.0
      %v4759 = vadd.f32 %v4757, %v4758
      %v4760 = vsel %vm4686, %v4675, 0.0
      %v4761 = vadd.f32 %v4759, %v4760
      %v4762 = vsel %vm4686, %v4676, 0.0
      %v4763 = vadd.f32 %v4761, %v4762
      %v4764 = vsel %vm4686, %v4677, 0.0
      %v4765 = vadd.f32 %v4763, %v4764
      %v4766 = vsel %vm4686, %v4678, 0.0
      %v4767 = vadd.f32 %v4765, %v4766
      %v4768 = vsel %vm4686, %v4679, 0.0
      %v4769 = vadd.f32 %v4767, %v4768
      %v4770 = vsel %vm4686, %v4680, 0.0
      %v4771 = vadd.f32 %v4769, %v4770
      %v4772 = vsel %vm4686, %v4681, 0.0
      %v4773 = vadd.f32 %v4771, %v4772
      %v4774 = vsel %vm4686, %v4682, 0.0
      %v4775 = vadd.f32 %v4773, %v4774
      %v4776 = vsel %vm4686, %v4683, 0.0
      %v4777 = vadd.f32 %v4775, %v4776
      %v4778 = vsel %vm4686, %v4684, 0.0
      %v4779 = vadd.f32 %v4777, %v4778
      %v4780 = vsel %vm4686, %v4685, 0.0
      %v4781 = vadd.f32 %v4779, %v4780
      %v4782 = vrot.slane %v4781, 4
      %v4783 = vadd.f32 %v4781, %v4782
      %v4784 = vrot.slane %v4783, 2
      %v4785 = vadd.f32 %v4783, %v4784
      %v4786 = vrot.slane %v4785, 1
      %v4787 = vadd.f32 %v4785, %v4786
      %4788 = vst.msk [vmem:[%s297] sm:$0xff] %vm4686, %v4787
      %v4789 = vmul.f32 %v4654, %v4654
      %v4790 = vmul.f32 %v4655, %v4655
      %v4791 = vmul.f32 %v4656, %v4656
      %v4792 = vmul.f32 %v4657, %v4657
      %v4793 = vmul.f32 %v4658, %v4658
      %v4794 = vmul.f32 %v4659, %v4659
      %v4795 = vmul.f32 %v4660, %v4660
      %v4796 = vmul.f32 %v4661, %v4661
      %v4797 = vmul.f32 %v4662, %v4662
      %v4798 = vmul.f32 %v4663, %v4663
      %v4799 = vmul.f32 %v4664, %v4664
      %v4800 = vmul.f32 %v4665, %v4665
      %v4801 = vmul.f32 %v4666, %v4666
      %v4802 = vmul.f32 %v4667, %v4667
      %v4803 = vmul.f32 %v4668, %v4668
      %v4804 = vmul.f32 %v4669, %v4669
      %v4805 = vmul.f32 %v4670, %v4670
      %v4806 = vmul.f32 %v4671, %v4671
      %v4807 = vmul.f32 %v4672, %v4672
      %v4808 = vmul.f32 %v4673, %v4673
      %v4809 = vmul.f32 %v4674, %v4674
      %v4810 = vmul.f32 %v4675, %v4675
      %v4811 = vmul.f32 %v4676, %v4676
      %v4812 = vmul.f32 %v4677, %v4677
      %v4813 = vmul.f32 %v4678, %v4678
      %v4814 = vmul.f32 %v4679, %v4679
      %v4815 = vmul.f32 %v4680, %v4680
      %v4816 = vmul.f32 %v4681, %v4681
      %v4817 = vmul.f32 %v4682, %v4682
      %v4818 = vmul.f32 %v4683, %v4683
      %v4819 = vmul.f32 %v4684, %v4684
      %v4820 = vmul.f32 %v4685, %v4685
      %v4821 = vsel %vm4686, %v4789, 0.0
      %v4822 = vsel %vm4686, %v4790, 0.0
      %v4823 = vadd.f32 %v4821, %v4822
      %v4824 = vsel %vm4686, %v4791, 0.0
      %v4825 = vadd.f32 %v4823, %v4824
      %v4826 = vsel %vm4686, %v4792, 0.0
      %v4827 = vadd.f32 %v4825, %v4826
      %v4828 = vsel %vm4686, %v4793, 0.0
      %v4829 = vadd.f32 %v4827, %v4828
      %v4830 = vsel %vm4686, %v4794, 0.0
      %v4831 = vadd.f32 %v4829, %v4830
      %v4832 = vsel %vm4686, %v4795, 0.0
      %v4833 = vadd.f32 %v4831, %v4832
      %v4834 = vsel %vm4686, %v4796, 0.0
      %v4835 = vadd.f32 %v4833, %v4834
      %v4836 = vsel %vm4686, %v4797, 0.0
      %v4837 = vadd.f32 %v4835, %v4836
      %v4838 = vsel %vm4686, %v4798, 0.0
      %v4839 = vadd.f32 %v4837, %v4838
      %v4840 = vsel %vm4686, %v4799, 0.0
      %v4841 = vadd.f32 %v4839, %v4840
      %v4842 = vsel %vm4686, %v4800, 0.0
      %v4843 = vadd.f32 %v4841, %v4842
      %v4844 = vsel %vm4686, %v4801, 0.0
      %v4845 = vadd.f32 %v4843, %v4844
      %v4846 = vsel %vm4686, %v4802, 0.0
      %v4847 = vadd.f32 %v4845, %v4846
      %v4848 = vsel %vm4686, %v4803, 0.0
      %v4849 = vadd.f32 %v4847, %v4848
      %v4850 = vsel %vm4686, %v4804, 0.0
      %v4851 = vadd.f32 %v4849, %v4850
      %v4852 = vsel %vm4686, %v4805, 0.0
      %v4853 = vadd.f32 %v4851, %v4852
      %v4854 = vsel %vm4686, %v4806, 0.0
      %v4855 = vadd.f32 %v4853, %v4854
      %v4856 = vsel %vm4686, %v4807, 0.0
      %v4857 = vadd.f32 %v4855, %v4856
      %v4858 = vsel %vm4686, %v4808, 0.0
      %v4859 = vadd.f32 %v4857, %v4858
      %v4860 = vsel %vm4686, %v4809, 0.0
      %v4861 = vadd.f32 %v4859, %v4860
      %v4862 = vsel %vm4686, %v4810, 0.0
      %v4863 = vadd.f32 %v4861, %v4862
      %v4864 = vsel %vm4686, %v4811, 0.0
      %v4865 = vadd.f32 %v4863, %v4864
      %v4866 = vsel %vm4686, %v4812, 0.0
      %v4867 = vadd.f32 %v4865, %v4866
      %v4868 = vsel %vm4686, %v4813, 0.0
      %v4869 = vadd.f32 %v4867, %v4868
      %v4870 = vsel %vm4686, %v4814, 0.0
      %v4871 = vadd.f32 %v4869, %v4870
      %v4872 = vsel %vm4686, %v4815, 0.0
      %v4873 = vadd.f32 %v4871, %v4872
      %v4874 = vsel %vm4686, %v4816, 0.0
      %v4875 = vadd.f32 %v4873, %v4874
      %v4876 = vsel %vm4686, %v4817, 0.0
      %v4877 = vadd.f32 %v4875, %v4876
      %v4878 = vsel %vm4686, %v4818, 0.0
      %v4879 = vadd.f32 %v4877, %v4878
      %v4880 = vsel %vm4686, %v4819, 0.0
      %v4881 = vadd.f32 %v4879, %v4880
      %v4882 = vsel %vm4686, %v4820, 0.0
      %v4883 = vadd.f32 %v4881, %v4882
      %v4884 = vrot.slane %v4883, 4
      %v4885 = vadd.f32 %v4883, %v4884
      %v4886 = vrot.slane %v4885, 2
      %v4887 = vadd.f32 %v4885, %v4886
      %v4888 = vrot.slane %v4887, 1
      %v4889 = vadd.f32 %v4887, %v4888
      %4890 = vst.msk [vmem:[%s307] sm:$0xff] %vm4686, %v4889
      %s4891 = smul.u32 16, %s22
      %p4892 = scmp.lt.s32.totalorder %s21, 1
      %s4893 = scalar_select %p4892, %s21, 1
      %p4894 = scmp.lt.s32.totalorder %s4891, 15
      %s4895 = scalar_select %p4894, %s4891, 15
      %p4896 = scmp.lt.s32.totalorder %s23, 0
      %s4897 = scalar_select %p4896, %s23, 0
      %s4898 = smul.addr %s4895, 2
      %s4899 = sadd.s32 %s4897, %s4898
      %s4900 = smul.addr %s4893, 32
      %s4901 = sadd.s32 %s4899, %s4900
      %s4902 = smul.addr %s4901, 8
      %s4903 = scalar_lea.vmem %s2, %s4902
      %p4904 = scmp.lt.s32.totalorder %s21, 1
      %s4905 = scalar_select %p4904, %s21, 1
      %p4906 = scmp.lt.s32.totalorder %s22, 0
      %s4907 = scalar_select %p4906, %s22, 0
      %p4908 = scmp.lt.s32.totalorder %s23, 0
      %s4909 = scalar_select %p4908, %s23, 0
      %s4910 = sadd.s32 %s4909, %s4907
      %s4911 = sadd.s32 %s4910, %s4905
      %s4912 = smul.addr %s4911, 8
      %s4913 = scalar_lea.vmem %s3, %s4912
      %p4914 = scmp.lt.s32.totalorder %s21, 1
      %s4915 = scalar_select %p4914, %s21, 1
      %p4916 = scmp.lt.s32.totalorder %s22, 0
      %s4917 = scalar_select %p4916, %s22, 0
      %p4918 = scmp.lt.s32.totalorder %s23, 0
      %s4919 = scalar_select %p4918, %s23, 0
      %s4920 = sadd.s32 %s4919, %s4917
      %s4921 = sadd.s32 %s4920, %s4915
      %s4922 = smul.addr %s4921, 8
      %s4923 = scalar_lea.vmem %s4, %s4922
      // Predicated region
      $region29: #{conv_en_bn_2d.2} parent=27 // pred_check
        %p4924 = pneg %p109
      $region30: #{conv_en_bn_2d.2} parent=27 // pred_check_branch
        %4926 = sbr.rel (%p4924) target = $region32
      $region31: #{conv_en_bn_2d.2} parent=27 // pred_region
        %s4927 = smul.u32 16, %s22
      $region32: #{conv_en_bn_2d.2} parent=27 // pred_fallthru
        _
      // Predicated region
      $region33: #{conv_en_bn_2d.2} parent=27 // pred_check
        %p4928 = pneg %p139
      $region34: #{conv_en_bn_2d.2} parent=27 // pred_check_branch
        %4930 = sbr.rel (%p4928) target = $region36
      $region35: #{conv_en_bn_2d.2} parent=27 // pred_region
        _
      $region36: #{conv_en_bn_2d.2} parent=27 // pred_fallthru
        _
      // Predicated region
      $region37: #{conv_en_bn_2d.2} parent=27 // pred_check
        %p4931 = pneg %p169
      $region38: #{conv_en_bn_2d.2} parent=27 // pred_check_branch
        %4933 = sbr.rel (%p4931) target = $region40
      $region39: #{conv_en_bn_2d.2} parent=27 // pred_region
        _
      $region40: #{conv_en_bn_2d.2} parent=27 // pred_fallthru
        _
    $region28: #{conv_en_bn_2d.2} parent=5 // pred_fallthru
      _
    %p4934 = scmp.le.s32.totalorder 2, %s11
    // Predicated region
    $region41: #{conv_en_bn_2d.2} parent=5 // pred_check
      %p4935 = pneg %p4934
    $region42: #{conv_en_bn_2d.2} parent=5 // pred_check_branch
      %4937 = sbr.rel (%p4935) target = $region44
    $region43: #{conv_en_bn_2d.2} parent=5 // pred_region
      %s4938 = ssub.s32 %s11, 2
      // Predicated region
      $region45: #{conv_en_bn_2d.2} parent=43 // pred_check
        %p4939 = pneg %p115
      $region46: #{conv_en_bn_2d.2} parent=43 // pred_check_branch
        %4941 = sbr.rel (%p4939) target = $region48
      $region47: #{conv_en_bn_2d.2} parent=43 // pred_region
        %s4942 = smul.u32 16, %s25
        %p4943 = scmp.lt.s32.totalorder %s24, 1
        %s4944 = scalar_select %p4943, %s24, 1
        %p4945 = scmp.lt.s32.totalorder %s4942, 15
        %s4946 = scalar_select %p4945, %s4942, 15
        %p4947 = scmp.lt.s32.totalorder %s26, 0
        %s4948 = scalar_select %p4947, %s26, 0
        %s4949 = smul.addr %s4946, 2
        %s4950 = sadd.s32 %s4948, %s4949
        %s4951 = smul.addr %s4944, 32
        %s4952 = sadd.s32 %s4950, %s4951
        %s4953 = smul.addr %s4952, 8
        %s4954 = scalar_lea.vmem %s2, %s4953
      $region48: #{conv_en_bn_2d.2} parent=43 // pred_fallthru
        _
      // Predicated region
      $region49: #{conv_en_bn_2d.2} parent=43 // pred_check
        %p4955 = pneg %p145
      $region50: #{conv_en_bn_2d.2} parent=43 // pred_check_branch
        %4957 = sbr.rel (%p4955) target = $region52
      $region51: #{conv_en_bn_2d.2} parent=43 // pred_region
        %p4958 = scmp.lt.s32.totalorder %s24, 1
        %s4959 = scalar_select %p4958, %s24, 1
        %p4960 = scmp.lt.s32.totalorder %s25, 0
        %s4961 = scalar_select %p4960, %s25, 0
        %p4962 = scmp.lt.s32.totalorder %s26, 0
        %s4963 = scalar_select %p4962, %s26, 0
        %s4964 = sadd.s32 %s4963, %s4961
        %s4965 = sadd.s32 %s4964, %s4959
        %s4966 = smul.addr %s4965, 8
        %s4967 = scalar_lea.vmem %s3, %s4966
      $region52: #{conv_en_bn_2d.2} parent=43 // pred_fallthru
        _
      // Predicated region
      $region53: #{conv_en_bn_2d.2} parent=43 // pred_check
        %p4968 = pneg %p175
      $region54: #{conv_en_bn_2d.2} parent=43 // pred_check_branch
        %4970 = sbr.rel (%p4968) target = $region56
      $region55: #{conv_en_bn_2d.2} parent=43 // pred_region
        %p4971 = scmp.lt.s32.totalorder %s24, 1
        %s4972 = scalar_select %p4971, %s24, 1
        %p4973 = scmp.lt.s32.totalorder %s25, 0
        %s4974 = scalar_select %p4973, %s25, 0
        %p4975 = scmp.lt.s32.totalorder %s26, 0
        %s4976 = scalar_select %p4975, %s26, 0
        %s4977 = sadd.s32 %s4976, %s4974
        %s4978 = sadd.s32 %s4977, %s4972
        %s4979 = smul.addr %s4978, 8
        %s4980 = scalar_lea.vmem %s4, %s4979
      $region56: #{conv_en_bn_2d.2} parent=43 // pred_fallthru
        _
    $region44: #{conv_en_bn_2d.2} parent=5 // pred_fallthru
      _
  $region6: #{conv_en_bn_2d.2} parent=0 // loop_footer
    %s15 = sadd.s32 1, %s11
  $region7: #{conv_en_bn_2d.2} parent=0 // loop_footer_branch
    %10 = sbr.rel target = $region3
  $region8: #{conv_en_bn_2d.2} parent=0 // loop_exit
    _

</llo_original>
